<compile_context>
chip_gen: v6e
topology: v6e:2x2x1
jax: 0.10.0
libtpu: 0.0.40
codegen_flags: <defaults>
</compile_context>

<pallas_src>
import numpy as np
import jax
import jax.numpy as jnp
from jax import lax
from jax.experimental import pallas as pl
from jax.experimental.pallas import tpu as pltpu


# ----------------------------- Pallas kernel --------------------------------

def _make_fused_inception_kernel(H, W, TH, PADL, Wp, Cin,
                                 n1x1, n3x3red, n3x3, n5x5red, n5x5, pool_proj,
                                 accum3, accum5):
    """Fused Inception forward for one (batch, row-tile) grid step."""
    TH4 = TH + 4                      # row tile + halo of 2 on each side
    n23 = n3x3red + n5x5red           # reduce channels (placed first in wcat)
    c1_off = n23                      # branch1 channels come after the reduces
    c_b2 = n1x1                       # output channel offsets
    c_b3 = n1x1 + n3x3
    c_b4 = n1x1 + n3x3 + n5x5

    def conv_kxk(r, w_ref, b_ref, K, Cred, Cout, accum):
        """KxK conv (pad (K-1)//2) of zero-halo'd reduced features r (TH4,Wp,Cred)."""
        rs = 2 - K // 2               # first slab row for tap dy=0
        cs = PADL - K // 2            # first slab col for tap dx=0
        if accum:
            # Per-tap MXU accumulation: no lane concat, no big im2col buffer.
            acc = jnp.zeros((TH * W, Cout), jnp.float32)
            for dy in range(K):
                for dx in range(K):
                    tap = (r[rs + dy:rs + dy + TH, cs + dx:cs + dx + W, :]
                           .reshape(TH * W, Cred).astype(jnp.bfloat16))
                    acc = acc + jnp.dot(tap, w_ref[dy * K + dx],
                                        preferred_element_type=jnp.float32)
            return acc + b_ref[...]
        # Single large-K im2col matmul (taps cast to bf16 before the concat).
        taps = [(r[rs + dy:rs + dy + TH, cs + dx:cs + dx + W, :]
                 .reshape(TH * W, Cred).astype(jnp.bfloat16))
                for dy in range(K) for dx in range(K)]
        p = jnp.concatenate(taps, axis=-1)            # (TH*W, K*K*Cred) bf16
        return jnp.dot(p, w_ref[...], preferred_element_type=jnp.float32) + b_ref[...]

    def kernel(xp_ref, wcat_ref, bcat_ref, w3_ref, b3_ref, w5_ref, b5_ref,
               w4_ref, b4_ref, o_ref):
        t = pl.program_id(1)
        row0 = pl.multiple_of(t * TH, TH)

        # Rows of the zero-padded input covering this output row tile + halo 2.
        slab = xp_ref[0, pl.ds(row0, TH4), :, :]      # (TH4, Wp, Cin) f32

        # Mask of positions that map to real (unpadded) pixels (padded coords).
        rows_g = lax.broadcasted_iota(jnp.int32, (TH4, Wp, 1), 0) + t * TH
        cols_g = lax.broadcasted_iota(jnp.int32, (TH4, Wp, 1), 1)
        interior = ((rows_g >= 2) & (rows_g < 2 + H)
                    & (cols_g >= PADL) & (cols_g < PADL + W))

        # ---- merged 1x1 stage: [w2a | w3a | w1] in one bf16 MXU matmul ----
        slab2d = slab.reshape(TH4 * Wp, Cin)          # layout-preserving (Wp % 8 == 0)
        red = jnp.dot(slab2d.astype(jnp.bfloat16), wcat_ref[...],
                      preferred_element_type=jnp.float32) + bcat_ref[...]
        red3 = red.reshape(TH4, Wp, n23 + n1x1)

        # ---- branch1: 1x1 conv, no activation; store its channel slice now ----
        o_ref[0, :, :, 0:n1x1] = red3[2:2 + TH, PADL:PADL + W, c1_off:c1_off + n1x1]

        # ---- branch4: separable 3x3 s1 p1 maxpool (-inf halo) + 1x1 proj ----
        xneg = jnp.where(interior, slab, -jnp.inf)
        hmax = xneg[:, PADL - 1:PADL - 1 + W, :]      # 3-tap max along W
        for dx in (1, 2):
            hmax = jnp.maximum(hmax, xneg[:, PADL - 1 + dx:PADL - 1 + dx + W, :])
        pooled = hmax[1:1 + TH]                       # 3-tap max along H
        for dy in (1, 2):
            pooled = jnp.maximum(pooled, hmax[1 + dy:1 + dy + TH])
        br4 = (jnp.dot(pooled.reshape(TH * W, Cin).astype(jnp.bfloat16),
                       w4_ref[...], preferred_element_type=jnp.float32)
               + b4_ref[...])
        o_ref[0, :, :, c_b4:c_b4 + pool_proj] = br4.reshape(TH, W, pool_proj)

        # ---- reduced features for branches 2/3: ReLU, zero the halo ----
        r23 = jnp.where(interior, jnp.maximum(red3[:, :, :n23], 0.0), 0.0)
        r2 = r23[:, :, :n3x3red]                      # (TH4, Wp, n3x3red)
        r3 = r23[:, :, n3x3red:]                      # (TH4, Wp, n5x5red)

        # ---- branch2: 3x3 conv (pad 1) ----
        br2 = conv_kxk(r2, w3_ref, b3_ref, 3, n3x3red, n3x3, accum3)
        o_ref[0, :, :, c_b2:c_b2 + n3x3] = br2.reshape(TH, W, n3x3)

        # ---- branch3: 5x5 conv (pad 2) ----
        br3 = conv_kxk(r3, w5_ref, b5_ref, 5, n5x5red, n5x5, accum5)
        o_ref[0, :, :, c_b3:c_b3 + n5x5] = br3.reshape(TH, W, n5x5)

    return kernel


# -------------------------------- wrapper ------------------------------------

def _pick_row_tile(H, W):
    """Smallest divisor TH of H with TH*W >= 256 (MXU-friendly M); else TH=H."""
    for th in range(1, H + 1):
        if H % th == 0 and th * W >= 256:
            return th
    return H


def inception_forward(x_nchw, p, *, row_tile=None, conv_accum=None):
    """Exact InceptionModule.forward semantics; input/output in NCHW."""
    x = jnp.transpose(x_nchw, (0, 2, 3, 1)).astype(jnp.float32)   # NHWC
    N, H, W, Cin = x.shape
    n1x1 = p['w1'].shape[-1]
    n3x3red, n3x3 = p['w2b'].shape[2], p['w2b'].shape[3]
    n5x5red, n5x5 = p['w3b'].shape[2], p['w3b'].shape[3]
    pool_proj = p['w4'].shape[-1]
    Ctot = n1x1 + n3x3 + n5x5 + pool_proj

    TH = row_tile if row_tile is not None else _pick_row_tile(H, W)
    if H % TH != 0:
        TH = H
    TH4 = TH + 4
    Hp = H + 4

    # Left-pad columns by 8 (covers the 5x5 halo of 2 AND puts the first interior
    # column on a sublane multiple); round Wp up to a multiple of 8 on the right.
    PADL = 8
    Wp = ((W + PADL + 2 + 7) // 8) * 8
    padr = Wp - W - PADL
    xp = jnp.pad(x, ((0, 0), (2, 2), (PADL, padr), (0, 0)))

    # Conv strategy: im2col single big-K matmul for narrow reduces (<64 channels),
    # per-tap MXU accumulation for wide reduces. `conv_accum` forces a path.
    accum3 = (n3x3red >= 64) if conv_accum is None else bool(conv_accum)
    accum5 = (n5x5red >= 64) if conv_accum is None else bool(conv_accum)

    bf16 = jnp.bfloat16
    # Merged 1x1 weights ordered [branch2-reduce | branch3-reduce | branch1] so the
    # big reduce slice starts at lane offset 0 (no relayout for r23).
    wcat = jnp.concatenate([p['w2a'][0, 0], p['w3a'][0, 0], p['w1'][0, 0]],
                           axis=-1).astype(bf16)               # (Cin, n23+n1x1)
    bcat = jnp.concatenate([p['b2a'], p['b3a'], p['b1']], axis=-1)  # f32
    w3r = (p['w2b'].reshape(9, n3x3red, n3x3) if accum3
           else p['w2b'].reshape(9 * n3x3red, n3x3)).astype(bf16)
    w5r = (p['w3b'].reshape(25, n5x5red, n5x5) if accum5
           else p['w3b'].reshape(25 * n5x5red, n5x5)).astype(bf16)
    w4r = p['w4'][0, 0].astype(bf16)                           # (Cin, pool_proj)
    b3, b5, b4 = p['b2b'], p['b3b'], p['b4']                   # f32 biases

    kernel = _make_fused_inception_kernel(H, W, TH, PADL, Wp, Cin,
                                          n1x1, n3x3red, n3x3,
                                          n5x5red, n5x5, pool_proj,
                                          accum3, accum5)

    operands = (xp, wcat, bcat, w3r, b3, w5r, b5, w4r, b4)

    def _full_spec(a):
        idx = (0,) * a.ndim
        return pl.BlockSpec(a.shape, lambda n, t, _i=idx: _i)

    in_specs = [pl.BlockSpec((1, Hp, Wp, Cin), lambda n, t: (n, 0, 0, 0))]
    in_specs += [_full_spec(a) for a in operands[1:]]

    # Rough VMEM budget: raise vmem_limit_bytes only when the default would be tight.
    est = 2 * Hp * Wp * Cin * 4                                # input double buffer
    est += 2 * TH * W * Ctot * 4                               # output double buffer
    est += 2 * sum(int(a.size) * a.dtype.itemsize for a in operands[1:])
    est += TH4 * Wp * (2 * Cin + 2 * (n3x3red + n5x5red + n1x1)) * 4   # slab/red/r23
    est += TH * W * (9 * n3x3red + 25 * n5x5red) * 2           # bf16 im2col buffers
    est += TH * W * (Cin + Ctot) * 4                           # pooled + branch tiles
    vmem_limit = None
    if est > 12 * (1 << 20):
        vmem_limit = int(min(2 * est, 48 * (1 << 20)))

    out = pl.pallas_call(
        kernel,
        out_shape=jax.ShapeDtypeStruct((N, H, W, Ctot), jnp.float32),
        # Batch is the leading parallel axis -> multi-TC parts shard across n
        # (disjoint input traffic) rather than across row tiles.
        grid=(N, H // TH),
        in_specs=in_specs,
        out_specs=pl.BlockSpec((1, TH, W, Ctot), lambda n, t: (n, t, 0, 0)),
        compiler_params=pltpu.CompilerParams(
            dimension_semantics=("parallel", "parallel"),
            vmem_limit_bytes=vmem_limit),
    )(*operands)

    return jnp.transpose(out, (0, 3, 1, 2))                    # back to NCHW


# ------------------------- params / reference / main -------------------------

def init_params(key, in_channels, n1x1, n3x3red, n3x3, n5x5red, n5x5, pool_proj):
    keys = jax.random.split(key, 12)

    def conv_w(k, K, cin, cout):  # stored in HWIO (= OIHW.transpose(2,3,1,0))
        return 0.1 * jax.random.normal(k, (K, K, cin, cout), jnp.float32)

    def conv_b(k, cout):
        return 0.1 * jax.random.normal(k, (1, cout), jnp.float32)

    return {
        'w1':  conv_w(keys[0], 1, in_channels, n1x1),       'b1':  conv_b(keys[1], n1x1),
        'w2a': conv_w(keys[2], 1, in_channels, n3x3red),    'b2a': conv_b(keys[3], n3x3red),
        'w2b': conv_w(keys[4], 3, n3x3red, n3x3),           'b2b': conv_b(keys[5], n3x3),
        'w3a': conv_w(keys[6], 1, in_channels, n5x5red),    'b3a': conv_b(keys[7], n5x5red),
        'w3b': conv_w(keys[8], 5, n5x5red, n5x5),           'b3b': conv_b(keys[9], n5x5),
        'w4':  conv_w(keys[10], 1, in_channels, pool_proj), 'b4':  conv_b(keys[11], pool_proj),
    }


def _ref_conv(x, w, b, pad):
    y = jax.lax.conv_general_dilated(x, w, (1, 1), [(pad, pad), (pad, pad)],
                                     dimension_numbers=('NHWC', 'HWIO', 'NHWC'))
    return y + b.reshape(1, 1, 1, -1)


def inception_reference(x_nchw, p):
    x = jnp.transpose(x_nchw, (0, 2, 3, 1)).astype(jnp.float32)
    b1 = _ref_conv(x, p['w1'], p['b1'], 0)
    b2 = _ref_conv(jnp.maximum(_ref_conv(x, p['w2a'], p['b2a'], 0), 0.0),
                   p['w2b'], p['b2b'], 1)
    b3 = _ref_conv(jnp.maximum(_ref_conv(x, p['w3a'], p['b3a'], 0), 0.0),
                   p['w3b'], p['b3b'], 2)
    pooled = jax.lax.reduce_window(x, -jnp.inf, jax.lax.max,
                                   (1, 3, 3, 1), (1, 1, 1, 1),
                                   [(0, 0), (1, 1), (1, 1), (0, 0)])
    b4 = _ref_conv(pooled, p['w4'], p['b4'], 0)
    out = jnp.concatenate([b1, b2, b3, b4], axis=-1)
    return jnp.transpose(out, (0, 3, 1, 2))


if __name__ == "__main__":
    key = jax.random.PRNGKey(0)
    kx, kp = jax.random.split(key)
    N, C, H, W = 2, 4, 16, 16
    n1x1, n3x3red, n3x3, n5x5red, n5x5, pool_proj = 4, 4, 8, 4, 4, 4

    x = jax.random.normal(kx, (N, C, H, W), jnp.float32)   # NCHW, like PyTorch
    params = init_params(kp, C, n1x1, n3x3red, n3x3, n5x5red, n5x5, pool_proj)

    ref = jax.block_until_ready(inception_reference(x, params))

    # Path 1 (auto): single large-K im2col matmuls (narrow reduce channels).
    out = jax.block_until_ready(inception_forward(x, params))
    # Path 2 (forced): per-tap MXU accumulation (the wide-reduce-channel path).
    out_acc = jax.block_until_ready(inception_forward(x, params, conv_accum=True))

    assert out.shape == (N, n1x1 + n3x3 + n5x5 + pool_proj, H, W), out.shape
    r_np = np.asarray(ref)
    for name, o in (("im2col", out), ("accum", out_acc)):
        o_np = np.asarray(o)
        if not np.allclose(o_np, r_np, rtol=3e-2, atol=3e-2):   # bf16 MXU inputs
            raise AssertionError(
                f"Pallas inception ({name}) mismatches JAX reference "
                f"(max abs err {float(np.max(np.abs(o_np - r_np)))})")
    print("KERNEL_OK")
</pallas_src>

<mosaic_0001>
module attributes {stable_mosaic.version = 11 : i64} {
  func.func @kernel(%arg0: i32, %arg1: i32, %arg2: memref<1x20x32x4xf32, #tpu.memory_space<vmem>>, %arg3: memref<4x12xbf16, #tpu.memory_space<vmem>>, %arg4: memref<1x12xf32, #tpu.memory_space<vmem>>, %arg5: memref<36x8xbf16, #tpu.memory_space<vmem>>, %arg6: memref<1x8xf32, #tpu.memory_space<vmem>>, %arg7: memref<100x4xbf16, #tpu.memory_space<vmem>>, %arg8: memref<1x4xf32, #tpu.memory_space<vmem>>, %arg9: memref<4x4xbf16, #tpu.memory_space<vmem>>, %arg10: memref<1x4xf32, #tpu.memory_space<vmem>>, %arg11: memref<1x16x16x20xf32, #tpu.memory_space<vmem>>) attributes {dimension_semantics = [#tpu.dimension_semantics<parallel>, #tpu.dimension_semantics<parallel>], iteration_bounds = array<i64: 2, 1>, scalar_prefetch = 0 : i64, scratch_operands = 0 : i64, tpu.core_type = #tpu.core_type<tc>, window_params = [{transform_indices = @transform_0, window_bounds = array<i64: 1, 20, 32, 4>}, {pipeline_mode = #tpu.pipeline_mode<synchronous>, transform_indices = @transform_1, window_bounds = array<i64: 4, 12>}, {pipeline_mode = #tpu.pipeline_mode<synchronous>, transform_indices = @transform_2, window_bounds = array<i64: 1, 12>}, {pipeline_mode = #tpu.pipeline_mode<synchronous>, transform_indices = @transform_3, window_bounds = array<i64: 36, 8>}, {pipeline_mode = #tpu.pipeline_mode<synchronous>, transform_indices = @transform_4, window_bounds = array<i64: 1, 8>}, {pipeline_mode = #tpu.pipeline_mode<synchronous>, transform_indices = @transform_5, window_bounds = array<i64: 100, 4>}, {pipeline_mode = #tpu.pipeline_mode<synchronous>, transform_indices = @transform_6, window_bounds = array<i64: 1, 4>}, {pipeline_mode = #tpu.pipeline_mode<synchronous>, transform_indices = @transform_7, window_bounds = array<i64: 4, 4>}, {pipeline_mode = #tpu.pipeline_mode<synchronous>, transform_indices = @transform_8, window_bounds = array<i64: 1, 4>}, {transform_indices = @transform_9, window_bounds = array<i64: 1, 16, 16, 20>}]} {
    %c16_i32 = arith.constant 16 : i32
    %0 = arith.muli %arg1, %c16_i32 : i32
    %1 = tpu.assume_multiple %0, 16 : i32
    %c0 = arith.constant 0 : index
    %2 = arith.index_cast %1 : i32 to index
    %c0_0 = arith.constant 0 : index
    %c0_1 = arith.constant 0 : index
    %3 = vector.load %arg2[%c0, %2, %c0_0, %c0_1] : memref<1x20x32x4xf32, #tpu.memory_space<vmem>>, vector<1x20x32x4xf32>
    %4 = vector.shape_cast %3 : vector<1x20x32x4xf32> to vector<20x32x4xf32>
    %5 = tpu.iota {dimensions = array<i32: 0>} : vector<20x32x1xi32>
    %c16_i32_2 = arith.constant 16 : i32
    %6 = arith.muli %arg1, %c16_i32_2 : i32
    %7 = vector.broadcast %6 : i32 to vector<20x32x1xi32>
    %8 = arith.addi %5, %7 : vector<20x32x1xi32>
    %9 = tpu.iota {dimensions = array<i32: 1>} : vector<20x32x1xi32>
    %c2_i32 = arith.constant 2 : i32
    %10 = vector.broadcast %c2_i32 : i32 to vector<20x32x1xi32>
    %11 = arith.cmpi sge, %8, %10 : vector<20x32x1xi32>
    %c18_i32 = arith.constant 18 : i32
    %12 = vector.broadcast %c18_i32 : i32 to vector<20x32x1xi32>
    %13 = arith.cmpi slt, %8, %12 : vector<20x32x1xi32>
    %14 = arith.andi %11, %13 : vector<20x32x1xi1>
    %c8_i32 = arith.constant 8 : i32
    %15 = vector.broadcast %c8_i32 : i32 to vector<20x32x1xi32>
    %16 = arith.cmpi sge, %9, %15 : vector<20x32x1xi32>
    %17 = arith.andi %14, %16 : vector<20x32x1xi1>
    %c24_i32 = arith.constant 24 : i32
    %18 = vector.broadcast %c24_i32 : i32 to vector<20x32x1xi32>
    %19 = arith.cmpi slt, %9, %18 : vector<20x32x1xi32>
    %20 = arith.andi %17, %19 : vector<20x32x1xi1>
    %21 = vector.shape_cast %4 : vector<20x32x4xf32> to vector<640x4xf32>
    %22 = arith.truncf %21 : vector<640x4xf32> to vector<640x4xbf16>
    %c0_3 = arith.constant 0 : index
    %c0_4 = arith.constant 0 : index
    %23 = vector.load %arg3[%c0_3, %c0_4] : memref<4x12xbf16, #tpu.memory_space<vmem>>, vector<4x12xbf16>
    %cst = arith.constant dense<0.000000e+00> : vector<640x12xf32>
    %24 = tpu.matmul %22, %23, %cst {dimension_numbers = #tpu.dot_dimension_numbers<[1], [0], [0], [1], [0, 0, 1, 1], [], []>} : vector<640x4xbf16>, vector<4x12xbf16>, vector<640x12xf32> -> vector<640x12xf32>
    %c0_5 = arith.constant 0 : index
    %c0_6 = arith.constant 0 : index
    %25 = vector.load %arg4[%c0_5, %c0_6] : memref<1x12xf32, #tpu.memory_space<vmem>>, vector<1x12xf32>
    %26 = vector.broadcast %25 : vector<1x12xf32> to vector<640x12xf32>
    %27 = arith.addf %24, %26 : vector<640x12xf32>
    %28 = vector.shape_cast %27 : vector<640x12xf32> to vector<20x32x12xf32>
    %29 = vector.extract_strided_slice %28 {offsets = [2, 8, 8], sizes = [16, 16, 4], strides = [1, 1, 1]} : vector<20x32x12xf32> to vector<16x16x4xf32>
    %c0_7 = arith.constant 0 : index
    %c0_8 = arith.constant 0 : index
    %c0_9 = arith.constant 0 : index
    %c0_10 = arith.constant 0 : index
    %30 = vector.load %arg11[%c0_7, %c0_8, %c0_9, %c0_10] : memref<1x16x16x20xf32, #tpu.memory_space<vmem>>, vector<1x16x16x4xf32>
    %31 = vector.shape_cast %30 : vector<1x16x16x4xf32> to vector<16x16x4xf32>
    %32 = vector.shape_cast %29 : vector<16x16x4xf32> to vector<1x16x16x4xf32>
    tpu.vector_store %arg11[%c0_7, %c0_8, %c0_9, %c0_10], %32 {strides = array<i32>} : memref<1x16x16x20xf32, #tpu.memory_space<vmem>>, vector<1x16x16x4xf32>,
    %cst_11 = arith.constant 0xFF800000 : f32
    %33 = vector.shape_cast %20 : vector<20x32x1xi1> to vector<20x32x1xi1>
    %34 = vector.broadcast %33 : vector<20x32x1xi1> to vector<20x32x4xi1>
    %35 = vector.broadcast %cst_11 : f32 to vector<20x32x4xf32>
    %36 = arith.select %34, %4, %35 : vector<20x32x4xi1>, vector<20x32x4xf32>
    %37 = vector.extract_strided_slice %36 {offsets = [0, 7, 0], sizes = [20, 16, 4], strides = [1, 1, 1]} : vector<20x32x4xf32> to vector<20x16x4xf32>
    %38 = vector.extract_strided_slice %36 {offsets = [0, 8, 0], sizes = [20, 16, 4], strides = [1, 1, 1]} : vector<20x32x4xf32> to vector<20x16x4xf32>
    %39 = arith.maximumf %37, %38 : vector<20x16x4xf32>
    %40 = vector.extract_strided_slice %36 {offsets = [0, 9, 0], sizes = [20, 16, 4], strides = [1, 1, 1]} : vector<20x32x4xf32> to vector<20x16x4xf32>
    %41 = arith.maximumf %39, %40 : vector<20x16x4xf32>
    %42 = vector.extract_strided_slice %41 {offsets = [1, 0, 0], sizes = [16, 16, 4], strides = [1, 1, 1]} : vector<20x16x4xf32> to vector<16x16x4xf32>
    %43 = vector.extract_strided_slice %41 {offsets = [2, 0, 0], sizes = [16, 16, 4], strides = [1, 1, 1]} : vector<20x16x4xf32> to vector<16x16x4xf32>
    %44 = arith.maximumf %42, %43 : vector<16x16x4xf32>
    %45 = vector.extract_strided_slice %41 {offsets = [3, 0, 0], sizes = [16, 16, 4], strides = [1, 1, 1]} : vector<20x16x4xf32> to vector<16x16x4xf32>
    %46 = arith.maximumf %44, %45 : vector<16x16x4xf32>
    %47 = vector.shape_cast %46 : vector<16x16x4xf32> to vector<256x4xf32>
    %48 = arith.truncf %47 : vector<256x4xf32> to vector<256x4xbf16>
    %c0_12 = arith.constant 0 : index
    %c0_13 = arith.constant 0 : index
    %49 = vector.load %arg9[%c0_12, %c0_13] : memref<4x4xbf16, #tpu.memory_space<vmem>>, vector<4x4xbf16>
    %cst_14 = arith.constant dense<0.000000e+00> : vector<256x4xf32>
    %50 = tpu.matmul %48, %49, %cst_14 {dimension_numbers = #tpu.dot_dimension_numbers<[1], [0], [0], [1], [0, 0, 1, 1], [], []>} : vector<256x4xbf16>, vector<4x4xbf16>, vector<256x4xf32> -> vector<256x4xf32>
    %c0_15 = arith.constant 0 : index
    %c0_16 = arith.constant 0 : index
    %51 = vector.load %arg10[%c0_15, %c0_16] : memref<1x4xf32, #tpu.memory_space<vmem>>, vector<1x4xf32>
    %52 = vector.broadcast %51 : vector<1x4xf32> to vector<256x4xf32>
    %53 = arith.addf %50, %52 : vector<256x4xf32>
    %54 = vector.shape_cast %53 : vector<256x4xf32> to vector<16x16x4xf32>
    %c0_17 = arith.constant 0 : index
    %c0_18 = arith.constant 0 : index
    %c0_19 = arith.constant 0 : index
    %c16 = arith.constant 16 : index
    %55 = vector.load %arg11[%c0_17, %c0_18, %c0_19, %c16] : memref<1x16x16x20xf32, #tpu.memory_space<vmem>>, vector<1x16x16x4xf32>
    %56 = vector.shape_cast %55 : vector<1x16x16x4xf32> to vector<16x16x4xf32>
    %57 = vector.shape_cast %54 : vector<16x16x4xf32> to vector<1x16x16x4xf32>
    tpu.vector_store %arg11[%c0_17, %c0_18, %c0_19, %c16], %57 {strides = array<i32>} : memref<1x16x16x20xf32, #tpu.memory_space<vmem>>, vector<1x16x16x4xf32>,
    %58 = vector.extract_strided_slice %28 {offsets = [0, 0, 0], sizes = [20, 32, 8], strides = [1, 1, 1]} : vector<20x32x12xf32> to vector<20x32x8xf32>
    %cst_20 = arith.constant 0.000000e+00 : f32
    %59 = vector.broadcast %cst_20 : f32 to vector<20x32x8xf32>
    %60 = arith.maximumf %58, %59 : vector<20x32x8xf32>
    %cst_21 = arith.constant 0.000000e+00 : f32
    %61 = vector.shape_cast %20 : vector<20x32x1xi1> to vector<20x32x1xi1>
    %62 = vector.broadcast %61 : vector<20x32x1xi1> to vector<20x32x8xi1>
    %63 = vector.broadcast %cst_21 : f32 to vector<20x32x8xf32>
    %64 = arith.select %62, %60, %63 : vector<20x32x8xi1>, vector<20x32x8xf32>
    %65 = vector.extract_strided_slice %64 {offsets = [0, 0, 0], sizes = [20, 32, 4], strides = [1, 1, 1]} : vector<20x32x8xf32> to vector<20x32x4xf32>
    %66 = vector.extract_strided_slice %64 {offsets = [0, 0, 4], sizes = [20, 32, 4], strides = [1, 1, 1]} : vector<20x32x8xf32> to vector<20x32x4xf32>
    %67 = vector.extract_strided_slice %65 {offsets = [1, 7, 0], sizes = [16, 16, 4], strides = [1, 1, 1]} : vector<20x32x4xf32> to vector<16x16x4xf32>
    %68 = vector.shape_cast %67 : vector<16x16x4xf32> to vector<256x4xf32>
    %69 = arith.truncf %68 : vector<256x4xf32> to vector<256x4xbf16>
    %70 = vector.extract_strided_slice %65 {offsets = [1, 8, 0], sizes = [16, 16, 4], strides = [1, 1, 1]} : vector<20x32x4xf32> to vector<16x16x4xf32>
    %71 = vector.shape_cast %70 : vector<16x16x4xf32> to vector<256x4xf32>
    %72 = arith.truncf %71 : vector<256x4xf32> to vector<256x4xbf16>
    %73 = vector.extract_strided_slice %65 {offsets = [1, 9, 0], sizes = [16, 16, 4], strides = [1, 1, 1]} : vector<20x32x4xf32> to vector<16x16x4xf32>
    %74 = vector.shape_cast %73 : vector<16x16x4xf32> to vector<256x4xf32>
    %75 = arith.truncf %74 : vector<256x4xf32> to vector<256x4xbf16>
    %76 = vector.extract_strided_slice %65 {offsets = [2, 7, 0], sizes = [16, 16, 4], strides = [1, 1, 1]} : vector<20x32x4xf32> to vector<16x16x4xf32>
    %77 = vector.shape_cast %76 : vector<16x16x4xf32> to vector<256x4xf32>
    %78 = arith.truncf %77 : vector<256x4xf32> to vector<256x4xbf16>
    %79 = vector.extract_strided_slice %65 {offsets = [2, 8, 0], sizes = [16, 16, 4], strides = [1, 1, 1]} : vector<20x32x4xf32> to vector<16x16x4xf32>
    %80 = vector.shape_cast %79 : vector<16x16x4xf32> to vector<256x4xf32>
    %81 = arith.truncf %80 : vector<256x4xf32> to vector<256x4xbf16>
    %82 = vector.extract_strided_slice %65 {offsets = [2, 9, 0], sizes = [16, 16, 4], strides = [1, 1, 1]} : vector<20x32x4xf32> to vector<16x16x4xf32>
    %83 = vector.shape_cast %82 : vector<16x16x4xf32> to vector<256x4xf32>
    %84 = arith.truncf %83 : vector<256x4xf32> to vector<256x4xbf16>
    %85 = vector.extract_strided_slice %65 {offsets = [3, 7, 0], sizes = [16, 16, 4], strides = [1, 1, 1]} : vector<20x32x4xf32> to vector<16x16x4xf32>
    %86 = vector.shape_cast %85 : vector<16x16x4xf32> to vector<256x4xf32>
    %87 = arith.truncf %86 : vector<256x4xf32> to vector<256x4xbf16>
    %88 = vector.extract_strided_slice %65 {offsets = [3, 8, 0], sizes = [16, 16, 4], strides = [1, 1, 1]} : vector<20x32x4xf32> to vector<16x16x4xf32>
    %89 = vector.shape_cast %88 : vector<16x16x4xf32> to vector<256x4xf32>
    %90 = arith.truncf %89 : vector<256x4xf32> to vector<256x4xbf16>
    %91 = vector.extract_strided_slice %65 {offsets = [3, 9, 0], sizes = [16, 16, 4], strides = [1, 1, 1]} : vector<20x32x4xf32> to vector<16x16x4xf32>
    %92 = vector.shape_cast %91 : vector<16x16x4xf32> to vector<256x4xf32>
    %93 = arith.truncf %92 : vector<256x4xf32> to vector<256x4xbf16>
    %94 = tpu.concatenate %69, %72, %75, %78, %81, %84, %87, %90, %93 in 1 : vector<256x4xbf16>, vector<256x4xbf16>, vector<256x4xbf16>, vector<256x4xbf16>, vector<256x4xbf16>, vector<256x4xbf16>, vector<256x4xbf16>, vector<256x4xbf16>, vector<256x4xbf16> -> vector<256x36xbf16>
    %c0_22 = arith.constant 0 : index
    %c0_23 = arith.constant 0 : index
    %95 = vector.load %arg5[%c0_22, %c0_23] : memref<36x8xbf16, #tpu.memory_space<vmem>>, vector<36x8xbf16>
    %cst_24 = arith.constant dense<0.000000e+00> : vector<256x8xf32>
    %96 = tpu.matmul %94, %95, %cst_24 {dimension_numbers = #tpu.dot_dimension_numbers<[1], [0], [0], [1], [0, 0, 1, 1], [], []>} : vector<256x36xbf16>, vector<36x8xbf16>, vector<256x8xf32> -> vector<256x8xf32>
    %c0_25 = arith.constant 0 : index
    %c0_26 = arith.constant 0 : index
    %97 = vector.load %arg6[%c0_25, %c0_26] : memref<1x8xf32, #tpu.memory_space<vmem>>, vector<1x8xf32>
    %98 = vector.broadcast %97 : vector<1x8xf32> to vector<256x8xf32>
    %99 = arith.addf %96, %98 : vector<256x8xf32>
    %100 = vector.shape_cast %99 : vector<256x8xf32> to vector<16x16x8xf32>
    %c0_27 = arith.constant 0 : index
    %c0_28 = arith.constant 0 : index
    %c0_29 = arith.constant 0 : index
    %c4 = arith.constant 4 : index
    %101 = vector.load %arg11[%c0_27, %c0_28, %c0_29, %c4] : memref<1x16x16x20xf32, #tpu.memory_space<vmem>>, vector<1x16x16x8xf32>
    %102 = vector.shape_cast %101 : vector<1x16x16x8xf32> to vector<16x16x8xf32>
    %103 = vector.shape_cast %100 : vector<16x16x8xf32> to vector<1x16x16x8xf32>
    tpu.vector_store %arg11[%c0_27, %c0_28, %c0_29, %c4], %103 {strides = array<i32>} : memref<1x16x16x20xf32, #tpu.memory_space<vmem>>, vector<1x16x16x8xf32>,
    %104 = vector.extract_strided_slice %66 {offsets = [0, 6, 0], sizes = [16, 16, 4], strides = [1, 1, 1]} : vector<20x32x4xf32> to vector<16x16x4xf32>
    %105 = vector.shape_cast %104 : vector<16x16x4xf32> to vector<256x4xf32>
    %106 = arith.truncf %105 : vector<256x4xf32> to vector<256x4xbf16>
    %107 = vector.extract_strided_slice %66 {offsets = [0, 7, 0], sizes = [16, 16, 4], strides = [1, 1, 1]} : vector<20x32x4xf32> to vector<16x16x4xf32>
    %108 = vector.shape_cast %107 : vector<16x16x4xf32> to vector<256x4xf32>
    %109 = arith.truncf %108 : vector<256x4xf32> to vector<256x4xbf16>
    %110 = vector.extract_strided_slice %66 {offsets = [0, 8, 0], sizes = [16, 16, 4], strides = [1, 1, 1]} : vector<20x32x4xf32> to vector<16x16x4xf32>
    %111 = vector.shape_cast %110 : vector<16x16x4xf32> to vector<256x4xf32>
    %112 = arith.truncf %111 : vector<256x4xf32> to vector<256x4xbf16>
    %113 = vector.extract_strided_slice %66 {offsets = [0, 9, 0], sizes = [16, 16, 4], strides = [1, 1, 1]} : vector<20x32x4xf32> to vector<16x16x4xf32>
    %114 = vector.shape_cast %113 : vector<16x16x4xf32> to vector<256x4xf32>
    %115 = arith.truncf %114 : vector<256x4xf32> to vector<256x4xbf16>
    %116 = vector.extract_strided_slice %66 {offsets = [0, 10, 0], sizes = [16, 16, 4], strides = [1, 1, 1]} : vector<20x32x4xf32> to vector<16x16x4xf32>
    %117 = vector.shape_cast %116 : vector<16x16x4xf32> to vector<256x4xf32>
    %118 = arith.truncf %117 : vector<256x4xf32> to vector<256x4xbf16>
    %119 = vector.extract_strided_slice %66 {offsets = [1, 6, 0], sizes = [16, 16, 4], strides = [1, 1, 1]} : vector<20x32x4xf32> to vector<16x16x4xf32>
    %120 = vector.shape_cast %119 : vector<16x16x4xf32> to vector<256x4xf32>
    %121 = arith.truncf %120 : vector<256x4xf32> to vector<256x4xbf16>
    %122 = vector.extract_strided_slice %66 {offsets = [1, 7, 0], sizes = [16, 16, 4], strides = [1, 1, 1]} : vector<20x32x4xf32> to vector<16x16x4xf32>
    %123 = vector.shape_cast %122 : vector<16x16x4xf32> to vector<256x4xf32>
    %124 = arith.truncf %123 : vector<256x4xf32> to vector<256x4xbf16>
    %125 = vector.extract_strided_slice %66 {offsets = [1, 8, 0], sizes = [16, 16, 4], strides = [1, 1, 1]} : vector<20x32x4xf32> to vector<16x16x4xf32>
    %126 = vector.shape_cast %125 : vector<16x16x4xf32> to vector<256x4xf32>
    %127 = arith.truncf %126 : vector<256x4xf32> to vector<256x4xbf16>
    %128 = vector.extract_strided_slice %66 {offsets = [1, 9, 0], sizes = [16, 16, 4], strides = [1, 1, 1]} : vector<20x32x4xf32> to vector<16x16x4xf32>
    %129 = vector.shape_cast %128 : vector<16x16x4xf32> to vector<256x4xf32>
    %130 = arith.truncf %129 : vector<256x4xf32> to vector<256x4xbf16>
    %131 = vector.extract_strided_slice %66 {offsets = [1, 10, 0], sizes = [16, 16, 4], strides = [1, 1, 1]} : vector<20x32x4xf32> to vector<16x16x4xf32>
    %132 = vector.shape_cast %131 : vector<16x16x4xf32> to vector<256x4xf32>
    %133 = arith.truncf %132 : vector<256x4xf32> to vector<256x4xbf16>
    %134 = vector.extract_strided_slice %66 {offsets = [2, 6, 0], sizes = [16, 16, 4], strides = [1, 1, 1]} : vector<20x32x4xf32> to vector<16x16x4xf32>
    %135 = vector.shape_cast %134 : vector<16x16x4xf32> to vector<256x4xf32>
    %136 = arith.truncf %135 : vector<256x4xf32> to vector<256x4xbf16>
    %137 = vector.extract_strided_slice %66 {offsets = [2, 7, 0], sizes = [16, 16, 4], strides = [1, 1, 1]} : vector<20x32x4xf32> to vector<16x16x4xf32>
    %138 = vector.shape_cast %137 : vector<16x16x4xf32> to vector<256x4xf32>
    %139 = arith.truncf %138 : vector<256x4xf32> to vector<256x4xbf16>
    %140 = vector.extract_strided_slice %66 {offsets = [2, 8, 0], sizes = [16, 16, 4], strides = [1, 1, 1]} : vector<20x32x4xf32> to vector<16x16x4xf32>
    %141 = vector.shape_cast %140 : vector<16x16x4xf32> to vector<256x4xf32>
    %142 = arith.truncf %141 : vector<256x4xf32> to vector<256x4xbf16>
    %143 = vector.extract_strided_slice %66 {offsets = [2, 9, 0], sizes = [16, 16, 4], strides = [1, 1, 1]} : vector<20x32x4xf32> to vector<16x16x4xf32>
    %144 = vector.shape_cast %143 : vector<16x16x4xf32> to vector<256x4xf32>
    %145 = arith.truncf %144 : vector<256x4xf32> to vector<256x4xbf16>
    %146 = vector.extract_strided_slice %66 {offsets = [2, 10, 0], sizes = [16, 16, 4], strides = [1, 1, 1]} : vector<20x32x4xf32> to vector<16x16x4xf32>
    %147 = vector.shape_cast %146 : vector<16x16x4xf32> to vector<256x4xf32>
    %148 = arith.truncf %147 : vector<256x4xf32> to vector<256x4xbf16>
    %149 = vector.extract_strided_slice %66 {offsets = [3, 6, 0], sizes = [16, 16, 4], strides = [1, 1, 1]} : vector<20x32x4xf32> to vector<16x16x4xf32>
    %150 = vector.shape_cast %149 : vector<16x16x4xf32> to vector<256x4xf32>
    %151 = arith.truncf %150 : vector<256x4xf32> to vector<256x4xbf16>
    %152 = vector.extract_strided_slice %66 {offsets = [3, 7, 0], sizes = [16, 16, 4], strides = [1, 1, 1]} : vector<20x32x4xf32> to vector<16x16x4xf32>
    %153 = vector.shape_cast %152 : vector<16x16x4xf32> to vector<256x4xf32>
    %154 = arith.truncf %153 : vector<256x4xf32> to vector<256x4xbf16>
    %155 = vector.extract_strided_slice %66 {offsets = [3, 8, 0], sizes = [16, 16, 4], strides = [1, 1, 1]} : vector<20x32x4xf32> to vector<16x16x4xf32>
    %156 = vector.shape_cast %155 : vector<16x16x4xf32> to vector<256x4xf32>
    %157 = arith.truncf %156 : vector<256x4xf32> to vector<256x4xbf16>
    %158 = vector.extract_strided_slice %66 {offsets = [3, 9, 0], sizes = [16, 16, 4], strides = [1, 1, 1]} : vector<20x32x4xf32> to vector<16x16x4xf32>
    %159 = vector.shape_cast %158 : vector<16x16x4xf32> to vector<256x4xf32>
    %160 = arith.truncf %159 : vector<256x4xf32> to vector<256x4xbf16>
    %161 = vector.extract_strided_slice %66 {offsets = [3, 10, 0], sizes = [16, 16, 4], strides = [1, 1, 1]} : vector<20x32x4xf32> to vector<16x16x4xf32>
    %162 = vector.shape_cast %161 : vector<16x16x4xf32> to vector<256x4xf32>
    %163 = arith.truncf %162 : vector<256x4xf32> to vector<256x4xbf16>
    %164 = vector.extract_strided_slice %66 {offsets = [4, 6, 0], sizes = [16, 16, 4], strides = [1, 1, 1]} : vector<20x32x4xf32> to vector<16x16x4xf32>
    %165 = vector.shape_cast %164 : vector<16x16x4xf32> to vector<256x4xf32>
    %166 = arith.truncf %165 : vector<256x4xf32> to vector<256x4xbf16>
    %167 = vector.extract_strided_slice %66 {offsets = [4, 7, 0], sizes = [16, 16, 4], strides = [1, 1, 1]} : vector<20x32x4xf32> to vector<16x16x4xf32>
    %168 = vector.shape_cast %167 : vector<16x16x4xf32> to vector<256x4xf32>
    %169 = arith.truncf %168 : vector<256x4xf32> to vector<256x4xbf16>
    %170 = vector.extract_strided_slice %66 {offsets = [4, 8, 0], sizes = [16, 16, 4], strides = [1, 1, 1]} : vector<20x32x4xf32> to vector<16x16x4xf32>
    %171 = vector.shape_cast %170 : vector<16x16x4xf32> to vector<256x4xf32>
    %172 = arith.truncf %171 : vector<256x4xf32> to vector<256x4xbf16>
    %173 = vector.extract_strided_slice %66 {offsets = [4, 9, 0], sizes = [16, 16, 4], strides = [1, 1, 1]} : vector<20x32x4xf32> to vector<16x16x4xf32>
    %174 = vector.shape_cast %173 : vector<16x16x4xf32> to vector<256x4xf32>
    %175 = arith.truncf %174 : vector<256x4xf32> to vector<256x4xbf16>
    %176 = vector.extract_strided_slice %66 {offsets = [4, 10, 0], sizes = [16, 16, 4], strides = [1, 1, 1]} : vector<20x32x4xf32> to vector<16x16x4xf32>
    %177 = vector.shape_cast %176 : vector<16x16x4xf32> to vector<256x4xf32>
    %178 = arith.truncf %177 : vector<256x4xf32> to vector<256x4xbf16>
    %179 = tpu.concatenate %106, %109, %112, %115, %118, %121, %124, %127, %130, %133, %136, %139, %142, %145, %148, %151 in 1 : vector<256x4xbf16>, vector<256x4xbf16>, vector<256x4xbf16>, vector<256x4xbf16>, vector<256x4xbf16>, vector<256x4xbf16>, vector<256x4xbf16>, vector<256x4xbf16>, vector<256x4xbf16>, vector<256x4xbf16>, vector<256x4xbf16>, vector<256x4xbf16>, vector<256x4xbf16>, vector<256x4xbf16>, vector<256x4xbf16>, vector<256x4xbf16> -> vector<256x64xbf16>
    %180 = tpu.concatenate %154, %157, %160, %163, %166, %169, %172, %175, %178 in 1 : vector<256x4xbf16>, vector<256x4xbf16>, vector<256x4xbf16>, vector<256x4xbf16>, vector<256x4xbf16>, vector<256x4xbf16>, vector<256x4xbf16>, vector<256x4xbf16>, vector<256x4xbf16> -> vector<256x36xbf16>
    %181 = tpu.concatenate %179, %180 in 1 : vector<256x64xbf16>, vector<256x36xbf16> -> vector<256x100xbf16>
    %c0_30 = arith.constant 0 : index
    %c0_31 = arith.constant 0 : index
    %182 = vector.load %arg7[%c0_30, %c0_31] : memref<100x4xbf16, #tpu.memory_space<vmem>>, vector<100x4xbf16>
    %cst_32 = arith.constant dense<0.000000e+00> : vector<256x4xf32>
    %183 = tpu.matmul %181, %182, %cst_32 {dimension_numbers = #tpu.dot_dimension_numbers<[1], [0], [0], [1], [0, 0, 1, 1], [], []>} : vector<256x100xbf16>, vector<100x4xbf16>, vector<256x4xf32> -> vector<256x4xf32>
    %c0_33 = arith.constant 0 : index
    %c0_34 = arith.constant 0 : index
    %184 = vector.load %arg8[%c0_33, %c0_34] : memref<1x4xf32, #tpu.memory_space<vmem>>, vector<1x4xf32>
    %185 = vector.broadcast %184 : vector<1x4xf32> to vector<256x4xf32>
    %186 = arith.addf %183, %185 : vector<256x4xf32>
    %187 = vector.shape_cast %186 : vector<256x4xf32> to vector<16x16x4xf32>
    %c0_35 = arith.constant 0 : index
    %c0_36 = arith.constant 0 : index
    %c0_37 = arith.constant 0 : index
    %c12 = arith.constant 12 : index
    %188 = vector.load %arg11[%c0_35, %c0_36, %c0_37, %c12] : memref<1x16x16x20xf32, #tpu.memory_space<vmem>>, vector<1x16x16x4xf32>
    %189 = vector.shape_cast %188 : vector<1x16x16x4xf32> to vector<16x16x4xf32>
    %190 = vector.shape_cast %187 : vector<16x16x4xf32> to vector<1x16x16x4xf32>
    tpu.vector_store %arg11[%c0_35, %c0_36, %c0_37, %c12], %190 {strides = array<i32>} : memref<1x16x16x20xf32, #tpu.memory_space<vmem>>, vector<1x16x16x4xf32>,
    return
  }
  func.func @transform_0(%arg0: i32, %arg1: i32) -> (i32, i32, i32, i32) {
    %c0_i32 = arith.constant 0 : i32
    %c0_i32_0 = arith.constant 0 : i32
    %c0_i32_1 = arith.constant 0 : i32
    %c0_i32_2 = arith.constant 0 : i32
    return %arg0, %c0_i32, %c0_i32_0, %c0_i32_1 : i32, i32, i32, i32
  }
  func.func @transform_1(%arg0: i32, %arg1: i32) -> (i32, i32) {
    %c0_i32 = arith.constant 0 : i32
    %c0_i32_0 = arith.constant 0 : i32
    %c0_i32_1 = arith.constant 0 : i32
    return %c0_i32, %c0_i32_0 : i32, i32
  }
  func.func @transform_2(%arg0: i32, %arg1: i32) -> (i32, i32) {
    %c0_i32 = arith.constant 0 : i32
    %c0_i32_0 = arith.constant 0 : i32
    %c0_i32_1 = arith.constant 0 : i32
    return %c0_i32, %c0_i32_0 : i32, i32
  }
  func.func @transform_3(%arg0: i32, %arg1: i32) -> (i32, i32) {
    %c0_i32 = arith.constant 0 : i32
    %c0_i32_0 = arith.constant 0 : i32
    %c0_i32_1 = arith.constant 0 : i32
    return %c0_i32, %c0_i32_0 : i32, i32
  }
  func.func @transform_4(%arg0: i32, %arg1: i32) -> (i32, i32) {
    %c0_i32 = arith.constant 0 : i32
    %c0_i32_0 = arith.constant 0 : i32
    %c0_i32_1 = arith.constant 0 : i32
    return %c0_i32, %c0_i32_0 : i32, i32
  }
  func.func @transform_5(%arg0: i32, %arg1: i32) -> (i32, i32) {
    %c0_i32 = arith.constant 0 : i32
    %c0_i32_0 = arith.constant 0 : i32
    %c0_i32_1 = arith.constant 0 : i32
    return %c0_i32, %c0_i32_0 : i32, i32
  }
  func.func @transform_6(%arg0: i32, %arg1: i32) -> (i32, i32) {
    %c0_i32 = arith.constant 0 : i32
    %c0_i32_0 = arith.constant 0 : i32
    %c0_i32_1 = arith.constant 0 : i32
    return %c0_i32, %c0_i32_0 : i32, i32
  }
  func.func @transform_7(%arg0: i32, %arg1: i32) -> (i32, i32) {
    %c0_i32 = arith.constant 0 : i32
    %c0_i32_0 = arith.constant 0 : i32
    %c0_i32_1 = arith.constant 0 : i32
    return %c0_i32, %c0_i32_0 : i32, i32
  }
  func.func @transform_8(%arg0: i32, %arg1: i32) -> (i32, i32) {
    %c0_i32 = arith.constant 0 : i32
    %c0_i32_0 = arith.constant 0 : i32
    %c0_i32_1 = arith.constant 0 : i32
    return %c0_i32, %c0_i32_0 : i32, i32
  }
  func.func @transform_9(%arg0: i32, %arg1: i32) -> (i32, i32, i32, i32) {
    %c0_i32 = arith.constant 0 : i32
    %c0_i32_0 = arith.constant 0 : i32
    %c0_i32_1 = arith.constant 0 : i32
    return %arg0, %arg1, %c0_i32, %c0_i32_0 : i32, i32, i32, i32
  }
}

</mosaic_0001>

<llo_original>
// kernel: tpu_custom_call.1
$region0: #{tpu_custom_call.1}
  #allocation0 [shape = 'u32[]', space=smem, size = 0x4, offset = 0x4, fixed_abs, tag = 'smem constant byte address 0x4 - core index']
  #allocation1 [shape = 'u32[144,128]{1,0:T(1,128)}', space=vmem, size = 0x12000, scoped, tag = 'internal scratch']
  %s0 = inlined_call_operand.vmem [shape: f32[2,20,32,4], index: 0, kind: input, shape index: {}]
  %s1 = inlined_call_operand.vmem [shape: bf16[4,12], index: 1, kind: input, shape index: {}]
  %s2 = inlined_call_operand.vmem [shape: f32[1,12], index: 2, kind: input, shape index: {}]
  %s3 = inlined_call_operand.vmem [shape: bf16[36,8], index: 3, kind: input, shape index: {}]
  %s4 = inlined_call_operand.vmem [shape: f32[1,8], index: 4, kind: input, shape index: {}]
  %s5 = inlined_call_operand.vmem [shape: bf16[100,4], index: 5, kind: input, shape index: {}]
  %s6 = inlined_call_operand.vmem [shape: f32[1,4], index: 6, kind: input, shape index: {}]
  %s7 = inlined_call_operand.vmem [shape: bf16[4,4], index: 7, kind: input, shape index: {}]
  %s8 = inlined_call_operand.vmem [shape: f32[1,4], index: 8, kind: input, shape index: {}]
  %s9 = inlined_call_operand.hbm [shape: f32[2,16,16,20], index: 9, kind: output, shape index: {}]
  %s10 = sld [smem:[#allocation0]]
  $region69: #{tpu_custom_call.1} parent=0
    _
  %s12 = ssub.s32 1, %s10
  %s13 = scalar_select 0, %s12, %s10
  $region1: #{tpu_custom_call.1} parent=0
    #allocation2 [shape = 'u8[262144]{0}', space=vmem, size = 0x40000, scoped, tag = 'output window, operand 0']
    #allocation3 [shape = 's32[2]{0}', space=sflag, size = 0x8, scoped, tag = 'scoped memory for tpu_custom_call.1']
    %14 = vsyncpa [#allocation3], 0
    %s15 = scalar_lea.sflag [#allocation3], 1
    %16 = vsyncpa %s15, 0
    loop: start=0, step=1, limit=4
    $region2: #{tpu_custom_call.1} parent=1 // loop_pre_header
      _
    $region3: #{tpu_custom_call.1} parent=1 // loop_header
      %s18 = sphi 0, %s22
      %p19 = scmp.ge.s32.totalorder %s18, 4
      %s25 = sphi 0, %s37
      %s26 = sphi 0, %s33
      %s27 = sphi 0, %s25
      %s28 = sphi 0, %s26
      %s29 = sphi 0, %s27
      %s30 = sphi 0, %s28
      %s40 = sphi 0, %s42
      %s43 = sphi 0, %s40
      %s44 = sphi 0, %s43
      %s60 = sphi 0, %s44
      %s64 = sphi 0, %s64
      %s66 = sphi 0, %s64
      %s67 = sphi 0, %s66
      %s81 = sphi 0, %s67
      %s85 = sphi 0, %s85
      %s87 = sphi 0, %s85
      %s88 = sphi 0, %s87
      %s102 = sphi 0, %s88
      %s106 = sphi 0, %s106
      %s108 = sphi 0, %s106
      %s109 = sphi 0, %s108
      %s123 = sphi 0, %s109
      %s127 = sphi 0, %s127
      %s129 = sphi 0, %s127
      %s130 = sphi 0, %s129
      %s144 = sphi 0, %s130
      %s148 = sphi 0, %s148
      %s150 = sphi 0, %s148
      %s151 = sphi 0, %s150
      %s165 = sphi 0, %s151
      %s169 = sphi 0, %s169
      %s171 = sphi 0, %s169
      %s172 = sphi 0, %s171
      %s186 = sphi 0, %s172
      %s190 = sphi 0, %s190
      %s192 = sphi 0, %s190
      %s193 = sphi 0, %s192
      %s207 = sphi 0, %s193
      %s211 = sphi 0, %s211
      %s213 = sphi 0, %s211
      %s214 = sphi 0, %s213
      %s228 = sphi 0, %s214
      %s236 = sphi 0, %s238
      %s239 = sphi 0, %s236
      %s240 = sphi 0, %s239
      %s256 = sphi 0, %s240
    $region4: #{tpu_custom_call.1} parent=1 // loop_header_branch
      %21 = sbr.rel (%p19) target = $region8
    $region5: #{tpu_custom_call.1} parent=1 // loop_body
      %s23 = ssub.s32 %s18, 1
      %s24 = ssub.s32 %s18, 2
      %s31 = sadd.s32 1, %s26
      %p32 = scmp.ge.s32.totalorder %s31, 1
      %s33 = scalar_select %p32, 0, %s31
      %s34 = sadd.s32 1, %s25
      %s35 = scalar_select %p32, %s34, %s25
      %p36 = scmp.ge.s32.totalorder %s35, 2
      %s37 = scalar_select %p36, 0, %s35
      %s38 = ssub.s32 %s25, %s37
      %p39 = scmp.eq.s32.totalorder %s38, 0
      %s41 = sadd.s32 %s40, 1
      %s42 = scalar_select %p39, %s40, %s41
      %p45 = pneg %p39
      %p46 = scmp.eq.s32.totalorder %s18, 1
      %p47 = por %p45, %p46
      %p48 = scmp.ne.s32.totalorder %s40, %s43
      %p49 = scmp.eq.s32.totalorder %s18, 0
      %p50 = por %p48, %p49
      %p51 = scmp.ne.s32.totalorder %s40, %s43
      %p52 = scmp.eq.s32.totalorder %s23, 1
      %p53 = por %p51, %p52
      %p54 = scmp.ne.s32.totalorder %s43, %s44
      %p55 = scmp.eq.s32.totalorder %s23, 0
      %p56 = por %p54, %p55
      %p57 = scmp.ne.s32.totalorder %s43, %s44
      %p58 = scmp.eq.s32.totalorder %s24, 1
      %p59 = por %p57, %p58
      %p61 = scmp.ne.s32.totalorder %s44, %s60
      %p62 = scmp.eq.s32.totalorder %s24, 0
      %p63 = por %p61, %p62
      %s65 = sadd.s32 %s64, 1
      %p68 = scmp.eq.s32.totalorder %s18, 1
      %p69 = scmp.ne.s32.totalorder %s64, %s66
      %p70 = scmp.eq.s32.totalorder %s18, 0
      %p71 = por %p69, %p70
      %p72 = scmp.ne.s32.totalorder %s64, %s66
      %p73 = scmp.eq.s32.totalorder %s23, 1
      %p74 = por %p72, %p73
      %p75 = scmp.ne.s32.totalorder %s66, %s67
      %p76 = scmp.eq.s32.totalorder %s23, 0
      %p77 = por %p75, %p76
      %p78 = scmp.ne.s32.totalorder %s66, %s67
      %p79 = scmp.eq.s32.totalorder %s24, 1
      %p80 = por %p78, %p79
      %p82 = scmp.ne.s32.totalorder %s67, %s81
      %p83 = scmp.eq.s32.totalorder %s24, 0
      %p84 = por %p82, %p83
      %s86 = sadd.s32 %s85, 1
      %p89 = scmp.eq.s32.totalorder %s18, 1
      %p90 = scmp.ne.s32.totalorder %s85, %s87
      %p91 = scmp.eq.s32.totalorder %s18, 0
      %p92 = por %p90, %p91
      %p93 = scmp.ne.s32.totalorder %s85, %s87
      %p94 = scmp.eq.s32.totalorder %s23, 1
      %p95 = por %p93, %p94
      %p96 = scmp.ne.s32.totalorder %s87, %s88
      %p97 = scmp.eq.s32.totalorder %s23, 0
      %p98 = por %p96, %p97
      %p99 = scmp.ne.s32.totalorder %s87, %s88
      %p100 = scmp.eq.s32.totalorder %s24, 1
      %p101 = por %p99, %p100
      %p103 = scmp.ne.s32.totalorder %s88, %s102
      %p104 = scmp.eq.s32.totalorder %s24, 0
      %p105 = por %p103, %p104
      %s107 = sadd.s32 %s106, 1
      %p110 = scmp.eq.s32.totalorder %s18, 1
      %p111 = scmp.ne.s32.totalorder %s106, %s108
      %p112 = scmp.eq.s32.totalorder %s18, 0
      %p113 = por %p111, %p112
      %p114 = scmp.ne.s32.totalorder %s106, %s108
      %p115 = scmp.eq.s32.totalorder %s23, 1
      %p116 = por %p114, %p115
      %p117 = scmp.ne.s32.totalorder %s108, %s109
      %p118 = scmp.eq.s32.totalorder %s23, 0
      %p119 = por %p117, %p118
      %p120 = scmp.ne.s32.totalorder %s108, %s109
      %p121 = scmp.eq.s32.totalorder %s24, 1
      %p122 = por %p120, %p121
      %p124 = scmp.ne.s32.totalorder %s109, %s123
      %p125 = scmp.eq.s32.totalorder %s24, 0
      %p126 = por %p124, %p125
      %s128 = sadd.s32 %s127, 1
      %p131 = scmp.eq.s32.totalorder %s18, 1
      %p132 = scmp.ne.s32.totalorder %s127, %s129
      %p133 = scmp.eq.s32.totalorder %s18, 0
      %p134 = por %p132, %p133
      %p135 = scmp.ne.s32.totalorder %s127, %s129
      %p136 = scmp.eq.s32.totalorder %s23, 1
      %p137 = por %p135, %p136
      %p138 = scmp.ne.s32.totalorder %s129, %s130
      %p139 = scmp.eq.s32.totalorder %s23, 0
      %p140 = por %p138, %p139
      %p141 = scmp.ne.s32.totalorder %s129, %s130
      %p142 = scmp.eq.s32.totalorder %s24, 1
      %p143 = por %p141, %p142
      %p145 = scmp.ne.s32.totalorder %s130, %s144
      %p146 = scmp.eq.s32.totalorder %s24, 0
      %p147 = por %p145, %p146
      %s149 = sadd.s32 %s148, 1
      %p152 = scmp.eq.s32.totalorder %s18, 1
      %p153 = scmp.ne.s32.totalorder %s148, %s150
      %p154 = scmp.eq.s32.totalorder %s18, 0
      %p155 = por %p153, %p154
      %p156 = scmp.ne.s32.totalorder %s148, %s150
      %p157 = scmp.eq.s32.totalorder %s23, 1
      %p158 = por %p156, %p157
      %p159 = scmp.ne.s32.totalorder %s150, %s151
      %p160 = scmp.eq.s32.totalorder %s23, 0
      %p161 = por %p159, %p160
      %p162 = scmp.ne.s32.totalorder %s150, %s151
      %p163 = scmp.eq.s32.totalorder %s24, 1
      %p164 = por %p162, %p163
      %p166 = scmp.ne.s32.totalorder %s151, %s165
      %p167 = scmp.eq.s32.totalorder %s24, 0
      %p168 = por %p166, %p167
      %s170 = sadd.s32 %s169, 1
      %p173 = scmp.eq.s32.totalorder %s18, 1
      %p174 = scmp.ne.s32.totalorder %s169, %s171
      %p175 = scmp.eq.s32.totalorder %s18, 0
      %p176 = por %p174, %p175
      %p177 = scmp.ne.s32.totalorder %s169, %s171
      %p178 = scmp.eq.s32.totalorder %s23, 1
      %p179 = por %p177, %p178
      %p180 = scmp.ne.s32.totalorder %s171, %s172
      %p181 = scmp.eq.s32.totalorder %s23, 0
      %p182 = por %p180, %p181
      %p183 = scmp.ne.s32.totalorder %s171, %s172
      %p184 = scmp.eq.s32.totalorder %s24, 1
      %p185 = por %p183, %p184
      %p187 = scmp.ne.s32.totalorder %s172, %s186
      %p188 = scmp.eq.s32.totalorder %s24, 0
      %p189 = por %p187, %p188
      %s191 = sadd.s32 %s190, 1
      %p194 = scmp.eq.s32.totalorder %s18, 1
      %p195 = scmp.ne.s32.totalorder %s190, %s192
      %p196 = scmp.eq.s32.totalorder %s18, 0
      %p197 = por %p195, %p196
      %p198 = scmp.ne.s32.totalorder %s190, %s192
      %p199 = scmp.eq.s32.totalorder %s23, 1
      %p200 = por %p198, %p199
      %p201 = scmp.ne.s32.totalorder %s192, %s193
      %p202 = scmp.eq.s32.totalorder %s23, 0
      %p203 = por %p201, %p202
      %p204 = scmp.ne.s32.totalorder %s192, %s193
      %p205 = scmp.eq.s32.totalorder %s24, 1
      %p206 = por %p204, %p205
      %p208 = scmp.ne.s32.totalorder %s193, %s207
      %p209 = scmp.eq.s32.totalorder %s24, 0
      %p210 = por %p208, %p209
      %s212 = sadd.s32 %s211, 1
      %p215 = scmp.eq.s32.totalorder %s18, 1
      %p216 = scmp.ne.s32.totalorder %s211, %s213
      %p217 = scmp.eq.s32.totalorder %s18, 0
      %p218 = por %p216, %p217
      %p219 = scmp.ne.s32.totalorder %s211, %s213
      %p220 = scmp.eq.s32.totalorder %s23, 1
      %p221 = por %p219, %p220
      %p222 = scmp.ne.s32.totalorder %s213, %s214
      %p223 = scmp.eq.s32.totalorder %s23, 0
      %p224 = por %p222, %p223
      %p225 = scmp.ne.s32.totalorder %s213, %s214
      %p226 = scmp.eq.s32.totalorder %s24, 1
      %p227 = por %p225, %p226
      %p229 = scmp.ne.s32.totalorder %s214, %s228
      %p230 = scmp.eq.s32.totalorder %s24, 0
      %p231 = por %p229, %p230
      %s232 = ssub.s32 %s25, %s37
      %s233 = ssub.s32 %s26, %s33
      %s234 = sor.u32 %s232, %s233
      %p235 = scmp.eq.s32.totalorder %s234, 0
      %s237 = sadd.s32 %s236, 1
      %s238 = scalar_select %p235, %s236, %s237
      %p241 = pneg %p235
      %p242 = scmp.eq.s32.totalorder %s18, 1
      %p243 = por %p241, %p242
      %p244 = scmp.ne.s32.totalorder %s236, %s239
      %p245 = scmp.eq.s32.totalorder %s18, 0
      %p246 = por %p244, %p245
      %p247 = scmp.ne.s32.totalorder %s236, %s239
      %p248 = scmp.eq.s32.totalorder %s23, 1
      %p249 = por %p247, %p248
      %p250 = scmp.ne.s32.totalorder %s239, %s240
      %p251 = scmp.eq.s32.totalorder %s23, 0
      %p252 = por %p250, %p251
      %p253 = scmp.ne.s32.totalorder %s239, %s240
      %p254 = scmp.eq.s32.totalorder %s24, 1
      %p255 = por %p253, %p254
      %p257 = scmp.ne.s32.totalorder %s240, %s256
      %p258 = scmp.eq.s32.totalorder %s24, 0
      %p259 = por %p257, %p258
      %p260 = scmp.le.s32.totalorder 1, %s18
      %p261 = scmp.lt.s32.totalorder %s18, 3
      %p262 = pnand %p260, %p261
      %p263 = pneg %p262
      // Predicated region
      $region9: #{tpu_custom_call.1} parent=5 // pred_check
        _
      $region10: #{tpu_custom_call.1} parent=5 // pred_check_branch
        %265 = sbr.rel (%p262) target = $region12
      $region11: #{tpu_custom_call.1} parent=5 // pred_region
        %s266 = ssub.s32 %s18, 1
        // Predicated region
        $region13: #{tpu_custom_call.1} parent=11 // pred_check
          %p267 = pneg %p77
        $region14: #{tpu_custom_call.1} parent=11 // pred_check_branch
          %269 = sbr.rel (%p267) target = $region16
        $region15: #{tpu_custom_call.1} parent=11 // pred_region
          _
        $region16: #{tpu_custom_call.1} parent=11 // pred_fallthru
          _
        // Predicated region
        $region17: #{tpu_custom_call.1} parent=11 // pred_check
          %p270 = pneg %p98
        $region18: #{tpu_custom_call.1} parent=11 // pred_check_branch
          %272 = sbr.rel (%p270) target = $region20
        $region19: #{tpu_custom_call.1} parent=11 // pred_region
          _
        $region20: #{tpu_custom_call.1} parent=11 // pred_fallthru
          _
        // Predicated region
        $region21: #{tpu_custom_call.1} parent=11 // pred_check
          %p273 = pneg %p119
        $region22: #{tpu_custom_call.1} parent=11 // pred_check_branch
          %275 = sbr.rel (%p273) target = $region24
        $region23: #{tpu_custom_call.1} parent=11 // pred_region
          _
        $region24: #{tpu_custom_call.1} parent=11 // pred_fallthru
          _
        // Predicated region
        $region25: #{tpu_custom_call.1} parent=11 // pred_check
          %p276 = pneg %p140
        $region26: #{tpu_custom_call.1} parent=11 // pred_check_branch
          %278 = sbr.rel (%p276) target = $region28
        $region27: #{tpu_custom_call.1} parent=11 // pred_region
          _
        $region28: #{tpu_custom_call.1} parent=11 // pred_fallthru
          _
        // Predicated region
        $region29: #{tpu_custom_call.1} parent=11 // pred_check
          %p279 = pneg %p161
        $region30: #{tpu_custom_call.1} parent=11 // pred_check_branch
          %281 = sbr.rel (%p279) target = $region32
        $region31: #{tpu_custom_call.1} parent=11 // pred_region
          _
        $region32: #{tpu_custom_call.1} parent=11 // pred_fallthru
          _
        // Predicated region
        $region33: #{tpu_custom_call.1} parent=11 // pred_check
          %p282 = pneg %p182
        $region34: #{tpu_custom_call.1} parent=11 // pred_check_branch
          %284 = sbr.rel (%p282) target = $region36
        $region35: #{tpu_custom_call.1} parent=11 // pred_region
          _
        $region36: #{tpu_custom_call.1} parent=11 // pred_fallthru
          _
        // Predicated region
        $region37: #{tpu_custom_call.1} parent=11 // pred_check
          %p285 = pneg %p203
        $region38: #{tpu_custom_call.1} parent=11 // pred_check_branch
          %287 = sbr.rel (%p285) target = $region40
        $region39: #{tpu_custom_call.1} parent=11 // pred_region
          _
        $region40: #{tpu_custom_call.1} parent=11 // pred_fallthru
          _
        // Predicated region
        $region41: #{tpu_custom_call.1} parent=11 // pred_check
          %p288 = pneg %p224
        $region42: #{tpu_custom_call.1} parent=11 // pred_check_branch
          %290 = sbr.rel (%p288) target = $region44
        $region43: #{tpu_custom_call.1} parent=11 // pred_region
          _
        $region44: #{tpu_custom_call.1} parent=11 // pred_fallthru
          _
      $region12: #{tpu_custom_call.1} parent=5 // pred_fallthru
        _
      %p291 = scmp.lt.s32.totalorder %s18, 2
      // Predicated region
      $region45: #{tpu_custom_call.1} parent=5 // pred_check
        %p292 = pneg %p291
      $region46: #{tpu_custom_call.1} parent=5 // pred_check_branch
        %294 = sbr.rel (%p292) target = $region48
      $region47: #{tpu_custom_call.1} parent=5 // pred_region
        // Predicated region
        $region49: #{tpu_custom_call.1} parent=47 // pred_check
          %p295 = pneg %p50
        $region50: #{tpu_custom_call.1} parent=47 // pred_check_branch
          %297 = sbr.rel (%p295) target = $region52
        $region51: #{tpu_custom_call.1} parent=47 // pred_region
          %p298 = scmp.lt.s32.totalorder %s25, 1
          %s299 = scalar_select %p298, %s25, 1
          %s300 = smul.addr %s299, 80
          %s301 = smul.addr %s300, 8
          %s302 = scalar_lea.vmem %s0, %s301
        $region52: #{tpu_custom_call.1} parent=47 // pred_fallthru
          _
      $region48: #{tpu_custom_call.1} parent=5 // pred_fallthru
        _
      %p303 = scmp.le.s32.totalorder 1, %s18
      %p304 = scmp.lt.s32.totalorder %s18, 3
      %p305 = pnand %p303, %p304
      %p306 = pneg %p305
      // Predicated region
      $region53: #{tpu_custom_call.1} parent=5 // pred_check
        _
      $region54: #{tpu_custom_call.1} parent=5 // pred_check_branch
        %308 = sbr.rel (%p305) target = $region56
      $region55: #{tpu_custom_call.1} parent=5 // pred_region
        %s309 = ssub.s32 %s18, 1
        %p310 = scmp.lt.s32.totalorder %s27, 1
        %s311 = scalar_select %p310, %s27, 1
        %s312 = smul.addr %s311, 80
        %s313 = smul.addr %s312, 8
        %s314 = scalar_lea.vmem %s0, %s313
        %p315 = pneg %p56
        %p316 = pneg %p53
        %p317 = pneg %p77
        %p318 = pneg %p74
        %p319 = pneg %p98
        %p320 = pneg %p95
        %p321 = pneg %p119
        %p322 = pneg %p116
        %p323 = pneg %p140
        %p324 = pneg %p137
        %p325 = pneg %p161
        %p326 = pneg %p158
        %p327 = pneg %p182
        %p328 = pneg %p179
        %p329 = pneg %p203
        %p330 = pneg %p200
        %p331 = pneg %p224
        %p332 = pneg %p221
        %p333 = pneg %p252
        %p334 = pneg %p249
        %s335 = sand.u32 %s239, 1
        %s336 = scalar_lea.sflag [#allocation3], %s335
        %s337 = sand.u32 %s239, 1
        %s338 = smul.addr %s337, 256
        %s339 = scalar_lea.vmem [#allocation2], %s338
        %p340 = scmp.lt.s32.totalorder %s27, 1
        %s341 = scalar_select %p340, %s27, 1
        %s342 = smul.addr %s341, 80
        %s343 = smul.addr %s342, 8
        %s344 = scalar_lea.vmem %s0, %s343
        %s345 = smul.u32 16, %s28
        %s347 = smul.u32 %s28, 16
        %s348 = smul.u32 %s347, 32
        %s349 = scalar_lea.vmem %s344, %s348
        %v350 = vld [vmem:[%s349] sm:$0xff]
        %v351 = vld [vmem:[%s349 + $0x8] sm:$0xff]
        %v352 = vld [vmem:[%s349 + $0x10] sm:$0xff]
        %v353 = vld [vmem:[%s349 + $0x18] sm:$0xff]
        %v354 = vld [vmem:[%s349 + $0x20] sm:$0xff]
        %v355 = vld [vmem:[%s349 + $0x28] sm:$0xff]
        %v356 = vld [vmem:[%s349 + $0x30] sm:$0xff]
        %v357 = vld [vmem:[%s349 + $0x38] sm:$0xff]
        %v358 = vld [vmem:[%s349 + $0x40] sm:$0xff]
        %v359 = vld [vmem:[%s349 + $0x48] sm:$0xff]
        %v360 = vld [vmem:[%s349 + $0x50] sm:$0xff]
        %v361 = vld [vmem:[%s349 + $0x58] sm:$0xff]
        %v362 = vld [vmem:[%s349 + $0x60] sm:$0xff]
        %v363 = vld [vmem:[%s349 + $0x68] sm:$0xff]
        %v364 = vld [vmem:[%s349 + $0x70] sm:$0xff]
        %v365 = vld [vmem:[%s349 + $0x78] sm:$0xff]
        %v366 = vld [vmem:[%s349 + $0x80] sm:$0xff]
        %v367 = vld [vmem:[%s349 + $0x88] sm:$0xff]
        %v368 = vld [vmem:[%s349 + $0x90] sm:$0xff]
        %v369 = vld [vmem:[%s349 + $0x98] sm:$0xff]
        %v370 = vld [vmem:[%s349 + $0xa0] sm:$0xff]
        %v371 = vld [vmem:[%s349 + $0xa8] sm:$0xff]
        %v372 = vld [vmem:[%s349 + $0xb0] sm:$0xff]
        %v373 = vld [vmem:[%s349 + $0xb8] sm:$0xff]
        %v374 = vld [vmem:[%s349 + $0xc0] sm:$0xff]
        %v375 = vld [vmem:[%s349 + $0xc8] sm:$0xff]
        %v376 = vld [vmem:[%s349 + $0xd0] sm:$0xff]
        %v377 = vld [vmem:[%s349 + $0xd8] sm:$0xff]
        %v378 = vld [vmem:[%s349 + $0xe0] sm:$0xff]
        %v379 = vld [vmem:[%s349 + $0xe8] sm:$0xff]
        %v380 = vld [vmem:[%s349 + $0xf0] sm:$0xff]
        %v381 = vld [vmem:[%s349 + $0xf8] sm:$0xff]
        %v382 = vld [vmem:[%s349 + $0x100] sm:$0xff]
        %v383 = vld [vmem:[%s349 + $0x108] sm:$0xff]
        %v384 = vld [vmem:[%s349 + $0x110] sm:$0xff]
        %v385 = vld [vmem:[%s349 + $0x118] sm:$0xff]
        %v386 = vld [vmem:[%s349 + $0x120] sm:$0xff]
        %v387 = vld [vmem:[%s349 + $0x128] sm:$0xff]
        %v388 = vld [vmem:[%s349 + $0x130] sm:$0xff]
        %v389 = vld [vmem:[%s349 + $0x138] sm:$0xff]
        %v390 = vld [vmem:[%s349 + $0x140] sm:$0xff]
        %v391 = vld [vmem:[%s349 + $0x148] sm:$0xff]
        %v392 = vld [vmem:[%s349 + $0x150] sm:$0xff]
        %v393 = vld [vmem:[%s349 + $0x158] sm:$0xff]
        %v394 = vld [vmem:[%s349 + $0x160] sm:$0xff]
        %v395 = vld [vmem:[%s349 + $0x168] sm:$0xff]
        %v396 = vld [vmem:[%s349 + $0x170] sm:$0xff]
        %v397 = vld [vmem:[%s349 + $0x178] sm:$0xff]
        %v398 = vld [vmem:[%s349 + $0x180] sm:$0xff]
        %v399 = vld [vmem:[%s349 + $0x188] sm:$0xff]
        %v400 = vld [vmem:[%s349 + $0x190] sm:$0xff]
        %v401 = vld [vmem:[%s349 + $0x198] sm:$0xff]
        %v402 = vld [vmem:[%s349 + $0x1a0] sm:$0xff]
        %v403 = vld [vmem:[%s349 + $0x1a8] sm:$0xff]
        %v404 = vld [vmem:[%s349 + $0x1b0] sm:$0xff]
        %v405 = vld [vmem:[%s349 + $0x1b8] sm:$0xff]
        %v406 = vld [vmem:[%s349 + $0x1c0] sm:$0xff]
        %v407 = vld [vmem:[%s349 + $0x1c8] sm:$0xff]
        %v408 = vld [vmem:[%s349 + $0x1d0] sm:$0xff]
        %v409 = vld [vmem:[%s349 + $0x1d8] sm:$0xff]
        %v410 = vld [vmem:[%s349 + $0x1e0] sm:$0xff]
        %v411 = vld [vmem:[%s349 + $0x1e8] sm:$0xff]
        %v412 = vld [vmem:[%s349 + $0x1f0] sm:$0xff]
        %v413 = vld [vmem:[%s349 + $0x1f8] sm:$0xff]
        %v414 = vld [vmem:[%s349 + $0x200] sm:$0xff]
        %v415 = vld [vmem:[%s349 + $0x208] sm:$0xff]
        %v416 = vld [vmem:[%s349 + $0x210] sm:$0xff]
        %v417 = vld [vmem:[%s349 + $0x218] sm:$0xff]
        %v418 = vld [vmem:[%s349 + $0x220] sm:$0xff]
        %v419 = vld [vmem:[%s349 + $0x228] sm:$0xff]
        %v420 = vld [vmem:[%s349 + $0x230] sm:$0xff]
        %v421 = vld [vmem:[%s349 + $0x238] sm:$0xff]
        %v422 = vld [vmem:[%s349 + $0x240] sm:$0xff]
        %v423 = vld [vmem:[%s349 + $0x248] sm:$0xff]
        %v424 = vld [vmem:[%s349 + $0x250] sm:$0xff]
        %v425 = vld [vmem:[%s349 + $0x258] sm:$0xff]
        %v426 = vld [vmem:[%s349 + $0x260] sm:$0xff]
        %v427 = vld [vmem:[%s349 + $0x268] sm:$0xff]
        %v428 = vld [vmem:[%s349 + $0x270] sm:$0xff]
        %v429 = vld [vmem:[%s349 + $0x278] sm:$0xff]
        %v430 = vstv %s347
        %v431 = vadd.s32 %v430, 1
        %v432 = vadd.s32 %v430, 2
        %v433 = vadd.s32 %v430, 3
        %v434 = vadd.s32 %v430, 4
        %v435 = vadd.s32 %v430, 5
        %v436 = vadd.s32 %v430, 6
        %v437 = vadd.s32 %v430, 7
        %v438 = vadd.s32 %v430, 8
        %v439 = vadd.s32 %v430, 9
        %v440 = vadd.s32 %v430, 10
        %v441 = vadd.s32 %v430, 11
        %v442 = vadd.s32 %v430, 12
        %v443 = vadd.s32 %v430, 13
        %v444 = vadd.s32 %v430, 14
        %v445 = vadd.s32 %v430, 15
        %v446 = vadd.s32 %v430, 16
        %v447 = vadd.s32 %v430, 17
        %v448 = vadd.s32 %v430, 18
        %v449 = vadd.s32 %v430, 19
        %v450 = vlaneseq
        %v451 = vshrl.u32 %v450, 7
        %v452 = vadd.s32 %v451, 8
        %v453 = vadd.s32 %v451, 16
        %v454 = vadd.s32 %v451, 24
        %vm455 = vcmp.ge.s32.totalorder %v430, 2
        %vm456 = vcmp.ge.s32.totalorder %v431, 2
        %vm457 = vcmp.ge.s32.totalorder %v432, 2
        %vm458 = vcmp.ge.s32.totalorder %v433, 2
        %vm459 = vcmp.ge.s32.totalorder %v434, 2
        %vm460 = vcmp.ge.s32.totalorder %v435, 2
        %vm461 = vcmp.ge.s32.totalorder %v436, 2
        %vm462 = vcmp.ge.s32.totalorder %v437, 2
        %vm463 = vcmp.ge.s32.totalorder %v438, 2
        %vm464 = vcmp.ge.s32.totalorder %v439, 2
        %vm465 = vcmp.ge.s32.totalorder %v440, 2
        %vm466 = vcmp.ge.s32.totalorder %v441, 2
        %vm467 = vcmp.ge.s32.totalorder %v442, 2
        %vm468 = vcmp.ge.s32.totalorder %v443, 2
        %vm469 = vcmp.ge.s32.totalorder %v444, 2
        %vm470 = vcmp.ge.s32.totalorder %v445, 2
        %vm471 = vcmp.ge.s32.totalorder %v446, 2
        %vm472 = vcmp.ge.s32.totalorder %v447, 2
        %vm473 = vcmp.ge.s32.totalorder %v448, 2
        %vm474 = vcmp.ge.s32.totalorder %v449, 2
        %vm475 = vcmp.lt.s32.totalorder %v430, 18
        %vm476 = vcmp.lt.s32.totalorder %v431, 18
        %vm477 = vcmp.lt.s32.totalorder %v432, 18
        %vm478 = vcmp.lt.s32.totalorder %v433, 18
        %vm479 = vcmp.lt.s32.totalorder %v434, 18
        %vm480 = vcmp.lt.s32.totalorder %v435, 18
        %vm481 = vcmp.lt.s32.totalorder %v436, 18
        %vm482 = vcmp.lt.s32.totalorder %v437, 18
        %vm483 = vcmp.lt.s32.totalorder %v438, 18
        %vm484 = vcmp.lt.s32.totalorder %v439, 18
        %vm485 = vcmp.lt.s32.totalorder %v440, 18
        %vm486 = vcmp.lt.s32.totalorder %v441, 18
        %vm487 = vcmp.lt.s32.totalorder %v442, 18
        %vm488 = vcmp.lt.s32.totalorder %v443, 18
        %vm489 = vcmp.lt.s32.totalorder %v444, 18
        %vm490 = vcmp.lt.s32.totalorder %v445, 18
        %vm491 = vcmp.lt.s32.totalorder %v446, 18
        %vm492 = vcmp.lt.s32.totalorder %v447, 18
        %vm493 = vcmp.lt.s32.totalorder %v448, 18
        %vm494 = vcmp.lt.s32.totalorder %v449, 18
        %vm495 = vmand %vm455, %vm475
        %vm496 = vmand %vm456, %vm476
        %vm497 = vmand %vm457, %vm477
        %vm498 = vmand %vm458, %vm478
        %vm499 = vmand %vm459, %vm479
        %vm500 = vmand %vm460, %vm480
        %vm501 = vmand %vm461, %vm481
        %vm502 = vmand %vm462, %vm482
        %vm503 = vmand %vm463, %vm483
        %vm504 = vmand %vm464, %vm484
        %vm505 = vmand %vm465, %vm485
        %vm506 = vmand %vm466, %vm486
        %vm507 = vmand %vm467, %vm487
        %vm508 = vmand %vm468, %vm488
        %vm509 = vmand %vm469, %vm489
        %vm510 = vmand %vm470, %vm490
        %vm511 = vmand %vm471, %vm491
        %vm512 = vmand %vm472, %vm492
        %vm513 = vmand %vm473, %vm493
        %vm514 = vmand %vm474, %vm494
        %vm515 = vcmp.ge.s32.totalorder %v451, 8
        %vm516 = vcmp.ge.s32.totalorder %v452, 8
        %vm517 = vcmp.ge.s32.totalorder %v453, 8
        %vm518 = vcmp.ge.s32.totalorder %v454, 8
        %vm519 = vmand %vm495, %vm515
        %vm520 = vmand %vm495, %vm516
        %vm521 = vmand %vm495, %vm517
        %vm522 = vmand %vm495, %vm518
        %vm523 = vmand %vm496, %vm515
        %vm524 = vmand %vm496, %vm516
        %vm525 = vmand %vm496, %vm517
        %vm526 = vmand %vm496, %vm518
        %vm527 = vmand %vm497, %vm515
        %vm528 = vmand %vm497, %vm516
        %vm529 = vmand %vm497, %vm517
        %vm530 = vmand %vm497, %vm518
        %vm531 = vmand %vm498, %vm515
        %vm532 = vmand %vm498, %vm516
        %vm533 = vmand %vm498, %vm517
        %vm534 = vmand %vm498, %vm518
        %vm535 = vmand %vm499, %vm515
        %vm536 = vmand %vm499, %vm516
        %vm537 = vmand %vm499, %vm517
        %vm538 = vmand %vm499, %vm518
        %vm539 = vmand %vm500, %vm515
        %vm540 = vmand %vm500, %vm516
        %vm541 = vmand %vm500, %vm517
        %vm542 = vmand %vm500, %vm518
        %vm543 = vmand %vm501, %vm515
        %vm544 = vmand %vm501, %vm516
        %vm545 = vmand %vm501, %vm517
        %vm546 = vmand %vm501, %vm518
        %vm547 = vmand %vm502, %vm515
        %vm548 = vmand %vm502, %vm516
        %vm549 = vmand %vm502, %vm517
        %vm550 = vmand %vm502, %vm518
        %vm551 = vmand %vm503, %vm515
        %vm552 = vmand %vm503, %vm516
        %vm553 = vmand %vm503, %vm517
        %vm554 = vmand %vm503, %vm518
        %vm555 = vmand %vm504, %vm515
        %vm556 = vmand %vm504, %vm516
        %vm557 = vmand %vm504, %vm517
        %vm558 = vmand %vm504, %vm518
        %vm559 = vmand %vm505, %vm515
        %vm560 = vmand %vm505, %vm516
        %vm561 = vmand %vm505, %vm517
        %vm562 = vmand %vm505, %vm518
        %vm563 = vmand %vm506, %vm515
        %vm564 = vmand %vm506, %vm516
        %vm565 = vmand %vm506, %vm517
        %vm566 = vmand %vm506, %vm518
        %vm567 = vmand %vm507, %vm515
        %vm568 = vmand %vm507, %vm516
        %vm569 = vmand %vm507, %vm517
        %vm570 = vmand %vm507, %vm518
        %vm571 = vmand %vm508, %vm515
        %vm572 = vmand %vm508, %vm516
        %vm573 = vmand %vm508, %vm517
        %vm574 = vmand %vm508, %vm518
        %vm575 = vmand %vm509, %vm515
        %vm576 = vmand %vm509, %vm516
        %vm577 = vmand %vm509, %vm517
        %vm578 = vmand %vm509, %vm518
        %vm579 = vmand %vm510, %vm515
        %vm580 = vmand %vm510, %vm516
        %vm581 = vmand %vm510, %vm517
        %vm582 = vmand %vm510, %vm518
        %vm583 = vmand %vm511, %vm515
        %vm584 = vmand %vm511, %vm516
        %vm585 = vmand %vm511, %vm517
        %vm586 = vmand %vm511, %vm518
        %vm587 = vmand %vm512, %vm515
        %vm588 = vmand %vm512, %vm516
        %vm589 = vmand %vm512, %vm517
        %vm590 = vmand %vm512, %vm518
        %vm591 = vmand %vm513, %vm515
        %vm592 = vmand %vm513, %vm516
        %vm593 = vmand %vm513, %vm517
        %vm594 = vmand %vm513, %vm518
        %vm595 = vmand %vm514, %vm515
        %vm596 = vmand %vm514, %vm516
        %vm597 = vmand %vm514, %vm517
        %vm598 = vmand %vm514, %vm518
        %vm599 = vcmp.lt.s32.totalorder %v451, 24
        %vm600 = vcmp.lt.s32.totalorder %v452, 24
        %vm601 = vcmp.lt.s32.totalorder %v453, 24
        %vm602 = vcmp.lt.s32.totalorder %v454, 24
        %vm603 = vmand %vm519, %vm599
        %vm604 = vmand %vm520, %vm600
        %vm605 = vmand %vm521, %vm601
        %vm606 = vmand %vm522, %vm602
        %vm607 = vmand %vm523, %vm599
        %vm608 = vmand %vm524, %vm600
        %vm609 = vmand %vm525, %vm601
        %vm610 = vmand %vm526, %vm602
        %vm611 = vmand %vm527, %vm599
        %vm612 = vmand %vm528, %vm600
        %vm613 = vmand %vm529, %vm601
        %vm614 = vmand %vm530, %vm602
        %vm615 = vmand %vm531, %vm599
        %vm616 = vmand %vm532, %vm600
        %vm617 = vmand %vm533, %vm601
        %vm618 = vmand %vm534, %vm602
        %vm619 = vmand %vm535, %vm599
        %vm620 = vmand %vm536, %vm600
        %vm621 = vmand %vm537, %vm601
        %vm622 = vmand %vm538, %vm602
        %vm623 = vmand %vm539, %vm599
        %vm624 = vmand %vm540, %vm600
        %vm625 = vmand %vm541, %vm601
        %vm626 = vmand %vm542, %vm602
        %vm627 = vmand %vm543, %vm599
        %vm628 = vmand %vm544, %vm600
        %vm629 = vmand %vm545, %vm601
        %vm630 = vmand %vm546, %vm602
        %vm631 = vmand %vm547, %vm599
        %vm632 = vmand %vm548, %vm600
        %vm633 = vmand %vm549, %vm601
        %vm634 = vmand %vm550, %vm602
        %vm635 = vmand %vm551, %vm599
        %vm636 = vmand %vm552, %vm600
        %vm637 = vmand %vm553, %vm601
        %vm638 = vmand %vm554, %vm602
        %vm639 = vmand %vm555, %vm599
        %vm640 = vmand %vm556, %vm600
        %vm641 = vmand %vm557, %vm601
        %vm642 = vmand %vm558, %vm602
        %vm643 = vmand %vm559, %vm599
        %vm644 = vmand %vm560, %vm600
        %vm645 = vmand %vm561, %vm601
        %vm646 = vmand %vm562, %vm602
        %vm647 = vmand %vm563, %vm599
        %vm648 = vmand %vm564, %vm600
        %vm649 = vmand %vm565, %vm601
        %vm650 = vmand %vm566, %vm602
        %vm651 = vmand %vm567, %vm599
        %vm652 = vmand %vm568, %vm600
        %vm653 = vmand %vm569, %vm601
        %vm654 = vmand %vm570, %vm602
        %vm655 = vmand %vm571, %vm599
        %vm656 = vmand %vm572, %vm600
        %vm657 = vmand %vm573, %vm601
        %vm658 = vmand %vm574, %vm602
        %vm659 = vmand %vm575, %vm599
        %vm660 = vmand %vm576, %vm600
        %vm661 = vmand %vm577, %vm601
        %vm662 = vmand %vm578, %vm602
        %vm663 = vmand %vm579, %vm599
        %vm664 = vmand %vm580, %vm600
        %vm665 = vmand %vm581, %vm601
        %vm666 = vmand %vm582, %vm602
        %vm667 = vmand %vm583, %vm599
        %vm668 = vmand %vm584, %vm600
        %vm669 = vmand %vm585, %vm601
        %vm670 = vmand %vm586, %vm602
        %vm671 = vmand %vm587, %vm599
        %vm672 = vmand %vm588, %vm600
        %vm673 = vmand %vm589, %vm601
        %vm674 = vmand %vm590, %vm602
        %vm675 = vmand %vm591, %vm599
        %vm676 = vmand %vm592, %vm600
        %vm677 = vmand %vm593, %vm601
        %vm678 = vmand %vm594, %vm602
        %vm679 = vmand %vm595, %vm599
        %vm680 = vmand %vm596, %vm600
        %vm681 = vmand %vm597, %vm601
        %vm682 = vmand %vm598, %vm602
        %v683 = vpack.c.bf16 %v351, %v350
        %v684 = vpack.c.bf16 %v353, %v352
        %v685 = vpack.c.bf16 %v355, %v354
        %v686 = vpack.c.bf16 %v357, %v356
        %v687 = vpack.c.bf16 %v359, %v358
        %v688 = vpack.c.bf16 %v361, %v360
        %v689 = vpack.c.bf16 %v363, %v362
        %v690 = vpack.c.bf16 %v365, %v364
        %v691 = vpack.c.bf16 %v367, %v366
        %v692 = vpack.c.bf16 %v369, %v368
        %v693 = vpack.c.bf16 %v371, %v370
        %v694 = vpack.c.bf16 %v373, %v372
        %v695 = vpack.c.bf16 %v375, %v374
        %v696 = vpack.c.bf16 %v377, %v376
        %v697 = vpack.c.bf16 %v379, %v378
        %v698 = vpack.c.bf16 %v381, %v380
        %v699 = vpack.c.bf16 %v383, %v382
        %v700 = vpack.c.bf16 %v385, %v384
        %v701 = vpack.c.bf16 %v387, %v386
        %v702 = vpack.c.bf16 %v389, %v388
        %v703 = vpack.c.bf16 %v391, %v390
        %v704 = vpack.c.bf16 %v393, %v392
        %v705 = vpack.c.bf16 %v395, %v394
        %v706 = vpack.c.bf16 %v397, %v396
        %v707 = vpack.c.bf16 %v399, %v398
        %v708 = vpack.c.bf16 %v401, %v400
        %v709 = vpack.c.bf16 %v403, %v402
        %v710 = vpack.c.bf16 %v405, %v404
        %v711 = vpack.c.bf16 %v407, %v406
        %v712 = vpack.c.bf16 %v409, %v408
        %v713 = vpack.c.bf16 %v411, %v410
        %v714 = vpack.c.bf16 %v413, %v412
        %v715 = vpack.c.bf16 %v415, %v414
        %v716 = vpack.c.bf16 %v417, %v416
        %v717 = vpack.c.bf16 %v419, %v418
        %v718 = vpack.c.bf16 %v421, %v420
        %v719 = vpack.c.bf16 %v423, %v422
        %v720 = vpack.c.bf16 %v425, %v424
        %v721 = vpack.c.bf16 %v427, %v426
        %v722 = vpack.c.bf16 %v429, %v428
        %v723 = vld [vmem:[%s1] sm:$0x3]
        %v724 = vld [vmem:[%s2] sm:$0x1]
        %v726 = vlaneseq
        %v727 = vshrl.u32 %v726, 7
        %v728 = vsub.s32 0, %v727
        %v729 = vrot.slane %v724, %v728
        %vm731 = vcmask 31744
        %v733 = vsel %vm731, %v683, 0
        %v736 = vsel %vm731, %v684, 0
        %v739 = vsel %vm731, %v685, 0
        %v742 = vsel %vm731, %v686, 0
        %v745 = vsel %vm731, %v687, 0
        %v748 = vsel %vm731, %v688, 0
        %v751 = vsel %vm731, %v689, 0
        %v754 = vsel %vm731, %v690, 0
        %v757 = vsel %vm731, %v691, 0
        %v760 = vsel %vm731, %v692, 0
        %v763 = vsel %vm731, %v693, 0
        %v766 = vsel %vm731, %v694, 0
        %v769 = vsel %vm731, %v695, 0
        %v772 = vsel %vm731, %v696, 0
        %v775 = vsel %vm731, %v697, 0
        %v778 = vsel %vm731, %v698, 0
        %v781 = vsel %vm731, %v699, 0
        %v784 = vsel %vm731, %v700, 0
        %v787 = vsel %vm731, %v701, 0
        %v790 = vsel %vm731, %v702, 0
        %v793 = vsel %vm731, %v703, 0
        %v796 = vsel %vm731, %v704, 0
        %v799 = vsel %vm731, %v705, 0
        %v802 = vsel %vm731, %v706, 0
        %v805 = vsel %vm731, %v707, 0
        %v808 = vsel %vm731, %v708, 0
        %v811 = vsel %vm731, %v709, 0
        %v814 = vsel %vm731, %v710, 0
        %v817 = vsel %vm731, %v711, 0
        %v820 = vsel %vm731, %v712, 0
        %v823 = vsel %vm731, %v713, 0
        %v826 = vsel %vm731, %v714, 0
        %v829 = vsel %vm731, %v715, 0
        %v832 = vsel %vm731, %v716, 0
        %v835 = vsel %vm731, %v717, 0
        %v838 = vsel %vm731, %v718, 0
        %v841 = vsel %vm731, %v719, 0
        %v844 = vsel %vm731, %v720, 0
        %v847 = vsel %vm731, %v721, 0
        %v850 = vsel %vm731, %v722, 0
        %vm852 = vcmask 1041408
        %v854 = vsel %vm852, %v723, 0
        %856 = vmatprep.subr.bf16.mxu0 0
        %857 = vmatpush1.bf16.msra.mxu0 0
        %858 = vmatprep.subr.bf16.mxu0 0
        %859 = vmatpush1.bf16.msra.mxu0 0
        %860 = vmatprep.subr.bf16.mxu0 0
        %861 = vmatpush1.bf16.msra.mxu0 0
        %862 = vmatprep.subr.bf16.mxu0 0
        %863 = vmatpush1.bf16.msra.mxu0 0
        %864 = vmatprep.subr.bf16.mxu0 0
        %865 = vmatpush1.bf16.msra.mxu0 0
        %866 = vmatprep.subr.bf16.mxu0 0
        %867 = vmatpush1.bf16.msra.mxu0 0
        %868 = vmatprep.subr.bf16.mxu0 0
        %869 = vmatpush1.bf16.msra.mxu0 0
        %870 = vmatprep.subr.bf16.mxu0 0
        %871 = vmatpush1.bf16.msra.mxu0 %v854
        %872 = vmatprep.subr.bf16.mxu0 0
        %873 = vmatpush2.bf16.msra.mxu0 0
        %874 = vmatprep.subr.bf16.mxu0 0
        %875 = vmatpush2.bf16.msra.mxu0 0
        %876 = vmatprep.subr.bf16.mxu0 0
        %877 = vmatpush2.bf16.msra.mxu0 0
        %878 = vmatprep.subr.bf16.mxu0 0
        %879 = vmatpush2.bf16.msra.mxu0 0
        %880 = vmatprep.subr.bf16.mxu0 0
        %881 = vmatpush2.bf16.msra.mxu0 0
        %882 = vmatprep.subr.bf16.mxu0 0
        %883 = vmatpush2.bf16.msra.mxu0 0
        %884 = vmatprep.subr.bf16.mxu0 0
        %885 = vmatpush2.bf16.msra.mxu0 0
        %886 = vmatprep.subr.bf16.mxu0 0
        %887 = vmatpush2.bf16.msra.mxu0 0
        %888 = vmatprep.mubr.bf16.mxu0 0
        %889 = vmatmul.mubr.bf16.gmra.mxu0 %v733
        %v890 = vpop.f32.mrf.mxu0
        %v891 = vadd.f32 %v729, %v890
        %v892 = vpop.f32.mrf.mxu0
        %v893 = vpop.f32.mrf.mxu0
        %v894 = vadd.f32 %v729, %v893
        %v895 = vpop.f32.mrf.mxu0
        %896 = vmatprep.mubr.bf16.mxu0 0
        %897 = vmatmul.mubr.bf16.gmra.mxu0 %v736
        %v898 = vpop.f32.mrf.mxu0
        %v899 = vadd.f32 %v729, %v898
        %v900 = vpop.f32.mrf.mxu0
        %v901 = vpop.f32.mrf.mxu0
        %v902 = vadd.f32 %v729, %v901
        %v903 = vpop.f32.mrf.mxu0
        %904 = vmatprep.mubr.bf16.mxu0 0
        %905 = vmatmul.mubr.bf16.gmra.mxu0 %v739
        %v906 = vpop.f32.mrf.mxu0
        %v907 = vadd.f32 %v729, %v906
        %v908 = vpop.f32.mrf.mxu0
        %v909 = vpop.f32.mrf.mxu0
        %v910 = vadd.f32 %v729, %v909
        %v911 = vpop.f32.mrf.mxu0
        %912 = vmatprep.mubr.bf16.mxu0 0
        %913 = vmatmul.mubr.bf16.gmra.mxu0 %v742
        %v914 = vpop.f32.mrf.mxu0
        %v915 = vadd.f32 %v729, %v914
        %v916 = vpop.f32.mrf.mxu0
        %v917 = vpop.f32.mrf.mxu0
        %v918 = vadd.f32 %v729, %v917
        %v919 = vpop.f32.mrf.mxu0
        %920 = vmatprep.mubr.bf16.mxu0 0
        %921 = vmatmul.mubr.bf16.gmra.mxu0 %v745
        %v922 = vpop.f32.mrf.mxu0
        %v923 = vadd.f32 %v729, %v922
        %v924 = vpop.f32.mrf.mxu0
        %v925 = vpop.f32.mrf.mxu0
        %v926 = vadd.f32 %v729, %v925
        %v927 = vpop.f32.mrf.mxu0
        %928 = vmatprep.mubr.bf16.mxu0 0
        %929 = vmatmul.mubr.bf16.gmra.mxu0 %v748
        %v930 = vpop.f32.mrf.mxu0
        %v931 = vadd.f32 %v729, %v930
        %v932 = vpop.f32.mrf.mxu0
        %v933 = vpop.f32.mrf.mxu0
        %v934 = vadd.f32 %v729, %v933
        %v935 = vpop.f32.mrf.mxu0
        %936 = vmatprep.mubr.bf16.mxu0 0
        %937 = vmatmul.mubr.bf16.gmra.mxu0 %v751
        %v938 = vpop.f32.mrf.mxu0
        %v939 = vadd.f32 %v729, %v938
        %v940 = vpop.f32.mrf.mxu0
        %v941 = vpop.f32.mrf.mxu0
        %v942 = vadd.f32 %v729, %v941
        %v943 = vpop.f32.mrf.mxu0
        %944 = vmatprep.mubr.bf16.mxu0 0
        %945 = vmatmul.mubr.bf16.gmra.mxu0 %v754
        %v946 = vpop.f32.mrf.mxu0
        %v947 = vadd.f32 %v729, %v946
        %v948 = vpop.f32.mrf.mxu0
        %v949 = vpop.f32.mrf.mxu0
        %v950 = vadd.f32 %v729, %v949
        %v951 = vpop.f32.mrf.mxu0
        %952 = vmatprep.mubr.bf16.mxu0 0
        %953 = vmatmul.mubr.bf16.gmra.mxu0 %v757
        %v954 = vpop.f32.mrf.mxu0
        %v955 = vadd.f32 %v729, %v954
        %v956 = vpop.f32.mrf.mxu0
        %v957 = vpop.f32.mrf.mxu0
        %v958 = vadd.f32 %v729, %v957
        %v959 = vpop.f32.mrf.mxu0
        %960 = vmatprep.mubr.bf16.mxu0 0
        %961 = vmatmul.mubr.bf16.gmra.mxu0 %v760
        %v962 = vpop.f32.mrf.mxu0
        %v963 = vadd.f32 %v729, %v962
        %v964 = vpop.f32.mrf.mxu0
        %v965 = vpop.f32.mrf.mxu0
        %v966 = vadd.f32 %v729, %v965
        %v967 = vpop.f32.mrf.mxu0
        %968 = vmatprep.mubr.bf16.mxu0 0
        %969 = vmatmul.mubr.bf16.gmra.mxu0 %v763
        %v970 = vpop.f32.mrf.mxu0
        %v971 = vadd.f32 %v729, %v970
        %v972 = vpop.f32.mrf.mxu0
        %v973 = vpop.f32.mrf.mxu0
        %v974 = vadd.f32 %v729, %v973
        %v975 = vpop.f32.mrf.mxu0
        %976 = vmatprep.mubr.bf16.mxu0 0
        %977 = vmatmul.mubr.bf16.gmra.mxu0 %v766
        %v978 = vpop.f32.mrf.mxu0
        %v979 = vadd.f32 %v729, %v978
        %v980 = vpop.f32.mrf.mxu0
        %v981 = vpop.f32.mrf.mxu0
        %v982 = vadd.f32 %v729, %v981
        %v983 = vpop.f32.mrf.mxu0
        %984 = vmatprep.mubr.bf16.mxu0 0
        %985 = vmatmul.mubr.bf16.gmra.mxu0 %v769
        %v986 = vpop.f32.mrf.mxu0
        %v987 = vadd.f32 %v729, %v986
        %v988 = vpop.f32.mrf.mxu0
        %v989 = vpop.f32.mrf.mxu0
        %v990 = vadd.f32 %v729, %v989
        %v991 = vpop.f32.mrf.mxu0
        %992 = vmatprep.mubr.bf16.mxu0 0
        %993 = vmatmul.mubr.bf16.gmra.mxu0 %v772
        %v994 = vpop.f32.mrf.mxu0
        %v995 = vadd.f32 %v729, %v994
        %v996 = vpop.f32.mrf.mxu0
        %v997 = vpop.f32.mrf.mxu0
        %v998 = vadd.f32 %v729, %v997
        %v999 = vpop.f32.mrf.mxu0
        %1000 = vmatprep.mubr.bf16.mxu0 0
        %1001 = vmatmul.mubr.bf16.gmra.mxu0 %v775
        %v1002 = vpop.f32.mrf.mxu0
        %v1003 = vadd.f32 %v729, %v1002
        %v1004 = vpop.f32.mrf.mxu0
        %v1005 = vpop.f32.mrf.mxu0
        %v1006 = vadd.f32 %v729, %v1005
        %v1007 = vpop.f32.mrf.mxu0
        %1008 = vmatprep.mubr.bf16.mxu0 0
        %1009 = vmatmul.mubr.bf16.gmra.mxu0 %v778
        %v1010 = vpop.f32.mrf.mxu0
        %v1011 = vadd.f32 %v729, %v1010
        %v1012 = vpop.f32.mrf.mxu0
        %v1013 = vpop.f32.mrf.mxu0
        %v1014 = vadd.f32 %v729, %v1013
        %v1015 = vpop.f32.mrf.mxu0
        %1016 = vmatprep.mubr.bf16.mxu0 0
        %1017 = vmatmul.mubr.bf16.gmra.mxu0 %v781
        %v1018 = vpop.f32.mrf.mxu0
        %v1019 = vadd.f32 %v729, %v1018
        %v1020 = vpop.f32.mrf.mxu0
        %v1021 = vpop.f32.mrf.mxu0
        %v1022 = vadd.f32 %v729, %v1021
        %v1023 = vpop.f32.mrf.mxu0
        %1024 = vmatprep.mubr.bf16.mxu0 0
        %1025 = vmatmul.mubr.bf16.gmra.mxu0 %v784
        %v1026 = vpop.f32.mrf.mxu0
        %v1027 = vadd.f32 %v729, %v1026
        %v1028 = vpop.f32.mrf.mxu0
        %v1029 = vpop.f32.mrf.mxu0
        %v1030 = vadd.f32 %v729, %v1029
        %v1031 = vpop.f32.mrf.mxu0
        %1032 = vmatprep.mubr.bf16.mxu0 0
        %1033 = vmatmul.mubr.bf16.gmra.mxu0 %v787
        %v1034 = vpop.f32.mrf.mxu0
        %v1035 = vadd.f32 %v729, %v1034
        %v1036 = vpop.f32.mrf.mxu0
        %v1037 = vpop.f32.mrf.mxu0
        %v1038 = vadd.f32 %v729, %v1037
        %v1039 = vpop.f32.mrf.mxu0
        %1040 = vmatprep.mubr.bf16.mxu0 0
        %1041 = vmatmul.mubr.bf16.gmra.mxu0 %v790
        %v1042 = vpop.f32.mrf.mxu0
        %v1043 = vadd.f32 %v729, %v1042
        %v1044 = vpop.f32.mrf.mxu0
        %v1045 = vpop.f32.mrf.mxu0
        %v1046 = vadd.f32 %v729, %v1045
        %v1047 = vpop.f32.mrf.mxu0
        %1048 = vmatprep.mubr.bf16.mxu0 0
        %1049 = vmatmul.mubr.bf16.gmra.mxu0 %v793
        %v1050 = vpop.f32.mrf.mxu0
        %v1051 = vadd.f32 %v729, %v1050
        %v1052 = vpop.f32.mrf.mxu0
        %v1053 = vpop.f32.mrf.mxu0
        %v1054 = vadd.f32 %v729, %v1053
        %v1055 = vpop.f32.mrf.mxu0
        %1056 = vmatprep.mubr.bf16.mxu0 0
        %1057 = vmatmul.mubr.bf16.gmra.mxu0 %v796
        %v1058 = vpop.f32.mrf.mxu0
        %v1059 = vadd.f32 %v729, %v1058
        %v1060 = vpop.f32.mrf.mxu0
        %v1061 = vpop.f32.mrf.mxu0
        %v1062 = vadd.f32 %v729, %v1061
        %v1063 = vpop.f32.mrf.mxu0
        %1064 = vmatprep.mubr.bf16.mxu0 0
        %1065 = vmatmul.mubr.bf16.gmra.mxu0 %v799
        %v1066 = vpop.f32.mrf.mxu0
        %v1067 = vadd.f32 %v729, %v1066
        %v1068 = vpop.f32.mrf.mxu0
        %v1069 = vpop.f32.mrf.mxu0
        %v1070 = vadd.f32 %v729, %v1069
        %v1071 = vpop.f32.mrf.mxu0
        %1072 = vmatprep.mubr.bf16.mxu0 0
        %1073 = vmatmul.mubr.bf16.gmra.mxu0 %v802
        %v1074 = vpop.f32.mrf.mxu0
        %v1075 = vadd.f32 %v729, %v1074
        %v1076 = vpop.f32.mrf.mxu0
        %v1077 = vpop.f32.mrf.mxu0
        %v1078 = vadd.f32 %v729, %v1077
        %v1079 = vpop.f32.mrf.mxu0
        %1080 = vmatprep.mubr.bf16.mxu0 0
        %1081 = vmatmul.mubr.bf16.gmra.mxu0 %v805
        %v1082 = vpop.f32.mrf.mxu0
        %v1083 = vadd.f32 %v729, %v1082
        %v1084 = vpop.f32.mrf.mxu0
        %v1085 = vpop.f32.mrf.mxu0
        %v1086 = vadd.f32 %v729, %v1085
        %v1087 = vpop.f32.mrf.mxu0
        %1088 = vmatprep.mubr.bf16.mxu0 0
        %1089 = vmatmul.mubr.bf16.gmra.mxu0 %v808
        %v1090 = vpop.f32.mrf.mxu0
        %v1091 = vadd.f32 %v729, %v1090
        %v1092 = vpop.f32.mrf.mxu0
        %v1093 = vpop.f32.mrf.mxu0
        %v1094 = vadd.f32 %v729, %v1093
        %v1095 = vpop.f32.mrf.mxu0
        %1096 = vmatprep.mubr.bf16.mxu0 0
        %1097 = vmatmul.mubr.bf16.gmra.mxu0 %v811
        %v1098 = vpop.f32.mrf.mxu0
        %v1099 = vadd.f32 %v729, %v1098
        %v1100 = vpop.f32.mrf.mxu0
        %v1101 = vpop.f32.mrf.mxu0
        %v1102 = vadd.f32 %v729, %v1101
        %v1103 = vpop.f32.mrf.mxu0
        %1104 = vmatprep.mubr.bf16.mxu0 0
        %1105 = vmatmul.mubr.bf16.gmra.mxu0 %v814
        %v1106 = vpop.f32.mrf.mxu0
        %v1107 = vadd.f32 %v729, %v1106
        %v1108 = vpop.f32.mrf.mxu0
        %v1109 = vpop.f32.mrf.mxu0
        %v1110 = vadd.f32 %v729, %v1109
        %v1111 = vpop.f32.mrf.mxu0
        %1112 = vmatprep.mubr.bf16.mxu0 0
        %1113 = vmatmul.mubr.bf16.gmra.mxu0 %v817
        %v1114 = vpop.f32.mrf.mxu0
        %v1115 = vadd.f32 %v729, %v1114
        %v1116 = vpop.f32.mrf.mxu0
        %v1117 = vpop.f32.mrf.mxu0
        %v1118 = vadd.f32 %v729, %v1117
        %v1119 = vpop.f32.mrf.mxu0
        %1120 = vmatprep.mubr.bf16.mxu0 0
        %1121 = vmatmul.mubr.bf16.gmra.mxu0 %v820
        %v1122 = vpop.f32.mrf.mxu0
        %v1123 = vadd.f32 %v729, %v1122
        %v1124 = vpop.f32.mrf.mxu0
        %v1125 = vpop.f32.mrf.mxu0
        %v1126 = vadd.f32 %v729, %v1125
        %v1127 = vpop.f32.mrf.mxu0
        %1128 = vmatprep.mubr.bf16.mxu0 0
        %1129 = vmatmul.mubr.bf16.gmra.mxu0 %v823
        %v1130 = vpop.f32.mrf.mxu0
        %v1131 = vadd.f32 %v729, %v1130
        %v1132 = vpop.f32.mrf.mxu0
        %v1133 = vpop.f32.mrf.mxu0
        %v1134 = vadd.f32 %v729, %v1133
        %v1135 = vpop.f32.mrf.mxu0
        %1136 = vmatprep.mubr.bf16.mxu0 0
        %1137 = vmatmul.mubr.bf16.gmra.mxu0 %v826
        %v1138 = vpop.f32.mrf.mxu0
        %v1139 = vadd.f32 %v729, %v1138
        %v1140 = vpop.f32.mrf.mxu0
        %v1141 = vpop.f32.mrf.mxu0
        %v1142 = vadd.f32 %v729, %v1141
        %v1143 = vpop.f32.mrf.mxu0
        %1144 = vmatprep.mubr.bf16.mxu0 0
        %1145 = vmatmul.mubr.bf16.gmra.mxu0 %v829
        %v1146 = vpop.f32.mrf.mxu0
        %v1147 = vadd.f32 %v729, %v1146
        %v1148 = vpop.f32.mrf.mxu0
        %v1149 = vpop.f32.mrf.mxu0
        %v1150 = vadd.f32 %v729, %v1149
        %v1151 = vpop.f32.mrf.mxu0
        %1152 = vmatprep.mubr.bf16.mxu0 0
        %1153 = vmatmul.mubr.bf16.gmra.mxu0 %v832
        %v1154 = vpop.f32.mrf.mxu0
        %v1155 = vadd.f32 %v729, %v1154
        %v1156 = vpop.f32.mrf.mxu0
        %v1157 = vpop.f32.mrf.mxu0
        %v1158 = vadd.f32 %v729, %v1157
        %v1159 = vpop.f32.mrf.mxu0
        %1160 = vmatprep.mubr.bf16.mxu0 0
        %1161 = vmatmul.mubr.bf16.gmra.mxu0 %v835
        %v1162 = vpop.f32.mrf.mxu0
        %v1163 = vadd.f32 %v729, %v1162
        %v1164 = vpop.f32.mrf.mxu0
        %v1165 = vpop.f32.mrf.mxu0
        %v1166 = vadd.f32 %v729, %v1165
        %v1167 = vpop.f32.mrf.mxu0
        %1168 = vmatprep.mubr.bf16.mxu0 0
        %1169 = vmatmul.mubr.bf16.gmra.mxu0 %v838
        %v1170 = vpop.f32.mrf.mxu0
        %v1171 = vadd.f32 %v729, %v1170
        %v1172 = vpop.f32.mrf.mxu0
        %v1173 = vpop.f32.mrf.mxu0
        %v1174 = vadd.f32 %v729, %v1173
        %v1175 = vpop.f32.mrf.mxu0
        %1176 = vmatprep.mubr.bf16.mxu0 0
        %1177 = vmatmul.mubr.bf16.gmra.mxu0 %v841
        %v1178 = vpop.f32.mrf.mxu0
        %v1179 = vadd.f32 %v729, %v1178
        %v1180 = vpop.f32.mrf.mxu0
        %v1181 = vpop.f32.mrf.mxu0
        %v1182 = vadd.f32 %v729, %v1181
        %v1183 = vpop.f32.mrf.mxu0
        %1184 = vmatprep.mubr.bf16.mxu0 0
        %1185 = vmatmul.mubr.bf16.gmra.mxu0 %v844
        %v1186 = vpop.f32.mrf.mxu0
        %v1187 = vadd.f32 %v729, %v1186
        %v1188 = vpop.f32.mrf.mxu0
        %v1189 = vpop.f32.mrf.mxu0
        %v1190 = vadd.f32 %v729, %v1189
        %v1191 = vpop.f32.mrf.mxu0
        %1192 = vmatprep.mubr.bf16.mxu0 0
        %1193 = vmatmul.mubr.bf16.gmra.mxu0 %v847
        %v1194 = vpop.f32.mrf.mxu0
        %v1195 = vadd.f32 %v729, %v1194
        %v1196 = vpop.f32.mrf.mxu0
        %v1197 = vpop.f32.mrf.mxu0
        %v1198 = vadd.f32 %v729, %v1197
        %v1199 = vpop.f32.mrf.mxu0
        %1200 = vmatprep.mubr.bf16.mxu0 0
        %1201 = vmatmul.mubr.bf16.gmra.mxu0 %v850
        %v1202 = vpop.f32.mrf.mxu0
        %v1203 = vadd.f32 %v729, %v1202
        %v1204 = vpop.f32.mrf.mxu0
        %v1205 = vpop.f32.mrf.mxu0
        %v1206 = vadd.f32 %v729, %v1205
        %v1207 = vpop.f32.mrf.mxu0
        %1208 = vdwg.mxu0
        %1241 = vrot.lane.b32.xlu0 %v926, 120
        %v1242 = vpop.permute.xlu0 %1241
        %1243 = vrot.lane.b32.xlu0 %v931, 120
        %v1244 = vpop.permute.xlu0 %1243
        %1245 = vrot.lane.b32.xlu0 %v942, 120
        %v1246 = vpop.permute.xlu0 %1245
        %1247 = vrot.lane.b32.xlu0 %v947, 120
        %v1248 = vpop.permute.xlu0 %1247
        %1249 = vrot.lane.b32.xlu0 %v958, 120
        %v1250 = vpop.permute.xlu0 %1249
        %1251 = vrot.lane.b32.xlu0 %v963, 120
        %v1252 = vpop.permute.xlu0 %1251
        %1253 = vrot.lane.b32.xlu0 %v974, 120
        %v1254 = vpop.permute.xlu0 %1253
        %1255 = vrot.lane.b32.xlu0 %v979, 120
        %v1256 = vpop.permute.xlu0 %1255
        %1257 = vrot.lane.b32.xlu0 %v990, 120
        %v1258 = vpop.permute.xlu0 %1257
        %1259 = vrot.lane.b32.xlu0 %v995, 120
        %v1260 = vpop.permute.xlu0 %1259
        %1261 = vrot.lane.b32.xlu0 %v1006, 120
        %v1262 = vpop.permute.xlu0 %1261
        %1263 = vrot.lane.b32.xlu0 %v1011, 120
        %v1264 = vpop.permute.xlu0 %1263
        %1265 = vrot.lane.b32.xlu0 %v1022, 120
        %v1266 = vpop.permute.xlu0 %1265
        %1267 = vrot.lane.b32.xlu0 %v1027, 120
        %v1268 = vpop.permute.xlu0 %1267
        %1269 = vrot.lane.b32.xlu0 %v1038, 120
        %v1270 = vpop.permute.xlu0 %1269
        %1271 = vrot.lane.b32.xlu0 %v1043, 120
        %v1272 = vpop.permute.xlu0 %1271
        %1273 = vrot.lane.b32.xlu0 %v1054, 120
        %v1274 = vpop.permute.xlu0 %1273
        %1275 = vrot.lane.b32.xlu0 %v1059, 120
        %v1276 = vpop.permute.xlu0 %1275
        %1277 = vrot.lane.b32.xlu0 %v1070, 120
        %v1278 = vpop.permute.xlu0 %1277
        %1279 = vrot.lane.b32.xlu0 %v1075, 120
        %v1280 = vpop.permute.xlu0 %1279
        %1281 = vrot.lane.b32.xlu0 %v1086, 120
        %v1282 = vpop.permute.xlu0 %1281
        %1283 = vrot.lane.b32.xlu0 %v1091, 120
        %v1284 = vpop.permute.xlu0 %1283
        %1285 = vrot.lane.b32.xlu0 %v1102, 120
        %v1286 = vpop.permute.xlu0 %1285
        %1287 = vrot.lane.b32.xlu0 %v1107, 120
        %v1288 = vpop.permute.xlu0 %1287
        %1289 = vrot.lane.b32.xlu0 %v1118, 120
        %v1290 = vpop.permute.xlu0 %1289
        %1291 = vrot.lane.b32.xlu0 %v1123, 120
        %v1292 = vpop.permute.xlu0 %1291
        %1293 = vrot.lane.b32.xlu0 %v1134, 120
        %v1294 = vpop.permute.xlu0 %1293
        %1295 = vrot.lane.b32.xlu0 %v1139, 120
        %v1296 = vpop.permute.xlu0 %1295
        %1297 = vrot.lane.b32.xlu0 %v1150, 120
        %v1298 = vpop.permute.xlu0 %1297
        %1299 = vrot.lane.b32.xlu0 %v1155, 120
        %v1300 = vpop.permute.xlu0 %1299
        %1301 = vrot.lane.b32.xlu0 %v1166, 120
        %v1302 = vpop.permute.xlu0 %1301
        %1303 = vrot.lane.b32.xlu0 %v1171, 120
        %v1304 = vpop.permute.xlu0 %1303
        %1337 = vst.msk [vmem:[%s339] sm:$0xff] %vm731, %v1242
        %1338 = vst.msk [vmem:[%s339 + $0x8] sm:$0xff] %vm731, %v1244
        %1339 = vst.msk [vmem:[%s339 + $0x10] sm:$0xff] %vm731, %v1246
        %1340 = vst.msk [vmem:[%s339 + $0x18] sm:$0xff] %vm731, %v1248
        %1341 = vst.msk [vmem:[%s339 + $0x20] sm:$0xff] %vm731, %v1250
        %1342 = vst.msk [vmem:[%s339 + $0x28] sm:$0xff] %vm731, %v1252
        %1343 = vst.msk [vmem:[%s339 + $0x30] sm:$0xff] %vm731, %v1254
        %1344 = vst.msk [vmem:[%s339 + $0x38] sm:$0xff] %vm731, %v1256
        %1345 = vst.msk [vmem:[%s339 + $0x40] sm:$0xff] %vm731, %v1258
        %1346 = vst.msk [vmem:[%s339 + $0x48] sm:$0xff] %vm731, %v1260
        %1347 = vst.msk [vmem:[%s339 + $0x50] sm:$0xff] %vm731, %v1262
        %1348 = vst.msk [vmem:[%s339 + $0x58] sm:$0xff] %vm731, %v1264
        %1349 = vst.msk [vmem:[%s339 + $0x60] sm:$0xff] %vm731, %v1266
        %1350 = vst.msk [vmem:[%s339 + $0x68] sm:$0xff] %vm731, %v1268
        %1351 = vst.msk [vmem:[%s339 + $0x70] sm:$0xff] %vm731, %v1270
        %1352 = vst.msk [vmem:[%s339 + $0x78] sm:$0xff] %vm731, %v1272
        %1353 = vst.msk [vmem:[%s339 + $0x80] sm:$0xff] %vm731, %v1274
        %1354 = vst.msk [vmem:[%s339 + $0x88] sm:$0xff] %vm731, %v1276
        %1355 = vst.msk [vmem:[%s339 + $0x90] sm:$0xff] %vm731, %v1278
        %1356 = vst.msk [vmem:[%s339 + $0x98] sm:$0xff] %vm731, %v1280
        %1357 = vst.msk [vmem:[%s339 + $0xa0] sm:$0xff] %vm731, %v1282
        %1358 = vst.msk [vmem:[%s339 + $0xa8] sm:$0xff] %vm731, %v1284
        %1359 = vst.msk [vmem:[%s339 + $0xb0] sm:$0xff] %vm731, %v1286
        %1360 = vst.msk [vmem:[%s339 + $0xb8] sm:$0xff] %vm731, %v1288
        %1361 = vst.msk [vmem:[%s339 + $0xc0] sm:$0xff] %vm731, %v1290
        %1362 = vst.msk [vmem:[%s339 + $0xc8] sm:$0xff] %vm731, %v1292
        %1363 = vst.msk [vmem:[%s339 + $0xd0] sm:$0xff] %vm731, %v1294
        %1364 = vst.msk [vmem:[%s339 + $0xd8] sm:$0xff] %vm731, %v1296
        %1365 = vst.msk [vmem:[%s339 + $0xe0] sm:$0xff] %vm731, %v1298
        %1366 = vst.msk [vmem:[%s339 + $0xe8] sm:$0xff] %vm731, %v1300
        %1367 = vst.msk [vmem:[%s339 + $0xf0] sm:$0xff] %vm731, %v1302
        %1368 = vst.msk [vmem:[%s339 + $0xf8] sm:$0xff] %vm731, %v1304
        %v1369 = vsel %vm603, 1, 0
        %v1370 = vsel %vm604, 1, 0
        %v1371 = vsel %vm605, 1, 0
        %v1372 = vsel %vm606, 1, 0
        %v1373 = vsel %vm607, 1, 0
        %v1374 = vsel %vm608, 1, 0
        %v1375 = vsel %vm609, 1, 0
        %v1376 = vsel %vm610, 1, 0
        %v1377 = vsel %vm611, 1, 0
        %v1378 = vsel %vm612, 1, 0
        %v1379 = vsel %vm613, 1, 0
        %v1380 = vsel %vm614, 1, 0
        %v1381 = vsel %vm615, 1, 0
        %v1382 = vsel %vm616, 1, 0
        %v1383 = vsel %vm617, 1, 0
        %v1384 = vsel %vm618, 1, 0
        %v1385 = vsel %vm619, 1, 0
        %v1386 = vsel %vm620, 1, 0
        %v1387 = vsel %vm621, 1, 0
        %v1388 = vsel %vm622, 1, 0
        %v1389 = vsel %vm623, 1, 0
        %v1390 = vsel %vm624, 1, 0
        %v1391 = vsel %vm625, 1, 0
        %v1392 = vsel %vm626, 1, 0
        %v1393 = vsel %vm627, 1, 0
        %v1394 = vsel %vm628, 1, 0
        %v1395 = vsel %vm629, 1, 0
        %v1396 = vsel %vm630, 1, 0
        %v1397 = vsel %vm631, 1, 0
        %v1398 = vsel %vm632, 1, 0
        %v1399 = vsel %vm633, 1, 0
        %v1400 = vsel %vm634, 1, 0
        %v1401 = vsel %vm635, 1, 0
        %v1402 = vsel %vm636, 1, 0
        %v1403 = vsel %vm637, 1, 0
        %v1404 = vsel %vm638, 1, 0
        %v1405 = vsel %vm639, 1, 0
        %v1406 = vsel %vm640, 1, 0
        %v1407 = vsel %vm641, 1, 0
        %v1408 = vsel %vm642, 1, 0
        %v1409 = vsel %vm643, 1, 0
        %v1410 = vsel %vm644, 1, 0
        %v1411 = vsel %vm645, 1, 0
        %v1412 = vsel %vm646, 1, 0
        %v1413 = vsel %vm647, 1, 0
        %v1414 = vsel %vm648, 1, 0
        %v1415 = vsel %vm649, 1, 0
        %v1416 = vsel %vm650, 1, 0
        %v1417 = vsel %vm651, 1, 0
        %v1418 = vsel %vm652, 1, 0
        %v1419 = vsel %vm653, 1, 0
        %v1420 = vsel %vm654, 1, 0
        %v1421 = vsel %vm655, 1, 0
        %v1422 = vsel %vm656, 1, 0
        %v1423 = vsel %vm657, 1, 0
        %v1424 = vsel %vm658, 1, 0
        %v1425 = vsel %vm659, 1, 0
        %v1426 = vsel %vm660, 1, 0
        %v1427 = vsel %vm661, 1, 0
        %v1428 = vsel %vm662, 1, 0
        %v1429 = vsel %vm663, 1, 0
        %v1430 = vsel %vm664, 1, 0
        %v1431 = vsel %vm665, 1, 0
        %v1432 = vsel %vm666, 1, 0
        %v1433 = vsel %vm667, 1, 0
        %v1434 = vsel %vm668, 1, 0
        %v1435 = vsel %vm669, 1, 0
        %v1436 = vsel %vm670, 1, 0
        %v1437 = vsel %vm671, 1, 0
        %v1438 = vsel %vm672, 1, 0
        %v1439 = vsel %vm673, 1, 0
        %v1440 = vsel %vm674, 1, 0
        %v1441 = vsel %vm675, 1, 0
        %v1442 = vsel %vm676, 1, 0
        %v1443 = vsel %vm677, 1, 0
        %v1444 = vsel %vm678, 1, 0
        %v1445 = vsel %vm679, 1, 0
        %v1446 = vsel %vm680, 1, 0
        %v1447 = vsel %vm681, 1, 0
        %v1448 = vsel %vm682, 1, 0
        %vm1449 = vcmp.eq.s32.totalorder %v1373, 1
        %vm1450 = vcmp.eq.s32.totalorder %v1374, 1
        %vm1451 = vcmp.eq.s32.totalorder %v1375, 1
        %vm1452 = vcmp.eq.s32.totalorder %v1376, 1
        %vm1453 = vcmp.eq.s32.totalorder %v1377, 1
        %vm1454 = vcmp.eq.s32.totalorder %v1378, 1
        %vm1455 = vcmp.eq.s32.totalorder %v1379, 1
        %vm1456 = vcmp.eq.s32.totalorder %v1380, 1
        %vm1457 = vcmp.eq.s32.totalorder %v1381, 1
        %vm1458 = vcmp.eq.s32.totalorder %v1382, 1
        %vm1459 = vcmp.eq.s32.totalorder %v1383, 1
        %vm1460 = vcmp.eq.s32.totalorder %v1384, 1
        %vm1461 = vcmp.eq.s32.totalorder %v1385, 1
        %vm1462 = vcmp.eq.s32.totalorder %v1386, 1
        %vm1463 = vcmp.eq.s32.totalorder %v1387, 1
        %vm1464 = vcmp.eq.s32.totalorder %v1388, 1
        %vm1465 = vcmp.eq.s32.totalorder %v1389, 1
        %vm1466 = vcmp.eq.s32.totalorder %v1390, 1
        %vm1467 = vcmp.eq.s32.totalorder %v1391, 1
        %vm1468 = vcmp.eq.s32.totalorder %v1392, 1
        %vm1469 = vcmp.eq.s32.totalorder %v1393, 1
        %vm1470 = vcmp.eq.s32.totalorder %v1394, 1
        %vm1471 = vcmp.eq.s32.totalorder %v1395, 1
        %vm1472 = vcmp.eq.s32.totalorder %v1396, 1
        %vm1473 = vcmp.eq.s32.totalorder %v1397, 1
        %vm1474 = vcmp.eq.s32.totalorder %v1398, 1
        %vm1475 = vcmp.eq.s32.totalorder %v1399, 1
        %vm1476 = vcmp.eq.s32.totalorder %v1400, 1
        %vm1477 = vcmp.eq.s32.totalorder %v1401, 1
        %vm1478 = vcmp.eq.s32.totalorder %v1402, 1
        %vm1479 = vcmp.eq.s32.totalorder %v1403, 1
        %vm1480 = vcmp.eq.s32.totalorder %v1404, 1
        %vm1481 = vcmp.eq.s32.totalorder %v1405, 1
        %vm1482 = vcmp.eq.s32.totalorder %v1406, 1
        %vm1483 = vcmp.eq.s32.totalorder %v1407, 1
        %vm1484 = vcmp.eq.s32.totalorder %v1408, 1
        %vm1485 = vcmp.eq.s32.totalorder %v1409, 1
        %vm1486 = vcmp.eq.s32.totalorder %v1410, 1
        %vm1487 = vcmp.eq.s32.totalorder %v1411, 1
        %vm1488 = vcmp.eq.s32.totalorder %v1412, 1
        %vm1489 = vcmp.eq.s32.totalorder %v1413, 1
        %vm1490 = vcmp.eq.s32.totalorder %v1414, 1
        %vm1491 = vcmp.eq.s32.totalorder %v1415, 1
        %vm1492 = vcmp.eq.s32.totalorder %v1416, 1
        %vm1493 = vcmp.eq.s32.totalorder %v1417, 1
        %vm1494 = vcmp.eq.s32.totalorder %v1418, 1
        %vm1495 = vcmp.eq.s32.totalorder %v1419, 1
        %vm1496 = vcmp.eq.s32.totalorder %v1420, 1
        %vm1497 = vcmp.eq.s32.totalorder %v1421, 1
        %vm1498 = vcmp.eq.s32.totalorder %v1422, 1
        %vm1499 = vcmp.eq.s32.totalorder %v1423, 1
        %vm1500 = vcmp.eq.s32.totalorder %v1424, 1
        %vm1501 = vcmp.eq.s32.totalorder %v1425, 1
        %vm1502 = vcmp.eq.s32.totalorder %v1426, 1
        %vm1503 = vcmp.eq.s32.totalorder %v1427, 1
        %vm1504 = vcmp.eq.s32.totalorder %v1428, 1
        %vm1505 = vcmp.eq.s32.totalorder %v1429, 1
        %vm1506 = vcmp.eq.s32.totalorder %v1430, 1
        %vm1507 = vcmp.eq.s32.totalorder %v1431, 1
        %vm1508 = vcmp.eq.s32.totalorder %v1432, 1
        %vm1509 = vcmp.eq.s32.totalorder %v1433, 1
        %vm1510 = vcmp.eq.s32.totalorder %v1434, 1
        %vm1511 = vcmp.eq.s32.totalorder %v1435, 1
        %vm1512 = vcmp.eq.s32.totalorder %v1436, 1
        %vm1513 = vcmp.eq.s32.totalorder %v1437, 1
        %vm1514 = vcmp.eq.s32.totalorder %v1438, 1
        %vm1515 = vcmp.eq.s32.totalorder %v1439, 1
        %vm1516 = vcmp.eq.s32.totalorder %v1440, 1
        %vm1517 = vcmp.eq.s32.totalorder %v1441, 1
        %vm1518 = vcmp.eq.s32.totalorder %v1442, 1
        %vm1519 = vcmp.eq.s32.totalorder %v1443, 1
        %vm1520 = vcmp.eq.s32.totalorder %v1444, 1
        %v1521 = vsel %vm1449, %v354, -inf
        %v1522 = vsel %vm1450, %v355, -inf
        %v1523 = vsel %vm1451, %v356, -inf
        %v1524 = vsel %vm1452, %v357, -inf
        %v1525 = vsel %vm1453, %v358, -inf
        %v1526 = vsel %vm1454, %v359, -inf
        %v1527 = vsel %vm1455, %v360, -inf
        %v1528 = vsel %vm1456, %v361, -inf
        %v1529 = vsel %vm1457, %v362, -inf
        %v1530 = vsel %vm1458, %v363, -inf
        %v1531 = vsel %vm1459, %v364, -inf
        %v1532 = vsel %vm1460, %v365, -inf
        %v1533 = vsel %vm1461, %v366, -inf
        %v1534 = vsel %vm1462, %v367, -inf
        %v1535 = vsel %vm1463, %v368, -inf
        %v1536 = vsel %vm1464, %v369, -inf
        %v1537 = vsel %vm1465, %v370, -inf
        %v1538 = vsel %vm1466, %v371, -inf
        %v1539 = vsel %vm1467, %v372, -inf
        %v1540 = vsel %vm1468, %v373, -inf
        %v1541 = vsel %vm1469, %v374, -inf
        %v1542 = vsel %vm1470, %v375, -inf
        %v1543 = vsel %vm1471, %v376, -inf
        %v1544 = vsel %vm1472, %v377, -inf
        %v1545 = vsel %vm1473, %v378, -inf
        %v1546 = vsel %vm1474, %v379, -inf
        %v1547 = vsel %vm1475, %v380, -inf
        %v1548 = vsel %vm1476, %v381, -inf
        %v1549 = vsel %vm1477, %v382, -inf
        %v1550 = vsel %vm1478, %v383, -inf
        %v1551 = vsel %vm1479, %v384, -inf
        %v1552 = vsel %vm1480, %v385, -inf
        %v1553 = vsel %vm1481, %v386, -inf
        %v1554 = vsel %vm1482, %v387, -inf
        %v1555 = vsel %vm1483, %v388, -inf
        %v1556 = vsel %vm1484, %v389, -inf
        %v1557 = vsel %vm1485, %v390, -inf
        %v1558 = vsel %vm1486, %v391, -inf
        %v1559 = vsel %vm1487, %v392, -inf
        %v1560 = vsel %vm1488, %v393, -inf
        %v1561 = vsel %vm1489, %v394, -inf
        %v1562 = vsel %vm1490, %v395, -inf
        %v1563 = vsel %vm1491, %v396, -inf
        %v1564 = vsel %vm1492, %v397, -inf
        %v1565 = vsel %vm1493, %v398, -inf
        %v1566 = vsel %vm1494, %v399, -inf
        %v1567 = vsel %vm1495, %v400, -inf
        %v1568 = vsel %vm1496, %v401, -inf
        %v1569 = vsel %vm1497, %v402, -inf
        %v1570 = vsel %vm1498, %v403, -inf
        %v1571 = vsel %vm1499, %v404, -inf
        %v1572 = vsel %vm1500, %v405, -inf
        %v1573 = vsel %vm1501, %v406, -inf
        %v1574 = vsel %vm1502, %v407, -inf
        %v1575 = vsel %vm1503, %v408, -inf
        %v1576 = vsel %vm1504, %v409, -inf
        %v1577 = vsel %vm1505, %v410, -inf
        %v1578 = vsel %vm1506, %v411, -inf
        %v1579 = vsel %vm1507, %v412, -inf
        %v1580 = vsel %vm1508, %v413, -inf
        %v1581 = vsel %vm1509, %v414, -inf
        %v1582 = vsel %vm1510, %v415, -inf
        %v1583 = vsel %vm1511, %v416, -inf
        %v1584 = vsel %vm1512, %v417, -inf
        %v1585 = vsel %vm1513, %v418, -inf
        %v1586 = vsel %vm1514, %v419, -inf
        %v1587 = vsel %vm1515, %v420, -inf
        %v1588 = vsel %vm1516, %v421, -inf
        %v1589 = vsel %vm1517, %v422, -inf
        %v1590 = vsel %vm1518, %v423, -inf
        %v1591 = vsel %vm1519, %v424, -inf
        %v1592 = vsel %vm1520, %v425, -inf
        %vm1629 = vcmask 1046528
        %v1630 = vrot.slane %v1522, 1
        %v1631 = vrot.slane %v1523, 1
        %v1632 = vsel %vm1629, %v1630, %v1631
        %v1633 = vrot.slane %v1526, 1
        %v1634 = vrot.slane %v1527, 1
        %v1635 = vsel %vm1629, %v1633, %v1634
        %v1636 = vrot.slane %v1530, 1
        %v1637 = vrot.slane %v1531, 1
        %v1638 = vsel %vm1629, %v1636, %v1637
        %v1639 = vrot.slane %v1534, 1
        %v1640 = vrot.slane %v1535, 1
        %v1641 = vsel %vm1629, %v1639, %v1640
        %v1642 = vrot.slane %v1538, 1
        %v1643 = vrot.slane %v1539, 1
        %v1644 = vsel %vm1629, %v1642, %v1643
        %v1645 = vrot.slane %v1542, 1
        %v1646 = vrot.slane %v1543, 1
        %v1647 = vsel %vm1629, %v1645, %v1646
        %v1648 = vrot.slane %v1546, 1
        %v1649 = vrot.slane %v1547, 1
        %v1650 = vsel %vm1629, %v1648, %v1649
        %v1651 = vrot.slane %v1550, 1
        %v1652 = vrot.slane %v1551, 1
        %v1653 = vsel %vm1629, %v1651, %v1652
        %v1654 = vrot.slane %v1554, 1
        %v1655 = vrot.slane %v1555, 1
        %v1656 = vsel %vm1629, %v1654, %v1655
        %v1657 = vrot.slane %v1558, 1
        %v1658 = vrot.slane %v1559, 1
        %v1659 = vsel %vm1629, %v1657, %v1658
        %v1660 = vrot.slane %v1562, 1
        %v1661 = vrot.slane %v1563, 1
        %v1662 = vsel %vm1629, %v1660, %v1661
        %v1663 = vrot.slane %v1566, 1
        %v1664 = vrot.slane %v1567, 1
        %v1665 = vsel %vm1629, %v1663, %v1664
        %v1666 = vrot.slane %v1570, 1
        %v1667 = vrot.slane %v1571, 1
        %v1668 = vsel %vm1629, %v1666, %v1667
        %v1669 = vrot.slane %v1574, 1
        %v1670 = vrot.slane %v1575, 1
        %v1671 = vsel %vm1629, %v1669, %v1670
        %v1672 = vrot.slane %v1578, 1
        %v1673 = vrot.slane %v1579, 1
        %v1674 = vsel %vm1629, %v1672, %v1673
        %v1675 = vrot.slane %v1582, 1
        %v1676 = vrot.slane %v1583, 1
        %v1677 = vsel %vm1629, %v1675, %v1676
        %v1678 = vrot.slane %v1586, 1
        %v1679 = vrot.slane %v1587, 1
        %v1680 = vsel %vm1629, %v1678, %v1679
        %v1681 = vrot.slane %v1590, 1
        %v1682 = vrot.slane %v1591, 1
        %v1683 = vsel %vm1629, %v1681, %v1682
        %v1738 = vmax.f32 %v1521, %v1630
        %v1739 = vmax.f32 %v1522, %v1632
        %v1740 = vmax.f32 %v1523, %v1631
        %v1741 = vmax.f32 %v1525, %v1633
        %v1742 = vmax.f32 %v1526, %v1635
        %v1743 = vmax.f32 %v1527, %v1634
        %v1744 = vmax.f32 %v1529, %v1636
        %v1745 = vmax.f32 %v1530, %v1638
        %v1746 = vmax.f32 %v1531, %v1637
        %v1747 = vmax.f32 %v1533, %v1639
        %v1748 = vmax.f32 %v1534, %v1641
        %v1749 = vmax.f32 %v1535, %v1640
        %v1750 = vmax.f32 %v1537, %v1642
        %v1751 = vmax.f32 %v1538, %v1644
        %v1752 = vmax.f32 %v1539, %v1643
        %v1753 = vmax.f32 %v1541, %v1645
        %v1754 = vmax.f32 %v1542, %v1647
        %v1755 = vmax.f32 %v1543, %v1646
        %v1756 = vmax.f32 %v1545, %v1648
        %v1757 = vmax.f32 %v1546, %v1650
        %v1758 = vmax.f32 %v1547, %v1649
        %v1759 = vmax.f32 %v1549, %v1651
        %v1760 = vmax.f32 %v1550, %v1653
        %v1761 = vmax.f32 %v1551, %v1652
        %v1762 = vmax.f32 %v1553, %v1654
        %v1763 = vmax.f32 %v1554, %v1656
        %v1764 = vmax.f32 %v1555, %v1655
        %v1765 = vmax.f32 %v1557, %v1657
        %v1766 = vmax.f32 %v1558, %v1659
        %v1767 = vmax.f32 %v1559, %v1658
        %v1768 = vmax.f32 %v1561, %v1660
        %v1769 = vmax.f32 %v1562, %v1662
        %v1770 = vmax.f32 %v1563, %v1661
        %v1771 = vmax.f32 %v1565, %v1663
        %v1772 = vmax.f32 %v1566, %v1665
        %v1773 = vmax.f32 %v1567, %v1664
        %v1774 = vmax.f32 %v1569, %v1666
        %v1775 = vmax.f32 %v1570, %v1668
        %v1776 = vmax.f32 %v1571, %v1667
        %v1777 = vmax.f32 %v1573, %v1669
        %v1778 = vmax.f32 %v1574, %v1671
        %v1779 = vmax.f32 %v1575, %v1670
        %v1780 = vmax.f32 %v1577, %v1672
        %v1781 = vmax.f32 %v1578, %v1674
        %v1782 = vmax.f32 %v1579, %v1673
        %v1783 = vmax.f32 %v1581, %v1675
        %v1784 = vmax.f32 %v1582, %v1677
        %v1785 = vmax.f32 %v1583, %v1676
        %v1786 = vmax.f32 %v1585, %v1678
        %v1787 = vmax.f32 %v1586, %v1680
        %v1788 = vmax.f32 %v1587, %v1679
        %v1789 = vmax.f32 %v1589, %v1681
        %v1790 = vmax.f32 %v1590, %v1683
        %v1791 = vmax.f32 %v1591, %v1682
        %vm1810 = vcmask 1045504
        %v1811 = vrot.slane %v1522, 2
        %v1812 = vrot.slane %v1523, 2
        %v1813 = vsel %vm1810, %v1811, %v1812
        %v1814 = vrot.slane %v1524, 2
        %v1815 = vsel %vm1810, %v1812, %v1814
        %v1816 = vrot.slane %v1526, 2
        %v1817 = vrot.slane %v1527, 2
        %v1818 = vsel %vm1810, %v1816, %v1817
        %v1819 = vrot.slane %v1528, 2
        %v1820 = vsel %vm1810, %v1817, %v1819
        %v1821 = vrot.slane %v1530, 2
        %v1822 = vrot.slane %v1531, 2
        %v1823 = vsel %vm1810, %v1821, %v1822
        %v1824 = vrot.slane %v1532, 2
        %v1825 = vsel %vm1810, %v1822, %v1824
        %v1826 = vrot.slane %v1534, 2
        %v1827 = vrot.slane %v1535, 2
        %v1828 = vsel %vm1810, %v1826, %v1827
        %v1829 = vrot.slane %v1536, 2
        %v1830 = vsel %vm1810, %v1827, %v1829
        %v1831 = vrot.slane %v1538, 2
        %v1832 = vrot.slane %v1539, 2
        %v1833 = vsel %vm1810, %v1831, %v1832
        %v1834 = vrot.slane %v1540, 2
        %v1835 = vsel %vm1810, %v1832, %v1834
        %v1836 = vrot.slane %v1542, 2
        %v1837 = vrot.slane %v1543, 2
        %v1838 = vsel %vm1810, %v1836, %v1837
        %v1839 = vrot.slane %v1544, 2
        %v1840 = vsel %vm1810, %v1837, %v1839
        %v1841 = vrot.slane %v1546, 2
        %v1842 = vrot.slane %v1547, 2
        %v1843 = vsel %vm1810, %v1841, %v1842
        %v1844 = vrot.slane %v1548, 2
        %v1845 = vsel %vm1810, %v1842, %v1844
        %v1846 = vrot.slane %v1550, 2
        %v1847 = vrot.slane %v1551, 2
        %v1848 = vsel %vm1810, %v1846, %v1847
        %v1849 = vrot.slane %v1552, 2
        %v1850 = vsel %vm1810, %v1847, %v1849
        %v1851 = vrot.slane %v1554, 2
        %v1852 = vrot.slane %v1555, 2
        %v1853 = vsel %vm1810, %v1851, %v1852
        %v1854 = vrot.slane %v1556, 2
        %v1855 = vsel %vm1810, %v1852, %v1854
        %v1856 = vrot.slane %v1558, 2
        %v1857 = vrot.slane %v1559, 2
        %v1858 = vsel %vm1810, %v1856, %v1857
        %v1859 = vrot.slane %v1560, 2
        %v1860 = vsel %vm1810, %v1857, %v1859
        %v1861 = vrot.slane %v1562, 2
        %v1862 = vrot.slane %v1563, 2
        %v1863 = vsel %vm1810, %v1861, %v1862
        %v1864 = vrot.slane %v1564, 2
        %v1865 = vsel %vm1810, %v1862, %v1864
        %v1866 = vrot.slane %v1566, 2
        %v1867 = vrot.slane %v1567, 2
        %v1868 = vsel %vm1810, %v1866, %v1867
        %v1869 = vrot.slane %v1568, 2
        %v1870 = vsel %vm1810, %v1867, %v1869
        %v1871 = vrot.slane %v1570, 2
        %v1872 = vrot.slane %v1571, 2
        %v1873 = vsel %vm1810, %v1871, %v1872
        %v1874 = vrot.slane %v1572, 2
        %v1875 = vsel %vm1810, %v1872, %v1874
        %v1876 = vrot.slane %v1574, 2
        %v1877 = vrot.slane %v1575, 2
        %v1878 = vsel %vm1810, %v1876, %v1877
        %v1879 = vrot.slane %v1576, 2
        %v1880 = vsel %vm1810, %v1877, %v1879
        %v1881 = vrot.slane %v1578, 2
        %v1882 = vrot.slane %v1579, 2
        %v1883 = vsel %vm1810, %v1881, %v1882
        %v1884 = vrot.slane %v1580, 2
        %v1885 = vsel %vm1810, %v1882, %v1884
        %v1886 = vrot.slane %v1582, 2
        %v1887 = vrot.slane %v1583, 2
        %v1888 = vsel %vm1810, %v1886, %v1887
        %v1889 = vrot.slane %v1584, 2
        %v1890 = vsel %vm1810, %v1887, %v1889
        %v1891 = vrot.slane %v1586, 2
        %v1892 = vrot.slane %v1587, 2
        %v1893 = vsel %vm1810, %v1891, %v1892
        %v1894 = vrot.slane %v1588, 2
        %v1895 = vsel %vm1810, %v1892, %v1894
        %v1896 = vrot.slane %v1590, 2
        %v1897 = vrot.slane %v1591, 2
        %v1898 = vsel %vm1810, %v1896, %v1897
        %v1899 = vrot.slane %v1592, 2
        %v1900 = vsel %vm1810, %v1897, %v1899
        %v1955 = vmax.f32 %v1738, %v1811
        %v1956 = vmax.f32 %v1739, %v1813
        %v1957 = vmax.f32 %v1740, %v1815
        %v1958 = vmax.f32 %v1741, %v1816
        %v1959 = vmax.f32 %v1742, %v1818
        %v1960 = vmax.f32 %v1743, %v1820
        %v1961 = vmax.f32 %v1744, %v1821
        %v1962 = vmax.f32 %v1745, %v1823
        %v1963 = vmax.f32 %v1746, %v1825
        %v1964 = vmax.f32 %v1747, %v1826
        %v1965 = vmax.f32 %v1748, %v1828
        %v1966 = vmax.f32 %v1749, %v1830
        %v1967 = vmax.f32 %v1750, %v1831
        %v1968 = vmax.f32 %v1751, %v1833
        %v1969 = vmax.f32 %v1752, %v1835
        %v1970 = vmax.f32 %v1753, %v1836
        %v1971 = vmax.f32 %v1754, %v1838
        %v1972 = vmax.f32 %v1755, %v1840
        %v1973 = vmax.f32 %v1756, %v1841
        %v1974 = vmax.f32 %v1757, %v1843
        %v1975 = vmax.f32 %v1758, %v1845
        %v1976 = vmax.f32 %v1759, %v1846
        %v1977 = vmax.f32 %v1760, %v1848
        %v1978 = vmax.f32 %v1761, %v1850
        %v1979 = vmax.f32 %v1762, %v1851
        %v1980 = vmax.f32 %v1763, %v1853
        %v1981 = vmax.f32 %v1764, %v1855
        %v1982 = vmax.f32 %v1765, %v1856
        %v1983 = vmax.f32 %v1766, %v1858
        %v1984 = vmax.f32 %v1767, %v1860
        %v1985 = vmax.f32 %v1768, %v1861
        %v1986 = vmax.f32 %v1769, %v1863
        %v1987 = vmax.f32 %v1770, %v1865
        %v1988 = vmax.f32 %v1771, %v1866
        %v1989 = vmax.f32 %v1772, %v1868
        %v1990 = vmax.f32 %v1773, %v1870
        %v1991 = vmax.f32 %v1774, %v1871
        %v1992 = vmax.f32 %v1775, %v1873
        %v1993 = vmax.f32 %v1776, %v1875
        %v1994 = vmax.f32 %v1777, %v1876
        %v1995 = vmax.f32 %v1778, %v1878
        %v1996 = vmax.f32 %v1779, %v1880
        %v1997 = vmax.f32 %v1780, %v1881
        %v1998 = vmax.f32 %v1781, %v1883
        %v1999 = vmax.f32 %v1782, %v1885
        %v2000 = vmax.f32 %v1783, %v1886
        %v2001 = vmax.f32 %v1784, %v1888
        %v2002 = vmax.f32 %v1785, %v1890
        %v2003 = vmax.f32 %v1786, %v1891
        %v2004 = vmax.f32 %v1787, %v1893
        %v2005 = vmax.f32 %v1788, %v1895
        %v2006 = vmax.f32 %v1789, %v1896
        %v2007 = vmax.f32 %v1790, %v1898
        %v2008 = vmax.f32 %v1791, %v1900
        %v2009 = vmax.f32 %v1955, %v1958
        %v2010 = vmax.f32 %v1956, %v1959
        %v2011 = vmax.f32 %v1957, %v1960
        %v2012 = vmax.f32 %v1958, %v1961
        %v2013 = vmax.f32 %v1959, %v1962
        %v2014 = vmax.f32 %v1960, %v1963
        %v2015 = vmax.f32 %v1961, %v1964
        %v2016 = vmax.f32 %v1962, %v1965
        %v2017 = vmax.f32 %v1963, %v1966
        %v2018 = vmax.f32 %v1964, %v1967
        %v2019 = vmax.f32 %v1965, %v1968
        %v2020 = vmax.f32 %v1966, %v1969
        %v2021 = vmax.f32 %v1967, %v1970
        %v2022 = vmax.f32 %v1968, %v1971
        %v2023 = vmax.f32 %v1969, %v1972
        %v2024 = vmax.f32 %v1970, %v1973
        %v2025 = vmax.f32 %v1971, %v1974
        %v2026 = vmax.f32 %v1972, %v1975
        %v2027 = vmax.f32 %v1973, %v1976
        %v2028 = vmax.f32 %v1974, %v1977
        %v2029 = vmax.f32 %v1975, %v1978
        %v2030 = vmax.f32 %v1976, %v1979
        %v2031 = vmax.f32 %v1977, %v1980
        %v2032 = vmax.f32 %v1978, %v1981
        %v2033 = vmax.f32 %v1979, %v1982
        %v2034 = vmax.f32 %v1980, %v1983
        %v2035 = vmax.f32 %v1981, %v1984
        %v2036 = vmax.f32 %v1982, %v1985
        %v2037 = vmax.f32 %v1983, %v1986
        %v2038 = vmax.f32 %v1984, %v1987
        %v2039 = vmax.f32 %v1985, %v1988
        %v2040 = vmax.f32 %v1986, %v1989
        %v2041 = vmax.f32 %v1987, %v1990
        %v2042 = vmax.f32 %v1988, %v1991
        %v2043 = vmax.f32 %v1989, %v1992
        %v2044 = vmax.f32 %v1990, %v1993
        %v2045 = vmax.f32 %v1991, %v1994
        %v2046 = vmax.f32 %v1992, %v1995
        %v2047 = vmax.f32 %v1993, %v1996
        %v2048 = vmax.f32 %v1994, %v1997
        %v2049 = vmax.f32 %v1995, %v1998
        %v2050 = vmax.f32 %v1996, %v1999
        %v2051 = vmax.f32 %v1997, %v2000
        %v2052 = vmax.f32 %v1998, %v2001
        %v2053 = vmax.f32 %v1999, %v2002
        %v2054 = vmax.f32 %v2000, %v2003
        %v2055 = vmax.f32 %v2001, %v2004
        %v2056 = vmax.f32 %v2002, %v2005
        %v2057 = vmax.f32 %v2009, %v1961
        %v2058 = vmax.f32 %v2010, %v1962
        %v2059 = vmax.f32 %v2011, %v1963
        %v2060 = vmax.f32 %v2012, %v1964
        %v2061 = vmax.f32 %v2013, %v1965
        %v2062 = vmax.f32 %v2014, %v1966
        %v2063 = vmax.f32 %v2015, %v1967
        %v2064 = vmax.f32 %v2016, %v1968
        %v2065 = vmax.f32 %v2017, %v1969
        %v2066 = vmax.f32 %v2018, %v1970
        %v2067 = vmax.f32 %v2019, %v1971
        %v2068 = vmax.f32 %v2020, %v1972
        %v2069 = vmax.f32 %v2021, %v1973
        %v2070 = vmax.f32 %v2022, %v1974
        %v2071 = vmax.f32 %v2023, %v1975
        %v2072 = vmax.f32 %v2024, %v1976
        %v2073 = vmax.f32 %v2025, %v1977
        %v2074 = vmax.f32 %v2026, %v1978
        %v2075 = vmax.f32 %v2027, %v1979
        %v2076 = vmax.f32 %v2028, %v1980
        %v2077 = vmax.f32 %v2029, %v1981
        %v2078 = vmax.f32 %v2030, %v1982
        %v2079 = vmax.f32 %v2031, %v1983
        %v2080 = vmax.f32 %v2032, %v1984
        %v2081 = vmax.f32 %v2033, %v1985
        %v2082 = vmax.f32 %v2034, %v1986
        %v2083 = vmax.f32 %v2035, %v1987
        %v2084 = vmax.f32 %v2036, %v1988
        %v2085 = vmax.f32 %v2037, %v1989
        %v2086 = vmax.f32 %v2038, %v1990
        %v2087 = vmax.f32 %v2039, %v1991
        %v2088 = vmax.f32 %v2040, %v1992
        %v2089 = vmax.f32 %v2041, %v1993
        %v2090 = vmax.f32 %v2042, %v1994
        %v2091 = vmax.f32 %v2043, %v1995
        %v2092 = vmax.f32 %v2044, %v1996
        %v2093 = vmax.f32 %v2045, %v1997
        %v2094 = vmax.f32 %v2046, %v1998
        %v2095 = vmax.f32 %v2047, %v1999
        %v2096 = vmax.f32 %v2048, %v2000
        %v2097 = vmax.f32 %v2049, %v2001
        %v2098 = vmax.f32 %v2050, %v2002
        %v2099 = vmax.f32 %v2051, %v2003
        %v2100 = vmax.f32 %v2052, %v2004
        %v2101 = vmax.f32 %v2053, %v2005
        %v2102 = vmax.f32 %v2054, %v2006
        %v2103 = vmax.f32 %v2055, %v2007
        %v2104 = vmax.f32 %v2056, %v2008
        %vm2153 = vcmask 1040384
        %v2154 = vrot.slane %v2057, 7
        %v2155 = vrot.slane %v2058, 7
        %v2156 = vsel %vm2153, %v2154, %v2155
        %v2157 = vrot.slane %v2059, 7
        %v2158 = vsel %vm2153, %v2155, %v2157
        %v2159 = vrot.slane %v2060, 7
        %v2160 = vrot.slane %v2061, 7
        %v2161 = vsel %vm2153, %v2159, %v2160
        %v2162 = vrot.slane %v2062, 7
        %v2163 = vsel %vm2153, %v2160, %v2162
        %v2164 = vrot.slane %v2063, 7
        %v2165 = vrot.slane %v2064, 7
        %v2166 = vsel %vm2153, %v2164, %v2165
        %v2167 = vrot.slane %v2065, 7
        %v2168 = vsel %vm2153, %v2165, %v2167
        %v2169 = vrot.slane %v2066, 7
        %v2170 = vrot.slane %v2067, 7
        %v2171 = vsel %vm2153, %v2169, %v2170
        %v2172 = vrot.slane %v2068, 7
        %v2173 = vsel %vm2153, %v2170, %v2172
        %v2174 = vrot.slane %v2069, 7
        %v2175 = vrot.slane %v2070, 7
        %v2176 = vsel %vm2153, %v2174, %v2175
        %v2177 = vrot.slane %v2071, 7
        %v2178 = vsel %vm2153, %v2175, %v2177
        %v2179 = vrot.slane %v2072, 7
        %v2180 = vrot.slane %v2073, 7
        %v2181 = vsel %vm2153, %v2179, %v2180
        %v2182 = vrot.slane %v2074, 7
        %v2183 = vsel %vm2153, %v2180, %v2182
        %v2184 = vrot.slane %v2075, 7
        %v2185 = vrot.slane %v2076, 7
        %v2186 = vsel %vm2153, %v2184, %v2185
        %v2187 = vrot.slane %v2077, 7
        %v2188 = vsel %vm2153, %v2185, %v2187
        %v2189 = vrot.slane %v2078, 7
        %v2190 = vrot.slane %v2079, 7
        %v2191 = vsel %vm2153, %v2189, %v2190
        %v2192 = vrot.slane %v2080, 7
        %v2193 = vsel %vm2153, %v2190, %v2192
        %v2194 = vrot.slane %v2081, 7
        %v2195 = vrot.slane %v2082, 7
        %v2196 = vsel %vm2153, %v2194, %v2195
        %v2197 = vrot.slane %v2083, 7
        %v2198 = vsel %vm2153, %v2195, %v2197
        %v2199 = vrot.slane %v2084, 7
        %v2200 = vrot.slane %v2085, 7
        %v2201 = vsel %vm2153, %v2199, %v2200
        %v2202 = vrot.slane %v2086, 7
        %v2203 = vsel %vm2153, %v2200, %v2202
        %v2204 = vrot.slane %v2087, 7
        %v2205 = vrot.slane %v2088, 7
        %v2206 = vsel %vm2153, %v2204, %v2205
        %v2207 = vrot.slane %v2089, 7
        %v2208 = vsel %vm2153, %v2205, %v2207
        %v2209 = vrot.slane %v2090, 7
        %v2210 = vrot.slane %v2091, 7
        %v2211 = vsel %vm2153, %v2209, %v2210
        %v2212 = vrot.slane %v2092, 7
        %v2213 = vsel %vm2153, %v2210, %v2212
        %v2214 = vrot.slane %v2093, 7
        %v2215 = vrot.slane %v2094, 7
        %v2216 = vsel %vm2153, %v2214, %v2215
        %v2217 = vrot.slane %v2095, 7
        %v2218 = vsel %vm2153, %v2215, %v2217
        %v2219 = vrot.slane %v2096, 7
        %v2220 = vrot.slane %v2097, 7
        %v2221 = vsel %vm2153, %v2219, %v2220
        %v2222 = vrot.slane %v2098, 7
        %v2223 = vsel %vm2153, %v2220, %v2222
        %v2224 = vrot.slane %v2099, 7
        %v2225 = vrot.slane %v2100, 7
        %v2226 = vsel %vm2153, %v2224, %v2225
        %v2227 = vrot.slane %v2101, 7
        %v2228 = vsel %vm2153, %v2225, %v2227
        %v2229 = vrot.slane %v2102, 7
        %v2230 = vrot.slane %v2103, 7
        %v2231 = vsel %vm2153, %v2229, %v2230
        %v2232 = vrot.slane %v2104, 7
        %v2233 = vsel %vm2153, %v2230, %v2232
        %v2266 = vpack.c.bf16 %v2158, %v2156
        %v2267 = vpack.c.bf16 %v2163, %v2161
        %v2268 = vpack.c.bf16 %v2168, %v2166
        %v2269 = vpack.c.bf16 %v2173, %v2171
        %v2270 = vpack.c.bf16 %v2178, %v2176
        %v2271 = vpack.c.bf16 %v2183, %v2181
        %v2272 = vpack.c.bf16 %v2188, %v2186
        %v2273 = vpack.c.bf16 %v2193, %v2191
        %v2274 = vpack.c.bf16 %v2198, %v2196
        %v2275 = vpack.c.bf16 %v2203, %v2201
        %v2276 = vpack.c.bf16 %v2208, %v2206
        %v2277 = vpack.c.bf16 %v2213, %v2211
        %v2278 = vpack.c.bf16 %v2218, %v2216
        %v2279 = vpack.c.bf16 %v2223, %v2221
        %v2280 = vpack.c.bf16 %v2228, %v2226
        %v2281 = vpack.c.bf16 %v2233, %v2231
        %v2282 = vld [vmem:[%s7] sm:$0x3]
        %v2283 = vld [vmem:[%s8] sm:$0x1]
        %v2285 = vlaneseq
        %v2286 = vshrl.u32 %v2285, 7
        %v2287 = vsub.s32 0, %v2286
        %v2288 = vrot.slane %v2283, %v2287
        %v2291 = vsel %vm731, %v2266, 0
        %v2294 = vsel %vm731, %v2267, 0
        %v2297 = vsel %vm731, %v2268, 0
        %v2300 = vsel %vm731, %v2269, 0
        %v2303 = vsel %vm731, %v2270, 0
        %v2306 = vsel %vm731, %v2271, 0
        %v2309 = vsel %vm731, %v2272, 0
        %v2312 = vsel %vm731, %v2273, 0
        %v2315 = vsel %vm731, %v2274, 0
        %v2318 = vsel %vm731, %v2275, 0
        %v2321 = vsel %vm731, %v2276, 0
        %v2324 = vsel %vm731, %v2277, 0
        %v2327 = vsel %vm731, %v2278, 0
        %v2330 = vsel %vm731, %v2279, 0
        %v2333 = vsel %vm731, %v2280, 0
        %v2336 = vsel %vm731, %v2281, 0
        %v2339 = vsel %vm852, %v2282, 0
        %2341 = vmatprep.subr.bf16.mxu0 0
        %2342 = vmatpush1.bf16.msra.mxu0 0
        %2343 = vmatprep.subr.bf16.mxu0 0
        %2344 = vmatpush1.bf16.msra.mxu0 0
        %2345 = vmatprep.subr.bf16.mxu0 0
        %2346 = vmatpush1.bf16.msra.mxu0 0
        %2347 = vmatprep.subr.bf16.mxu0 0
        %2348 = vmatpush1.bf16.msra.mxu0 0
        %2349 = vmatprep.subr.bf16.mxu0 0
        %2350 = vmatpush1.bf16.msra.mxu0 0
        %2351 = vmatprep.subr.bf16.mxu0 0
        %2352 = vmatpush1.bf16.msra.mxu0 0
        %2353 = vmatprep.subr.bf16.mxu0 0
        %2354 = vmatpush1.bf16.msra.mxu0 0
        %2355 = vmatprep.subr.bf16.mxu0 0
        %2356 = vmatpush1.bf16.msra.mxu0 %v2339
        %2357 = vmatprep.subr.bf16.mxu0 0
        %2358 = vmatpush2.bf16.msra.mxu0 0
        %2359 = vmatprep.subr.bf16.mxu0 0
        %2360 = vmatpush2.bf16.msra.mxu0 0
        %2361 = vmatprep.subr.bf16.mxu0 0
        %2362 = vmatpush2.bf16.msra.mxu0 0
        %2363 = vmatprep.subr.bf16.mxu0 0
        %2364 = vmatpush2.bf16.msra.mxu0 0
        %2365 = vmatprep.subr.bf16.mxu0 0
        %2366 = vmatpush2.bf16.msra.mxu0 0
        %2367 = vmatprep.subr.bf16.mxu0 0
        %2368 = vmatpush2.bf16.msra.mxu0 0
        %2369 = vmatprep.subr.bf16.mxu0 0
        %2370 = vmatpush2.bf16.msra.mxu0 0
        %2371 = vmatprep.subr.bf16.mxu0 0
        %2372 = vmatpush2.bf16.msra.mxu0 0
        %2373 = vmatprep.mubr.bf16.mxu0 0
        %2374 = vmatmul.mubr.bf16.gmra.mxu0 %v2291
        %v2375 = vpop.f32.mrf.mxu0
        %v2376 = vadd.f32 %v2288, %v2375
        %v2377 = vpop.f32.mrf.mxu0
        %v2378 = vpop.f32.mrf.mxu0
        %v2379 = vadd.f32 %v2288, %v2378
        %v2380 = vpop.f32.mrf.mxu0
        %2381 = vmatprep.mubr.bf16.mxu0 0
        %2382 = vmatmul.mubr.bf16.gmra.mxu0 %v2294
        %v2383 = vpop.f32.mrf.mxu0
        %v2384 = vadd.f32 %v2288, %v2383
        %v2385 = vpop.f32.mrf.mxu0
        %v2386 = vpop.f32.mrf.mxu0
        %v2387 = vadd.f32 %v2288, %v2386
        %v2388 = vpop.f32.mrf.mxu0
        %2389 = vmatprep.mubr.bf16.mxu0 0
        %2390 = vmatmul.mubr.bf16.gmra.mxu0 %v2297
        %v2391 = vpop.f32.mrf.mxu0
        %v2392 = vadd.f32 %v2288, %v2391
        %v2393 = vpop.f32.mrf.mxu0
        %v2394 = vpop.f32.mrf.mxu0
        %v2395 = vadd.f32 %v2288, %v2394
        %v2396 = vpop.f32.mrf.mxu0
        %2397 = vmatprep.mubr.bf16.mxu0 0
        %2398 = vmatmul.mubr.bf16.gmra.mxu0 %v2300
        %v2399 = vpop.f32.mrf.mxu0
        %v2400 = vadd.f32 %v2288, %v2399
        %v2401 = vpop.f32.mrf.mxu0
        %v2402 = vpop.f32.mrf.mxu0
        %v2403 = vadd.f32 %v2288, %v2402
        %v2404 = vpop.f32.mrf.mxu0
        %2405 = vmatprep.mubr.bf16.mxu0 0
        %2406 = vmatmul.mubr.bf16.gmra.mxu0 %v2303
        %v2407 = vpop.f32.mrf.mxu0
        %v2408 = vadd.f32 %v2288, %v2407
        %v2409 = vpop.f32.mrf.mxu0
        %v2410 = vpop.f32.mrf.mxu0
        %v2411 = vadd.f32 %v2288, %v2410
        %v2412 = vpop.f32.mrf.mxu0
        %2413 = vmatprep.mubr.bf16.mxu0 0
        %2414 = vmatmul.mubr.bf16.gmra.mxu0 %v2306
        %v2415 = vpop.f32.mrf.mxu0
        %v2416 = vadd.f32 %v2288, %v2415
        %v2417 = vpop.f32.mrf.mxu0
        %v2418 = vpop.f32.mrf.mxu0
        %v2419 = vadd.f32 %v2288, %v2418
        %v2420 = vpop.f32.mrf.mxu0
        %2421 = vmatprep.mubr.bf16.mxu0 0
        %2422 = vmatmul.mubr.bf16.gmra.mxu0 %v2309
        %v2423 = vpop.f32.mrf.mxu0
        %v2424 = vadd.f32 %v2288, %v2423
        %v2425 = vpop.f32.mrf.mxu0
        %v2426 = vpop.f32.mrf.mxu0
        %v2427 = vadd.f32 %v2288, %v2426
        %v2428 = vpop.f32.mrf.mxu0
        %2429 = vmatprep.mubr.bf16.mxu0 0
        %2430 = vmatmul.mubr.bf16.gmra.mxu0 %v2312
        %v2431 = vpop.f32.mrf.mxu0
        %v2432 = vadd.f32 %v2288, %v2431
        %v2433 = vpop.f32.mrf.mxu0
        %v2434 = vpop.f32.mrf.mxu0
        %v2435 = vadd.f32 %v2288, %v2434
        %v2436 = vpop.f32.mrf.mxu0
        %2437 = vmatprep.mubr.bf16.mxu0 0
        %2438 = vmatmul.mubr.bf16.gmra.mxu0 %v2315
        %v2439 = vpop.f32.mrf.mxu0
        %v2440 = vadd.f32 %v2288, %v2439
        %v2441 = vpop.f32.mrf.mxu0
        %v2442 = vpop.f32.mrf.mxu0
        %v2443 = vadd.f32 %v2288, %v2442
        %v2444 = vpop.f32.mrf.mxu0
        %2445 = vmatprep.mubr.bf16.mxu0 0
        %2446 = vmatmul.mubr.bf16.gmra.mxu0 %v2318
        %v2447 = vpop.f32.mrf.mxu0
        %v2448 = vadd.f32 %v2288, %v2447
        %v2449 = vpop.f32.mrf.mxu0
        %v2450 = vpop.f32.mrf.mxu0
        %v2451 = vadd.f32 %v2288, %v2450
        %v2452 = vpop.f32.mrf.mxu0
        %2453 = vmatprep.mubr.bf16.mxu0 0
        %2454 = vmatmul.mubr.bf16.gmra.mxu0 %v2321
        %v2455 = vpop.f32.mrf.mxu0
        %v2456 = vadd.f32 %v2288, %v2455
        %v2457 = vpop.f32.mrf.mxu0
        %v2458 = vpop.f32.mrf.mxu0
        %v2459 = vadd.f32 %v2288, %v2458
        %v2460 = vpop.f32.mrf.mxu0
        %2461 = vmatprep.mubr.bf16.mxu0 0
        %2462 = vmatmul.mubr.bf16.gmra.mxu0 %v2324
        %v2463 = vpop.f32.mrf.mxu0
        %v2464 = vadd.f32 %v2288, %v2463
        %v2465 = vpop.f32.mrf.mxu0
        %v2466 = vpop.f32.mrf.mxu0
        %v2467 = vadd.f32 %v2288, %v2466
        %v2468 = vpop.f32.mrf.mxu0
        %2469 = vmatprep.mubr.bf16.mxu0 0
        %2470 = vmatmul.mubr.bf16.gmra.mxu0 %v2327
        %v2471 = vpop.f32.mrf.mxu0
        %v2472 = vadd.f32 %v2288, %v2471
        %v2473 = vpop.f32.mrf.mxu0
        %v2474 = vpop.f32.mrf.mxu0
        %v2475 = vadd.f32 %v2288, %v2474
        %v2476 = vpop.f32.mrf.mxu0
        %2477 = vmatprep.mubr.bf16.mxu0 0
        %2478 = vmatmul.mubr.bf16.gmra.mxu0 %v2330
        %v2479 = vpop.f32.mrf.mxu0
        %v2480 = vadd.f32 %v2288, %v2479
        %v2481 = vpop.f32.mrf.mxu0
        %v2482 = vpop.f32.mrf.mxu0
        %v2483 = vadd.f32 %v2288, %v2482
        %v2484 = vpop.f32.mrf.mxu0
        %2485 = vmatprep.mubr.bf16.mxu0 0
        %2486 = vmatmul.mubr.bf16.gmra.mxu0 %v2333
        %v2487 = vpop.f32.mrf.mxu0
        %v2488 = vadd.f32 %v2288, %v2487
        %v2489 = vpop.f32.mrf.mxu0
        %v2490 = vpop.f32.mrf.mxu0
        %v2491 = vadd.f32 %v2288, %v2490
        %v2492 = vpop.f32.mrf.mxu0
        %2493 = vmatprep.mubr.bf16.mxu0 0
        %2494 = vmatmul.mubr.bf16.gmra.mxu0 %v2336
        %v2495 = vpop.f32.mrf.mxu0
        %v2496 = vadd.f32 %v2288, %v2495
        %v2497 = vpop.f32.mrf.mxu0
        %v2498 = vpop.f32.mrf.mxu0
        %v2499 = vadd.f32 %v2288, %v2498
        %v2500 = vpop.f32.mrf.mxu0
        %2501 = vdwg.mxu0
        %2534 = vrot.lane.b32.xlu0 %v2376, 16
        %v2535 = vpop.permute.xlu0 %2534
        %2536 = vrot.lane.b32.xlu0 %v2379, 16
        %v2537 = vpop.permute.xlu0 %2536
        %2538 = vrot.lane.b32.xlu0 %v2384, 16
        %v2539 = vpop.permute.xlu0 %2538
        %2540 = vrot.lane.b32.xlu0 %v2387, 16
        %v2541 = vpop.permute.xlu0 %2540
        %2542 = vrot.lane.b32.xlu0 %v2392, 16
        %v2543 = vpop.permute.xlu0 %2542
        %2544 = vrot.lane.b32.xlu0 %v2395, 16
        %v2545 = vpop.permute.xlu0 %2544
        %2546 = vrot.lane.b32.xlu0 %v2400, 16
        %v2547 = vpop.permute.xlu0 %2546
        %2548 = vrot.lane.b32.xlu0 %v2403, 16
        %v2549 = vpop.permute.xlu0 %2548
        %2550 = vrot.lane.b32.xlu0 %v2408, 16
        %v2551 = vpop.permute.xlu0 %2550
        %2552 = vrot.lane.b32.xlu0 %v2411, 16
        %v2553 = vpop.permute.xlu0 %2552
        %2554 = vrot.lane.b32.xlu0 %v2416, 16
        %v2555 = vpop.permute.xlu0 %2554
        %2556 = vrot.lane.b32.xlu0 %v2419, 16
        %v2557 = vpop.permute.xlu0 %2556
        %2558 = vrot.lane.b32.xlu0 %v2424, 16
        %v2559 = vpop.permute.xlu0 %2558
        %2560 = vrot.lane.b32.xlu0 %v2427, 16
        %v2561 = vpop.permute.xlu0 %2560
        %2562 = vrot.lane.b32.xlu0 %v2432, 16
        %v2563 = vpop.permute.xlu0 %2562
        %2564 = vrot.lane.b32.xlu0 %v2435, 16
        %v2565 = vpop.permute.xlu0 %2564
        %2566 = vrot.lane.b32.xlu0 %v2440, 16
        %v2567 = vpop.permute.xlu0 %2566
        %2568 = vrot.lane.b32.xlu0 %v2443, 16
        %v2569 = vpop.permute.xlu0 %2568
        %2570 = vrot.lane.b32.xlu0 %v2448, 16
        %v2571 = vpop.permute.xlu0 %2570
        %2572 = vrot.lane.b32.xlu0 %v2451, 16
        %v2573 = vpop.permute.xlu0 %2572
        %2574 = vrot.lane.b32.xlu0 %v2456, 16
        %v2575 = vpop.permute.xlu0 %2574
        %2576 = vrot.lane.b32.xlu0 %v2459, 16
        %v2577 = vpop.permute.xlu0 %2576
        %2578 = vrot.lane.b32.xlu0 %v2464, 16
        %v2579 = vpop.permute.xlu0 %2578
        %2580 = vrot.lane.b32.xlu0 %v2467, 16
        %v2581 = vpop.permute.xlu0 %2580
        %2582 = vrot.lane.b32.xlu0 %v2472, 16
        %v2583 = vpop.permute.xlu0 %2582
        %2584 = vrot.lane.b32.xlu0 %v2475, 16
        %v2585 = vpop.permute.xlu0 %2584
        %2586 = vrot.lane.b32.xlu0 %v2480, 16
        %v2587 = vpop.permute.xlu0 %2586
        %2588 = vrot.lane.b32.xlu0 %v2483, 16
        %v2589 = vpop.permute.xlu0 %2588
        %2590 = vrot.lane.b32.xlu0 %v2488, 16
        %v2591 = vpop.permute.xlu0 %2590
        %2592 = vrot.lane.b32.xlu0 %v2491, 16
        %v2593 = vpop.permute.xlu0 %2592
        %2594 = vrot.lane.b32.xlu0 %v2496, 16
        %v2595 = vpop.permute.xlu0 %2594
        %2596 = vrot.lane.b32.xlu0 %v2499, 16
        %v2597 = vpop.permute.xlu0 %2596
        %vm2630 = vcmask 162944
        %2631 = vst.msk [vmem:[%s339] sm:$0xff] %vm2630, %v2535
        %2632 = vst.msk [vmem:[%s339 + $0x8] sm:$0xff] %vm2630, %v2537
        %2633 = vst.msk [vmem:[%s339 + $0x10] sm:$0xff] %vm2630, %v2539
        %2634 = vst.msk [vmem:[%s339 + $0x18] sm:$0xff] %vm2630, %v2541
        %2635 = vst.msk [vmem:[%s339 + $0x20] sm:$0xff] %vm2630, %v2543
        %2636 = vst.msk [vmem:[%s339 + $0x28] sm:$0xff] %vm2630, %v2545
        %2637 = vst.msk [vmem:[%s339 + $0x30] sm:$0xff] %vm2630, %v2547
        %2638 = vst.msk [vmem:[%s339 + $0x38] sm:$0xff] %vm2630, %v2549
        %2639 = vst.msk [vmem:[%s339 + $0x40] sm:$0xff] %vm2630, %v2551
        %2640 = vst.msk [vmem:[%s339 + $0x48] sm:$0xff] %vm2630, %v2553
        %2641 = vst.msk [vmem:[%s339 + $0x50] sm:$0xff] %vm2630, %v2555
        %2642 = vst.msk [vmem:[%s339 + $0x58] sm:$0xff] %vm2630, %v2557
        %2643 = vst.msk [vmem:[%s339 + $0x60] sm:$0xff] %vm2630, %v2559
        %2644 = vst.msk [vmem:[%s339 + $0x68] sm:$0xff] %vm2630, %v2561
        %2645 = vst.msk [vmem:[%s339 + $0x70] sm:$0xff] %vm2630, %v2563
        %2646 = vst.msk [vmem:[%s339 + $0x78] sm:$0xff] %vm2630, %v2565
        %2647 = vst.msk [vmem:[%s339 + $0x80] sm:$0xff] %vm2630, %v2567
        %2648 = vst.msk [vmem:[%s339 + $0x88] sm:$0xff] %vm2630, %v2569
        %2649 = vst.msk [vmem:[%s339 + $0x90] sm:$0xff] %vm2630, %v2571
        %2650 = vst.msk [vmem:[%s339 + $0x98] sm:$0xff] %vm2630, %v2573
        %2651 = vst.msk [vmem:[%s339 + $0xa0] sm:$0xff] %vm2630, %v2575
        %2652 = vst.msk [vmem:[%s339 + $0xa8] sm:$0xff] %vm2630, %v2577
        %2653 = vst.msk [vmem:[%s339 + $0xb0] sm:$0xff] %vm2630, %v2579
        %2654 = vst.msk [vmem:[%s339 + $0xb8] sm:$0xff] %vm2630, %v2581
        %2655 = vst.msk [vmem:[%s339 + $0xc0] sm:$0xff] %vm2630, %v2583
        %2656 = vst.msk [vmem:[%s339 + $0xc8] sm:$0xff] %vm2630, %v2585
        %2657 = vst.msk [vmem:[%s339 + $0xd0] sm:$0xff] %vm2630, %v2587
        %2658 = vst.msk [vmem:[%s339 + $0xd8] sm:$0xff] %vm2630, %v2589
        %2659 = vst.msk [vmem:[%s339 + $0xe0] sm:$0xff] %vm2630, %v2591
        %2660 = vst.msk [vmem:[%s339 + $0xe8] sm:$0xff] %vm2630, %v2593
        %2661 = vst.msk [vmem:[%s339 + $0xf0] sm:$0xff] %vm2630, %v2595
        %2662 = vst.msk [vmem:[%s339 + $0xf8] sm:$0xff] %vm2630, %v2597
        %v2663 = vmax.f32 %v891, 0.0
        %v2664 = vmax.f32 %v894, 0.0
        %v2665 = vmax.f32 %v899, 0.0
        %v2666 = vmax.f32 %v902, 0.0
        %v2667 = vmax.f32 %v907, 0.0
        %v2668 = vmax.f32 %v910, 0.0
        %v2669 = vmax.f32 %v915, 0.0
        %v2670 = vmax.f32 %v918, 0.0
        %v2671 = vmax.f32 %v923, 0.0
        %v2672 = vmax.f32 %v926, 0.0
        %v2673 = vmax.f32 %v931, 0.0
        %v2674 = vmax.f32 %v934, 0.0
        %v2675 = vmax.f32 %v939, 0.0
        %v2676 = vmax.f32 %v942, 0.0
        %v2677 = vmax.f32 %v947, 0.0
        %v2678 = vmax.f32 %v950, 0.0
        %v2679 = vmax.f32 %v955, 0.0
        %v2680 = vmax.f32 %v958, 0.0
        %v2681 = vmax.f32 %v963, 0.0
        %v2682 = vmax.f32 %v966, 0.0
        %v2683 = vmax.f32 %v971, 0.0
        %v2684 = vmax.f32 %v974, 0.0
        %v2685 = vmax.f32 %v979, 0.0
        %v2686 = vmax.f32 %v982, 0.0
        %v2687 = vmax.f32 %v987, 0.0
        %v2688 = vmax.f32 %v990, 0.0
        %v2689 = vmax.f32 %v995, 0.0
        %v2690 = vmax.f32 %v998, 0.0
        %v2691 = vmax.f32 %v1003, 0.0
        %v2692 = vmax.f32 %v1006, 0.0
        %v2693 = vmax.f32 %v1011, 0.0
        %v2694 = vmax.f32 %v1014, 0.0
        %v2695 = vmax.f32 %v1019, 0.0
        %v2696 = vmax.f32 %v1022, 0.0
        %v2697 = vmax.f32 %v1027, 0.0
        %v2698 = vmax.f32 %v1030, 0.0
        %v2699 = vmax.f32 %v1035, 0.0
        %v2700 = vmax.f32 %v1038, 0.0
        %v2701 = vmax.f32 %v1043, 0.0
        %v2702 = vmax.f32 %v1046, 0.0
        %v2703 = vmax.f32 %v1051, 0.0
        %v2704 = vmax.f32 %v1054, 0.0
        %v2705 = vmax.f32 %v1059, 0.0
        %v2706 = vmax.f32 %v1062, 0.0
        %v2707 = vmax.f32 %v1067, 0.0
        %v2708 = vmax.f32 %v1070, 0.0
        %v2709 = vmax.f32 %v1075, 0.0
        %v2710 = vmax.f32 %v1078, 0.0
        %v2711 = vmax.f32 %v1083, 0.0
        %v2712 = vmax.f32 %v1086, 0.0
        %v2713 = vmax.f32 %v1091, 0.0
        %v2714 = vmax.f32 %v1094, 0.0
        %v2715 = vmax.f32 %v1099, 0.0
        %v2716 = vmax.f32 %v1102, 0.0
        %v2717 = vmax.f32 %v1107, 0.0
        %v2718 = vmax.f32 %v1110, 0.0
        %v2719 = vmax.f32 %v1115, 0.0
        %v2720 = vmax.f32 %v1118, 0.0
        %v2721 = vmax.f32 %v1123, 0.0
        %v2722 = vmax.f32 %v1126, 0.0
        %v2723 = vmax.f32 %v1131, 0.0
        %v2724 = vmax.f32 %v1134, 0.0
        %v2725 = vmax.f32 %v1139, 0.0
        %v2726 = vmax.f32 %v1142, 0.0
        %v2727 = vmax.f32 %v1147, 0.0
        %v2728 = vmax.f32 %v1150, 0.0
        %v2729 = vmax.f32 %v1155, 0.0
        %v2730 = vmax.f32 %v1158, 0.0
        %v2731 = vmax.f32 %v1163, 0.0
        %v2732 = vmax.f32 %v1166, 0.0
        %v2733 = vmax.f32 %v1171, 0.0
        %v2734 = vmax.f32 %v1174, 0.0
        %v2735 = vmax.f32 %v1179, 0.0
        %v2736 = vmax.f32 %v1182, 0.0
        %v2737 = vmax.f32 %v1187, 0.0
        %v2738 = vmax.f32 %v1190, 0.0
        %v2739 = vmax.f32 %v1195, 0.0
        %v2740 = vmax.f32 %v1198, 0.0
        %v2741 = vmax.f32 %v1203, 0.0
        %v2742 = vmax.f32 %v1206, 0.0
        %vm2743 = vcmp.eq.s32.totalorder %v1369, 1
        %vm2744 = vcmp.eq.s32.totalorder %v1370, 1
        %vm2745 = vcmp.eq.s32.totalorder %v1371, 1
        %vm2746 = vcmp.eq.s32.totalorder %v1372, 1
        %vm2747 = vcmp.eq.s32.totalorder %v1445, 1
        %vm2748 = vcmp.eq.s32.totalorder %v1446, 1
        %vm2749 = vcmp.eq.s32.totalorder %v1447, 1
        %vm2750 = vcmp.eq.s32.totalorder %v1448, 1
        %v2751 = vsel %vm2743, %v2663, 0.0
        %v2752 = vsel %vm2744, %v2664, 0.0
        %v2753 = vsel %vm2745, %v2665, 0.0
        %v2754 = vsel %vm2746, %v2666, 0.0
        %v2755 = vsel %vm1449, %v2667, 0.0
        %v2756 = vsel %vm1450, %v2668, 0.0
        %v2757 = vsel %vm1451, %v2669, 0.0
        %v2758 = vsel %vm1452, %v2670, 0.0
        %v2759 = vsel %vm1453, %v2671, 0.0
        %v2760 = vsel %vm1454, %v2672, 0.0
        %v2761 = vsel %vm1455, %v2673, 0.0
        %v2762 = vsel %vm1456, %v2674, 0.0
        %v2763 = vsel %vm1457, %v2675, 0.0
        %v2764 = vsel %vm1458, %v2676, 0.0
        %v2765 = vsel %vm1459, %v2677, 0.0
        %v2766 = vsel %vm1460, %v2678, 0.0
        %v2767 = vsel %vm1461, %v2679, 0.0
        %v2768 = vsel %vm1462, %v2680, 0.0
        %v2769 = vsel %vm1463, %v2681, 0.0
        %v2770 = vsel %vm1464, %v2682, 0.0
        %v2771 = vsel %vm1465, %v2683, 0.0
        %v2772 = vsel %vm1466, %v2684, 0.0
        %v2773 = vsel %vm1467, %v2685, 0.0
        %v2774 = vsel %vm1468, %v2686, 0.0
        %v2775 = vsel %vm1469, %v2687, 0.0
        %v2776 = vsel %vm1470, %v2688, 0.0
        %v2777 = vsel %vm1471, %v2689, 0.0
        %v2778 = vsel %vm1472, %v2690, 0.0
        %v2779 = vsel %vm1473, %v2691, 0.0
        %v2780 = vsel %vm1474, %v2692, 0.0
        %v2781 = vsel %vm1475, %v2693, 0.0
        %v2782 = vsel %vm1476, %v2694, 0.0
        %v2783 = vsel %vm1477, %v2695, 0.0
        %v2784 = vsel %vm1478, %v2696, 0.0
        %v2785 = vsel %vm1479, %v2697, 0.0
        %v2786 = vsel %vm1480, %v2698, 0.0
        %v2787 = vsel %vm1481, %v2699, 0.0
        %v2788 = vsel %vm1482, %v2700, 0.0
        %v2789 = vsel %vm1483, %v2701, 0.0
        %v2790 = vsel %vm1484, %v2702, 0.0
        %v2791 = vsel %vm1485, %v2703, 0.0
        %v2792 = vsel %vm1486, %v2704, 0.0
        %v2793 = vsel %vm1487, %v2705, 0.0
        %v2794 = vsel %vm1488, %v2706, 0.0
        %v2795 = vsel %vm1489, %v2707, 0.0
        %v2796 = vsel %vm1490, %v2708, 0.0
        %v2797 = vsel %vm1491, %v2709, 0.0
        %v2798 = vsel %vm1492, %v2710, 0.0
        %v2799 = vsel %vm1493, %v2711, 0.0
        %v2800 = vsel %vm1494, %v2712, 0.0
        %v2801 = vsel %vm1495, %v2713, 0.0
        %v2802 = vsel %vm1496, %v2714, 0.0
        %v2803 = vsel %vm1497, %v2715, 0.0
        %v2804 = vsel %vm1498, %v2716, 0.0
        %v2805 = vsel %vm1499, %v2717, 0.0
        %v2806 = vsel %vm1500, %v2718, 0.0
        %v2807 = vsel %vm1501, %v2719, 0.0
        %v2808 = vsel %vm1502, %v2720, 0.0
        %v2809 = vsel %vm1503, %v2721, 0.0
        %v2810 = vsel %vm1504, %v2722, 0.0
        %v2811 = vsel %vm1505, %v2723, 0.0
        %v2812 = vsel %vm1506, %v2724, 0.0
        %v2813 = vsel %vm1507, %v2725, 0.0
        %v2814 = vsel %vm1508, %v2726, 0.0
        %v2815 = vsel %vm1509, %v2727, 0.0
        %v2816 = vsel %vm1510, %v2728, 0.0
        %v2817 = vsel %vm1511, %v2729, 0.0
        %v2818 = vsel %vm1512, %v2730, 0.0
        %v2819 = vsel %vm1513, %v2731, 0.0
        %v2820 = vsel %vm1514, %v2732, 0.0
        %v2821 = vsel %vm1515, %v2733, 0.0
        %v2822 = vsel %vm1516, %v2734, 0.0
        %v2823 = vsel %vm1517, %v2735, 0.0
        %v2824 = vsel %vm1518, %v2736, 0.0
        %v2825 = vsel %vm1519, %v2737, 0.0
        %v2826 = vsel %vm1520, %v2738, 0.0
        %v2827 = vsel %vm2747, %v2739, 0.0
        %v2828 = vsel %vm2748, %v2740, 0.0
        %v2829 = vsel %vm2749, %v2741, 0.0
        %v2830 = vsel %vm2750, %v2742, 0.0
        %v2879 = vrot.slane %v2755, 7
        %v2880 = vrot.slane %v2756, 7
        %v2881 = vsel %vm2153, %v2879, %v2880
        %v2882 = vrot.slane %v2757, 7
        %v2883 = vsel %vm2153, %v2880, %v2882
        %v2884 = vrot.slane %v2759, 7
        %v2885 = vrot.slane %v2760, 7
        %v2886 = vsel %vm2153, %v2884, %v2885
        %v2887 = vrot.slane %v2761, 7
        %v2888 = vsel %vm2153, %v2885, %v2887
        %v2889 = vrot.slane %v2763, 7
        %v2890 = vrot.slane %v2764, 7
        %v2891 = vsel %vm2153, %v2889, %v2890
        %v2892 = vrot.slane %v2765, 7
        %v2893 = vsel %vm2153, %v2890, %v2892
        %v2894 = vrot.slane %v2767, 7
        %v2895 = vrot.slane %v2768, 7
        %v2896 = vsel %vm2153, %v2894, %v2895
        %v2897 = vrot.slane %v2769, 7
        %v2898 = vsel %vm2153, %v2895, %v2897
        %v2899 = vrot.slane %v2771, 7
        %v2900 = vrot.slane %v2772, 7
        %v2901 = vsel %vm2153, %v2899, %v2900
        %v2902 = vrot.slane %v2773, 7
        %v2903 = vsel %vm2153, %v2900, %v2902
        %v2904 = vrot.slane %v2775, 7
        %v2905 = vrot.slane %v2776, 7
        %v2906 = vsel %vm2153, %v2904, %v2905
        %v2907 = vrot.slane %v2777, 7
        %v2908 = vsel %vm2153, %v2905, %v2907
        %v2909 = vrot.slane %v2779, 7
        %v2910 = vrot.slane %v2780, 7
        %v2911 = vsel %vm2153, %v2909, %v2910
        %v2912 = vrot.slane %v2781, 7
        %v2913 = vsel %vm2153, %v2910, %v2912
        %v2914 = vrot.slane %v2783, 7
        %v2915 = vrot.slane %v2784, 7
        %v2916 = vsel %vm2153, %v2914, %v2915
        %v2917 = vrot.slane %v2785, 7
        %v2918 = vsel %vm2153, %v2915, %v2917
        %v2919 = vrot.slane %v2787, 7
        %v2920 = vrot.slane %v2788, 7
        %v2921 = vsel %vm2153, %v2919, %v2920
        %v2922 = vrot.slane %v2789, 7
        %v2923 = vsel %vm2153, %v2920, %v2922
        %v2924 = vrot.slane %v2791, 7
        %v2925 = vrot.slane %v2792, 7
        %v2926 = vsel %vm2153, %v2924, %v2925
        %v2927 = vrot.slane %v2793, 7
        %v2928 = vsel %vm2153, %v2925, %v2927
        %v2929 = vrot.slane %v2795, 7
        %v2930 = vrot.slane %v2796, 7
        %v2931 = vsel %vm2153, %v2929, %v2930
        %v2932 = vrot.slane %v2797, 7
        %v2933 = vsel %vm2153, %v2930, %v2932
        %v2934 = vrot.slane %v2799, 7
        %v2935 = vrot.slane %v2800, 7
        %v2936 = vsel %vm2153, %v2934, %v2935
        %v2937 = vrot.slane %v2801, 7
        %v2938 = vsel %vm2153, %v2935, %v2937
        %v2939 = vrot.slane %v2803, 7
        %v2940 = vrot.slane %v2804, 7
        %v2941 = vsel %vm2153, %v2939, %v2940
        %v2942 = vrot.slane %v2805, 7
        %v2943 = vsel %vm2153, %v2940, %v2942
        %v2944 = vrot.slane %v2807, 7
        %v2945 = vrot.slane %v2808, 7
        %v2946 = vsel %vm2153, %v2944, %v2945
        %v2947 = vrot.slane %v2809, 7
        %v2948 = vsel %vm2153, %v2945, %v2947
        %v2949 = vrot.slane %v2811, 7
        %v2950 = vrot.slane %v2812, 7
        %v2951 = vsel %vm2153, %v2949, %v2950
        %v2952 = vrot.slane %v2813, 7
        %v2953 = vsel %vm2153, %v2950, %v2952
        %v2954 = vrot.slane %v2815, 7
        %v2955 = vrot.slane %v2816, 7
        %v2956 = vsel %vm2153, %v2954, %v2955
        %v2957 = vrot.slane %v2817, 7
        %v2958 = vsel %vm2153, %v2955, %v2957
        %v2991 = vpack.c.bf16 %v2883, %v2881
        %v2992 = vpack.c.bf16 %v2888, %v2886
        %v2993 = vpack.c.bf16 %v2893, %v2891
        %v2994 = vpack.c.bf16 %v2898, %v2896
        %v2995 = vpack.c.bf16 %v2903, %v2901
        %v2996 = vpack.c.bf16 %v2908, %v2906
        %v2997 = vpack.c.bf16 %v2913, %v2911
        %v2998 = vpack.c.bf16 %v2918, %v2916
        %v2999 = vpack.c.bf16 %v2923, %v2921
        %v3000 = vpack.c.bf16 %v2928, %v2926
        %v3001 = vpack.c.bf16 %v2933, %v2931
        %v3002 = vpack.c.bf16 %v2938, %v2936
        %v3003 = vpack.c.bf16 %v2943, %v2941
        %v3004 = vpack.c.bf16 %v2948, %v2946
        %v3005 = vpack.c.bf16 %v2953, %v2951
        %v3006 = vpack.c.bf16 %v2958, %v2956
        %v3007 = vpack.c.bf16 %v2757, %v2756
        %v3008 = vpack.c.bf16 %v2761, %v2760
        %v3009 = vpack.c.bf16 %v2765, %v2764
        %v3010 = vpack.c.bf16 %v2769, %v2768
        %v3011 = vpack.c.bf16 %v2773, %v2772
        %v3012 = vpack.c.bf16 %v2777, %v2776
        %v3013 = vpack.c.bf16 %v2781, %v2780
        %v3014 = vpack.c.bf16 %v2785, %v2784
        %v3015 = vpack.c.bf16 %v2789, %v2788
        %v3016 = vpack.c.bf16 %v2793, %v2792
        %v3017 = vpack.c.bf16 %v2797, %v2796
        %v3018 = vpack.c.bf16 %v2801, %v2800
        %v3019 = vpack.c.bf16 %v2805, %v2804
        %v3020 = vpack.c.bf16 %v2809, %v2808
        %v3021 = vpack.c.bf16 %v2813, %v2812
        %v3022 = vpack.c.bf16 %v2817, %v2816
        %v3039 = vrot.slane %v2756, 1
        %v3040 = vrot.slane %v2757, 1
        %v3041 = vsel %vm1629, %v3039, %v3040
        %v3042 = vrot.slane %v2758, 1
        %v3043 = vsel %vm1629, %v3040, %v3042
        %v3044 = vrot.slane %v2760, 1
        %v3045 = vrot.slane %v2761, 1
        %v3046 = vsel %vm1629, %v3044, %v3045
        %v3047 = vrot.slane %v2762, 1
        %v3048 = vsel %vm1629, %v3045, %v3047
        %v3049 = vrot.slane %v2764, 1
        %v3050 = vrot.slane %v2765, 1
        %v3051 = vsel %vm1629, %v3049, %v3050
        %v3052 = vrot.slane %v2766, 1
        %v3053 = vsel %vm1629, %v3050, %v3052
        %v3054 = vrot.slane %v2768, 1
        %v3055 = vrot.slane %v2769, 1
        %v3056 = vsel %vm1629, %v3054, %v3055
        %v3057 = vrot.slane %v2770, 1
        %v3058 = vsel %vm1629, %v3055, %v3057
        %v3059 = vrot.slane %v2772, 1
        %v3060 = vrot.slane %v2773, 1
        %v3061 = vsel %vm1629, %v3059, %v3060
        %v3062 = vrot.slane %v2774, 1
        %v3063 = vsel %vm1629, %v3060, %v3062
        %v3064 = vrot.slane %v2776, 1
        %v3065 = vrot.slane %v2777, 1
        %v3066 = vsel %vm1629, %v3064, %v3065
        %v3067 = vrot.slane %v2778, 1
        %v3068 = vsel %vm1629, %v3065, %v3067
        %v3069 = vrot.slane %v2780, 1
        %v3070 = vrot.slane %v2781, 1
        %v3071 = vsel %vm1629, %v3069, %v3070
        %v3072 = vrot.slane %v2782, 1
        %v3073 = vsel %vm1629, %v3070, %v3072
        %v3074 = vrot.slane %v2784, 1
        %v3075 = vrot.slane %v2785, 1
        %v3076 = vsel %vm1629, %v3074, %v3075
        %v3077 = vrot.slane %v2786, 1
        %v3078 = vsel %vm1629, %v3075, %v3077
        %v3079 = vrot.slane %v2788, 1
        %v3080 = vrot.slane %v2789, 1
        %v3081 = vsel %vm1629, %v3079, %v3080
        %v3082 = vrot.slane %v2790, 1
        %v3083 = vsel %vm1629, %v3080, %v3082
        %v3084 = vrot.slane %v2792, 1
        %v3085 = vrot.slane %v2793, 1
        %v3086 = vsel %vm1629, %v3084, %v3085
        %v3087 = vrot.slane %v2794, 1
        %v3088 = vsel %vm1629, %v3085, %v3087
        %v3089 = vrot.slane %v2796, 1
        %v3090 = vrot.slane %v2797, 1
        %v3091 = vsel %vm1629, %v3089, %v3090
        %v3092 = vrot.slane %v2798, 1
        %v3093 = vsel %vm1629, %v3090, %v3092
        %v3094 = vrot.slane %v2800, 1
        %v3095 = vrot.slane %v2801, 1
        %v3096 = vsel %vm1629, %v3094, %v3095
        %v3097 = vrot.slane %v2802, 1
        %v3098 = vsel %vm1629, %v3095, %v3097
        %v3099 = vrot.slane %v2804, 1
        %v3100 = vrot.slane %v2805, 1
        %v3101 = vsel %vm1629, %v3099, %v3100
        %v3102 = vrot.slane %v2806, 1
        %v3103 = vsel %vm1629, %v3100, %v3102
        %v3104 = vrot.slane %v2808, 1
        %v3105 = vrot.slane %v2809, 1
        %v3106 = vsel %vm1629, %v3104, %v3105
        %v3107 = vrot.slane %v2810, 1
        %v3108 = vsel %vm1629, %v3105, %v3107
        %v3109 = vrot.slane %v2812, 1
        %v3110 = vrot.slane %v2813, 1
        %v3111 = vsel %vm1629, %v3109, %v3110
        %v3112 = vrot.slane %v2814, 1
        %v3113 = vsel %vm1629, %v3110, %v3112
        %v3114 = vrot.slane %v2816, 1
        %v3115 = vrot.slane %v2817, 1
        %v3116 = vsel %vm1629, %v3114, %v3115
        %v3117 = vrot.slane %v2818, 1
        %v3118 = vsel %vm1629, %v3115, %v3117
        %v3151 = vpack.c.bf16 %v3043, %v3041
        %v3152 = vpack.c.bf16 %v3048, %v3046
        %v3153 = vpack.c.bf16 %v3053, %v3051
        %v3154 = vpack.c.bf16 %v3058, %v3056
        %v3155 = vpack.c.bf16 %v3063, %v3061
        %v3156 = vpack.c.bf16 %v3068, %v3066
        %v3157 = vpack.c.bf16 %v3073, %v3071
        %v3158 = vpack.c.bf16 %v3078, %v3076
        %v3159 = vpack.c.bf16 %v3083, %v3081
        %v3160 = vpack.c.bf16 %v3088, %v3086
        %v3161 = vpack.c.bf16 %v3093, %v3091
        %v3162 = vpack.c.bf16 %v3098, %v3096
        %v3163 = vpack.c.bf16 %v3103, %v3101
        %v3164 = vpack.c.bf16 %v3108, %v3106
        %v3165 = vpack.c.bf16 %v3113, %v3111
        %v3166 = vpack.c.bf16 %v3118, %v3116
        %v3170 = vrot.slane %v2819, 7
        %v3171 = vrot.slane %v2820, 7
        %v3172 = vsel %vm2153, %v3170, %v3171
        %v3173 = vrot.slane %v2821, 7
        %v3174 = vsel %vm2153, %v3171, %v3173
        %v3177 = vpack.c.bf16 %v3174, %v3172
        %v3178 = vpack.c.bf16 %v2821, %v2820
        %v3180 = vrot.slane %v2820, 1
        %v3181 = vrot.slane %v2821, 1
        %v3182 = vsel %vm1629, %v3180, %v3181
        %v3183 = vrot.slane %v2822, 1
        %v3184 = vsel %vm1629, %v3181, %v3183
        %v3187 = vpack.c.bf16 %v3184, %v3182
        %v3191 = vrot.slane %v2823, 7
        %v3192 = vrot.slane %v2824, 7
        %v3193 = vsel %vm2153, %v3191, %v3192
        %v3194 = vrot.slane %v2825, 7
        %v3195 = vsel %vm2153, %v3192, %v3194
        %v3198 = vpack.c.bf16 %v3195, %v3193
        %v3199 = vpack.c.bf16 %v2825, %v2824
        %v3201 = vrot.slane %v2824, 1
        %v3202 = vrot.slane %v2825, 1
        %v3203 = vsel %vm1629, %v3201, %v3202
        %v3204 = vrot.slane %v2826, 1
        %v3205 = vsel %vm1629, %v3202, %v3204
        %v3208 = vpack.c.bf16 %v3205, %v3203
        %3225 = vrot.lane.b32.xlu0 %v3007, 4
        %v3226 = vpop.permute.xlu0 %3225
        %3227 = vrot.lane.b32.xlu0 %v3008, 4
        %v3228 = vpop.permute.xlu0 %3227
        %3229 = vrot.lane.b32.xlu0 %v3009, 4
        %v3230 = vpop.permute.xlu0 %3229
        %3231 = vrot.lane.b32.xlu0 %v3010, 4
        %v3232 = vpop.permute.xlu0 %3231
        %3233 = vrot.lane.b32.xlu0 %v3011, 4
        %v3234 = vpop.permute.xlu0 %3233
        %3235 = vrot.lane.b32.xlu0 %v3012, 4
        %v3236 = vpop.permute.xlu0 %3235
        %3237 = vrot.lane.b32.xlu0 %v3013, 4
        %v3238 = vpop.permute.xlu0 %3237
        %3239 = vrot.lane.b32.xlu0 %v3014, 4
        %v3240 = vpop.permute.xlu0 %3239
        %3241 = vrot.lane.b32.xlu0 %v3015, 4
        %v3242 = vpop.permute.xlu0 %3241
        %3243 = vrot.lane.b32.xlu0 %v3016, 4
        %v3244 = vpop.permute.xlu0 %3243
        %3245 = vrot.lane.b32.xlu0 %v3017, 4
        %v3246 = vpop.permute.xlu0 %3245
        %3247 = vrot.lane.b32.xlu0 %v3018, 4
        %v3248 = vpop.permute.xlu0 %3247
        %3249 = vrot.lane.b32.xlu0 %v3019, 4
        %v3250 = vpop.permute.xlu0 %3249
        %3251 = vrot.lane.b32.xlu0 %v3020, 4
        %v3252 = vpop.permute.xlu0 %3251
        %3253 = vrot.lane.b32.xlu0 %v3021, 4
        %v3254 = vpop.permute.xlu0 %3253
        %3255 = vrot.lane.b32.xlu0 %v3022, 4
        %v3256 = vpop.permute.xlu0 %3255
        %3273 = vrot.lane.b32.xlu0 %v3151, 8
        %v3274 = vpop.permute.xlu0 %3273
        %3275 = vrot.lane.b32.xlu0 %v3152, 8
        %v3276 = vpop.permute.xlu0 %3275
        %3277 = vrot.lane.b32.xlu0 %v3153, 8
        %v3278 = vpop.permute.xlu0 %3277
        %3279 = vrot.lane.b32.xlu0 %v3154, 8
        %v3280 = vpop.permute.xlu0 %3279
        %3281 = vrot.lane.b32.xlu0 %v3155, 8
        %v3282 = vpop.permute.xlu0 %3281
        %3283 = vrot.lane.b32.xlu0 %v3156, 8
        %v3284 = vpop.permute.xlu0 %3283
        %3285 = vrot.lane.b32.xlu0 %v3157, 8
        %v3286 = vpop.permute.xlu0 %3285
        %3287 = vrot.lane.b32.xlu0 %v3158, 8
        %v3288 = vpop.permute.xlu0 %3287
        %3289 = vrot.lane.b32.xlu0 %v3159, 8
        %v3290 = vpop.permute.xlu0 %3289
        %3291 = vrot.lane.b32.xlu0 %v3160, 8
        %v3292 = vpop.permute.xlu0 %3291
        %3293 = vrot.lane.b32.xlu0 %v3161, 8
        %v3294 = vpop.permute.xlu0 %3293
        %3295 = vrot.lane.b32.xlu0 %v3162, 8
        %v3296 = vpop.permute.xlu0 %3295
        %3297 = vrot.lane.b32.xlu0 %v3163, 8
        %v3298 = vpop.permute.xlu0 %3297
        %3299 = vrot.lane.b32.xlu0 %v3164, 8
        %v3300 = vpop.permute.xlu0 %3299
        %3301 = vrot.lane.b32.xlu0 %v3165, 8
        %v3302 = vpop.permute.xlu0 %3301
        %3303 = vrot.lane.b32.xlu0 %v3166, 8
        %v3304 = vpop.permute.xlu0 %3303
        %3321 = vrot.lane.b32.xlu0 %v2992, 12
        %v3322 = vpop.permute.xlu0 %3321
        %3323 = vrot.lane.b32.xlu0 %v2993, 12
        %v3324 = vpop.permute.xlu0 %3323
        %3325 = vrot.lane.b32.xlu0 %v2994, 12
        %v3326 = vpop.permute.xlu0 %3325
        %3327 = vrot.lane.b32.xlu0 %v2995, 12
        %v3328 = vpop.permute.xlu0 %3327
        %3329 = vrot.lane.b32.xlu0 %v2996, 12
        %v3330 = vpop.permute.xlu0 %3329
        %3331 = vrot.lane.b32.xlu0 %v2997, 12
        %v3332 = vpop.permute.xlu0 %3331
        %3333 = vrot.lane.b32.xlu0 %v2998, 12
        %v3334 = vpop.permute.xlu0 %3333
        %3335 = vrot.lane.b32.xlu0 %v2999, 12
        %v3336 = vpop.permute.xlu0 %3335
        %3337 = vrot.lane.b32.xlu0 %v3000, 12
        %v3338 = vpop.permute.xlu0 %3337
        %3339 = vrot.lane.b32.xlu0 %v3001, 12
        %v3340 = vpop.permute.xlu0 %3339
        %3341 = vrot.lane.b32.xlu0 %v3002, 12
        %v3342 = vpop.permute.xlu0 %3341
        %3343 = vrot.lane.b32.xlu0 %v3003, 12
        %v3344 = vpop.permute.xlu0 %3343
        %3345 = vrot.lane.b32.xlu0 %v3004, 12
        %v3346 = vpop.permute.xlu0 %3345
        %3347 = vrot.lane.b32.xlu0 %v3005, 12
        %v3348 = vpop.permute.xlu0 %3347
        %3349 = vrot.lane.b32.xlu0 %v3006, 12
        %v3350 = vpop.permute.xlu0 %3349
        %3351 = vrot.lane.b32.xlu0 %v3177, 12
        %v3352 = vpop.permute.xlu0 %3351
        %3354 = vrot.lane.b32.xlu0 %v3008, 16
        %v3355 = vpop.permute.xlu0 %3354
        %3356 = vrot.lane.b32.xlu0 %v3009, 16
        %v3357 = vpop.permute.xlu0 %3356
        %3358 = vrot.lane.b32.xlu0 %v3010, 16
        %v3359 = vpop.permute.xlu0 %3358
        %3360 = vrot.lane.b32.xlu0 %v3011, 16
        %v3361 = vpop.permute.xlu0 %3360
        %3362 = vrot.lane.b32.xlu0 %v3012, 16
        %v3363 = vpop.permute.xlu0 %3362
        %3364 = vrot.lane.b32.xlu0 %v3013, 16
        %v3365 = vpop.permute.xlu0 %3364
        %3366 = vrot.lane.b32.xlu0 %v3014, 16
        %v3367 = vpop.permute.xlu0 %3366
        %3368 = vrot.lane.b32.xlu0 %v3015, 16
        %v3369 = vpop.permute.xlu0 %3368
        %3370 = vrot.lane.b32.xlu0 %v3016, 16
        %v3371 = vpop.permute.xlu0 %3370
        %3372 = vrot.lane.b32.xlu0 %v3017, 16
        %v3373 = vpop.permute.xlu0 %3372
        %3374 = vrot.lane.b32.xlu0 %v3018, 16
        %v3375 = vpop.permute.xlu0 %3374
        %3376 = vrot.lane.b32.xlu0 %v3019, 16
        %v3377 = vpop.permute.xlu0 %3376
        %3378 = vrot.lane.b32.xlu0 %v3020, 16
        %v3379 = vpop.permute.xlu0 %3378
        %3380 = vrot.lane.b32.xlu0 %v3021, 16
        %v3381 = vpop.permute.xlu0 %3380
        %3382 = vrot.lane.b32.xlu0 %v3022, 16
        %v3383 = vpop.permute.xlu0 %3382
        %3384 = vrot.lane.b32.xlu0 %v3178, 16
        %v3385 = vpop.permute.xlu0 %3384
        %3387 = vrot.lane.b32.xlu0 %v3152, 20
        %v3388 = vpop.permute.xlu0 %3387
        %3389 = vrot.lane.b32.xlu0 %v3153, 20
        %v3390 = vpop.permute.xlu0 %3389
        %3391 = vrot.lane.b32.xlu0 %v3154, 20
        %v3392 = vpop.permute.xlu0 %3391
        %3393 = vrot.lane.b32.xlu0 %v3155, 20
        %v3394 = vpop.permute.xlu0 %3393
        %3395 = vrot.lane.b32.xlu0 %v3156, 20
        %v3396 = vpop.permute.xlu0 %3395
        %3397 = vrot.lane.b32.xlu0 %v3157, 20
        %v3398 = vpop.permute.xlu0 %3397
        %3399 = vrot.lane.b32.xlu0 %v3158, 20
        %v3400 = vpop.permute.xlu0 %3399
        %3401 = vrot.lane.b32.xlu0 %v3159, 20
        %v3402 = vpop.permute.xlu0 %3401
        %3403 = vrot.lane.b32.xlu0 %v3160, 20
        %v3404 = vpop.permute.xlu0 %3403
        %3405 = vrot.lane.b32.xlu0 %v3161, 20
        %v3406 = vpop.permute.xlu0 %3405
        %3407 = vrot.lane.b32.xlu0 %v3162, 20
        %v3408 = vpop.permute.xlu0 %3407
        %3409 = vrot.lane.b32.xlu0 %v3163, 20
        %v3410 = vpop.permute.xlu0 %3409
        %3411 = vrot.lane.b32.xlu0 %v3164, 20
        %v3412 = vpop.permute.xlu0 %3411
        %3413 = vrot.lane.b32.xlu0 %v3165, 20
        %v3414 = vpop.permute.xlu0 %3413
        %3415 = vrot.lane.b32.xlu0 %v3166, 20
        %v3416 = vpop.permute.xlu0 %3415
        %3417 = vrot.lane.b32.xlu0 %v3187, 20
        %v3418 = vpop.permute.xlu0 %3417
        %3420 = vrot.lane.b32.xlu0 %v2993, 24
        %v3421 = vpop.permute.xlu0 %3420
        %3422 = vrot.lane.b32.xlu0 %v2994, 24
        %v3423 = vpop.permute.xlu0 %3422
        %3424 = vrot.lane.b32.xlu0 %v2995, 24
        %v3425 = vpop.permute.xlu0 %3424
        %3426 = vrot.lane.b32.xlu0 %v2996, 24
        %v3427 = vpop.permute.xlu0 %3426
        %3428 = vrot.lane.b32.xlu0 %v2997, 24
        %v3429 = vpop.permute.xlu0 %3428
        %3430 = vrot.lane.b32.xlu0 %v2998, 24
        %v3431 = vpop.permute.xlu0 %3430
        %3432 = vrot.lane.b32.xlu0 %v2999, 24
        %v3433 = vpop.permute.xlu0 %3432
        %3434 = vrot.lane.b32.xlu0 %v3000, 24
        %v3435 = vpop.permute.xlu0 %3434
        %3436 = vrot.lane.b32.xlu0 %v3001, 24
        %v3437 = vpop.permute.xlu0 %3436
        %3438 = vrot.lane.b32.xlu0 %v3002, 24
        %v3439 = vpop.permute.xlu0 %3438
        %3440 = vrot.lane.b32.xlu0 %v3003, 24
        %v3441 = vpop.permute.xlu0 %3440
        %3442 = vrot.lane.b32.xlu0 %v3004, 24
        %v3443 = vpop.permute.xlu0 %3442
        %3444 = vrot.lane.b32.xlu0 %v3005, 24
        %v3445 = vpop.permute.xlu0 %3444
        %3446 = vrot.lane.b32.xlu0 %v3006, 24
        %v3447 = vpop.permute.xlu0 %3446
        %3448 = vrot.lane.b32.xlu0 %v3177, 24
        %v3449 = vpop.permute.xlu0 %3448
        %3450 = vrot.lane.b32.xlu0 %v3198, 24
        %v3451 = vpop.permute.xlu0 %3450
        %3453 = vrot.lane.b32.xlu0 %v3009, 28
        %v3454 = vpop.permute.xlu0 %3453
        %3455 = vrot.lane.b32.xlu0 %v3010, 28
        %v3456 = vpop.permute.xlu0 %3455
        %3457 = vrot.lane.b32.xlu0 %v3011, 28
        %v3458 = vpop.permute.xlu0 %3457
        %3459 = vrot.lane.b32.xlu0 %v3012, 28
        %v3460 = vpop.permute.xlu0 %3459
        %3461 = vrot.lane.b32.xlu0 %v3013, 28
        %v3462 = vpop.permute.xlu0 %3461
        %3463 = vrot.lane.b32.xlu0 %v3014, 28
        %v3464 = vpop.permute.xlu0 %3463
        %3465 = vrot.lane.b32.xlu0 %v3015, 28
        %v3466 = vpop.permute.xlu0 %3465
        %3467 = vrot.lane.b32.xlu0 %v3016, 28
        %v3468 = vpop.permute.xlu0 %3467
        %3469 = vrot.lane.b32.xlu0 %v3017, 28
        %v3470 = vpop.permute.xlu0 %3469
        %3471 = vrot.lane.b32.xlu0 %v3018, 28
        %v3472 = vpop.permute.xlu0 %3471
        %3473 = vrot.lane.b32.xlu0 %v3019, 28
        %v3474 = vpop.permute.xlu0 %3473
        %3475 = vrot.lane.b32.xlu0 %v3020, 28
        %v3476 = vpop.permute.xlu0 %3475
        %3477 = vrot.lane.b32.xlu0 %v3021, 28
        %v3478 = vpop.permute.xlu0 %3477
        %3479 = vrot.lane.b32.xlu0 %v3022, 28
        %v3480 = vpop.permute.xlu0 %3479
        %3481 = vrot.lane.b32.xlu0 %v3178, 28
        %v3482 = vpop.permute.xlu0 %3481
        %3483 = vrot.lane.b32.xlu0 %v3199, 28
        %v3484 = vpop.permute.xlu0 %3483
        %3486 = vrot.lane.b32.xlu0 %v3153, 32
        %v3487 = vpop.permute.xlu0 %3486
        %3488 = vrot.lane.b32.xlu0 %v3154, 32
        %v3489 = vpop.permute.xlu0 %3488
        %3490 = vrot.lane.b32.xlu0 %v3155, 32
        %v3491 = vpop.permute.xlu0 %3490
        %3492 = vrot.lane.b32.xlu0 %v3156, 32
        %v3493 = vpop.permute.xlu0 %3492
        %3494 = vrot.lane.b32.xlu0 %v3157, 32
        %v3495 = vpop.permute.xlu0 %3494
        %3496 = vrot.lane.b32.xlu0 %v3158, 32
        %v3497 = vpop.permute.xlu0 %3496
        %3498 = vrot.lane.b32.xlu0 %v3159, 32
        %v3499 = vpop.permute.xlu0 %3498
        %3500 = vrot.lane.b32.xlu0 %v3160, 32
        %v3501 = vpop.permute.xlu0 %3500
        %3502 = vrot.lane.b32.xlu0 %v3161, 32
        %v3503 = vpop.permute.xlu0 %3502
        %3504 = vrot.lane.b32.xlu0 %v3162, 32
        %v3505 = vpop.permute.xlu0 %3504
        %3506 = vrot.lane.b32.xlu0 %v3163, 32
        %v3507 = vpop.permute.xlu0 %3506
        %3508 = vrot.lane.b32.xlu0 %v3164, 32
        %v3509 = vpop.permute.xlu0 %3508
        %3510 = vrot.lane.b32.xlu0 %v3165, 32
        %v3511 = vpop.permute.xlu0 %3510
        %3512 = vrot.lane.b32.xlu0 %v3166, 32
        %v3513 = vpop.permute.xlu0 %3512
        %3514 = vrot.lane.b32.xlu0 %v3187, 32
        %v3515 = vpop.permute.xlu0 %3514
        %3516 = vrot.lane.b32.xlu0 %v3208, 32
        %v3517 = vpop.permute.xlu0 %3516
        %v3520 = vsel %vm731, %v2991, %v3226
        %v3523 = vsel %vm731, %v2992, %v3228
        %v3526 = vsel %vm731, %v2993, %v3230
        %v3529 = vsel %vm731, %v2994, %v3232
        %v3532 = vsel %vm731, %v2995, %v3234
        %v3535 = vsel %vm731, %v2996, %v3236
        %v3538 = vsel %vm731, %v2997, %v3238
        %v3541 = vsel %vm731, %v2998, %v3240
        %v3544 = vsel %vm731, %v2999, %v3242
        %v3547 = vsel %vm731, %v3000, %v3244
        %v3550 = vsel %vm731, %v3001, %v3246
        %v3553 = vsel %vm731, %v3002, %v3248
        %v3556 = vsel %vm731, %v3003, %v3250
        %v3559 = vsel %vm731, %v3004, %v3252
        %v3562 = vsel %vm731, %v3005, %v3254
        %v3565 = vsel %vm731, %v3006, %v3256
        %vm3566 = vcmask 64512
        %v3568 = vsel %vm3566, %v3520, %v3274
        %v3570 = vsel %vm3566, %v3523, %v3276
        %v3572 = vsel %vm3566, %v3526, %v3278
        %v3574 = vsel %vm3566, %v3529, %v3280
        %v3576 = vsel %vm3566, %v3532, %v3282
        %v3578 = vsel %vm3566, %v3535, %v3284
        %v3580 = vsel %vm3566, %v3538, %v3286
        %v3582 = vsel %vm3566, %v3541, %v3288
        %v3584 = vsel %vm3566, %v3544, %v3290
        %v3586 = vsel %vm3566, %v3547, %v3292
        %v3588 = vsel %vm3566, %v3550, %v3294
        %v3590 = vsel %vm3566, %v3553, %v3296
        %v3592 = vsel %vm3566, %v3556, %v3298
        %v3594 = vsel %vm3566, %v3559, %v3300
        %v3596 = vsel %vm3566, %v3562, %v3302
        %v3598 = vsel %vm3566, %v3565, %v3304
        %vm3599 = vcmask 97280
        %v3601 = vsel %vm3599, %v3568, %v3322
        %v3603 = vsel %vm3599, %v3570, %v3324
        %v3605 = vsel %vm3599, %v3572, %v3326
        %v3607 = vsel %vm3599, %v3574, %v3328
        %v3609 = vsel %vm3599, %v3576, %v3330
        %v3611 = vsel %vm3599, %v3578, %v3332
        %v3613 = vsel %vm3599, %v3580, %v3334
        %v3615 = vsel %vm3599, %v3582, %v3336
        %v3617 = vsel %vm3599, %v3584, %v3338
        %v3619 = vsel %vm3599, %v3586, %v3340
        %v3621 = vsel %vm3599, %v3588, %v3342
        %v3623 = vsel %vm3599, %v3590, %v3344
        %v3625 = vsel %vm3599, %v3592, %v3346
        %v3627 = vsel %vm3599, %v3594, %v3348
        %v3629 = vsel %vm3599, %v3596, %v3350
        %v3631 = vsel %vm3599, %v3598, %v3352
        %vm3632 = vcmask 130048
        %v3634 = vsel %vm3632, %v3601, %v3355
        %v3636 = vsel %vm3632, %v3603, %v3357
        %v3638 = vsel %vm3632, %v3605, %v3359
        %v3640 = vsel %vm3632, %v3607, %v3361
        %v3642 = vsel %vm3632, %v3609, %v3363
        %v3644 = vsel %vm3632, %v3611, %v3365
        %v3646 = vsel %vm3632, %v3613, %v3367
        %v3648 = vsel %vm3632, %v3615, %v3369
        %v3650 = vsel %vm3632, %v3617, %v3371
        %v3652 = vsel %vm3632, %v3619, %v3373
        %v3654 = vsel %vm3632, %v3621, %v3375
        %v3656 = vsel %vm3632, %v3623, %v3377
        %v3658 = vsel %vm3632, %v3625, %v3379
        %v3660 = vsel %vm3632, %v3627, %v3381
        %v3662 = vsel %vm3632, %v3629, %v3383
        %v3664 = vsel %vm3632, %v3631, %v3385
        %vm3665 = vcmask 162816
        %v3667 = vsel %vm3665, %v3634, %v3388
        %v3669 = vsel %vm3665, %v3636, %v3390
        %v3671 = vsel %vm3665, %v3638, %v3392
        %v3673 = vsel %vm3665, %v3640, %v3394
        %v3675 = vsel %vm3665, %v3642, %v3396
        %v3677 = vsel %vm3665, %v3644, %v3398
        %v3679 = vsel %vm3665, %v3646, %v3400
        %v3681 = vsel %vm3665, %v3648, %v3402
        %v3683 = vsel %vm3665, %v3650, %v3404
        %v3685 = vsel %vm3665, %v3652, %v3406
        %v3687 = vsel %vm3665, %v3654, %v3408
        %v3689 = vsel %vm3665, %v3656, %v3410
        %v3691 = vsel %vm3665, %v3658, %v3412
        %v3693 = vsel %vm3665, %v3660, %v3414
        %v3695 = vsel %vm3665, %v3662, %v3416
        %v3697 = vsel %vm3665, %v3664, %v3418
        %vm3698 = vcmask 195584
        %v3700 = vsel %vm3698, %v3667, %v3421
        %v3702 = vsel %vm3698, %v3669, %v3423
        %v3704 = vsel %vm3698, %v3671, %v3425
        %v3706 = vsel %vm3698, %v3673, %v3427
        %v3708 = vsel %vm3698, %v3675, %v3429
        %v3710 = vsel %vm3698, %v3677, %v3431
        %v3712 = vsel %vm3698, %v3679, %v3433
        %v3714 = vsel %vm3698, %v3681, %v3435
        %v3716 = vsel %vm3698, %v3683, %v3437
        %v3718 = vsel %vm3698, %v3685, %v3439
        %v3720 = vsel %vm3698, %v3687, %v3441
        %v3722 = vsel %vm3698, %v3689, %v3443
        %v3724 = vsel %vm3698, %v3691, %v3445
        %v3726 = vsel %vm3698, %v3693, %v3447
        %v3728 = vsel %vm3698, %v3695, %v3449
        %v3730 = vsel %vm3698, %v3697, %v3451
        %vm3731 = vcmask 228352
        %v3733 = vsel %vm3731, %v3700, %v3454
        %v3735 = vsel %vm3731, %v3702, %v3456
        %v3737 = vsel %vm3731, %v3704, %v3458
        %v3739 = vsel %vm3731, %v3706, %v3460
        %v3741 = vsel %vm3731, %v3708, %v3462
        %v3743 = vsel %vm3731, %v3710, %v3464
        %v3745 = vsel %vm3731, %v3712, %v3466
        %v3747 = vsel %vm3731, %v3714, %v3468
        %v3749 = vsel %vm3731, %v3716, %v3470
        %v3751 = vsel %vm3731, %v3718, %v3472
        %v3753 = vsel %vm3731, %v3720, %v3474
        %v3755 = vsel %vm3731, %v3722, %v3476
        %v3757 = vsel %vm3731, %v3724, %v3478
        %v3759 = vsel %vm3731, %v3726, %v3480
        %v3761 = vsel %vm3731, %v3728, %v3482
        %v3763 = vsel %vm3731, %v3730, %v3484
        %vm3764 = vcmask 261120
        %v3766 = vsel %vm3764, %v3733, %v3487
        %v3768 = vsel %vm3764, %v3735, %v3489
        %v3770 = vsel %vm3764, %v3737, %v3491
        %v3772 = vsel %vm3764, %v3739, %v3493
        %v3774 = vsel %vm3764, %v3741, %v3495
        %v3776 = vsel %vm3764, %v3743, %v3497
        %v3778 = vsel %vm3764, %v3745, %v3499
        %v3780 = vsel %vm3764, %v3747, %v3501
        %v3782 = vsel %vm3764, %v3749, %v3503
        %v3784 = vsel %vm3764, %v3751, %v3505
        %v3786 = vsel %vm3764, %v3753, %v3507
        %v3788 = vsel %vm3764, %v3755, %v3509
        %v3790 = vsel %vm3764, %v3757, %v3511
        %v3792 = vsel %vm3764, %v3759, %v3513
        %v3794 = vsel %vm3764, %v3761, %v3515
        %v3796 = vsel %vm3764, %v3763, %v3517
        %v3797 = vld [vmem:[%s3] sm:$0xf]
        %v3798 = vld [vmem:[%s3 + $0x4] sm:$0xf]
        %v3799 = vld [vmem:[%s3 + $0x8] sm:$0xf]
        %v3800 = vld [vmem:[%s3 + $0xc] sm:$0xf]
        %v3801 = vld [vmem:[%s3 + $0x10] sm:$0x3]
        %v3802 = vld [vmem:[%s4] sm:$0x1]
        %v3804 = vlaneseq
        %v3805 = vshrl.u32 %v3804, 7
        %v3806 = vsub.s32 0, %v3805
        %v3807 = vrot.slane %v3802, %v3806
        %v3814 = vunpack.c.l.b16 %v3797
        %v3815 = vunpack.c.l.b16 %v3798
        %v3816 = vunpack.c.l.b16 %v3799
        %v3817 = vunpack.c.l.b16 %v3800
        %v3818 = vunpack.c.l.b16 %v3801
        %v3819 = vpack.c.b16 %v3815, %v3814
        %v3820 = vpack.c.b16 %v3817, %v3816
        %v3821 = vpack.c.b16 %v3818, %v3818
        %vm3824 = vcmask 293888
        %v3825 = vsel %vm3824, %v3766, 0
        %v3827 = vsel %vm3824, %v3768, 0
        %v3829 = vsel %vm3824, %v3770, 0
        %v3831 = vsel %vm3824, %v3772, 0
        %v3833 = vsel %vm3824, %v3774, 0
        %v3835 = vsel %vm3824, %v3776, 0
        %v3837 = vsel %vm3824, %v3778, 0
        %v3839 = vsel %vm3824, %v3780, 0
        %v3841 = vsel %vm3824, %v3782, 0
        %v3843 = vsel %vm3824, %v3784, 0
        %v3845 = vsel %vm3824, %v3786, 0
        %v3847 = vsel %vm3824, %v3788, 0
        %v3849 = vsel %vm3824, %v3790, 0
        %v3851 = vsel %vm3824, %v3792, 0
        %v3853 = vsel %vm3824, %v3794, 0
        %v3855 = vsel %vm3824, %v3796, 0
        %v3858 = vsel %vm852, %v3821, 0
        %3860 = vmatprep.subr.bf16.mxu0 0
        %3861 = vmatpush1.bf16.msra.mxu0 0
        %3862 = vmatprep.subr.bf16.mxu0 0
        %3863 = vmatpush1.bf16.msra.mxu0 0
        %3864 = vmatprep.subr.bf16.mxu0 0
        %3865 = vmatpush1.bf16.msra.mxu0 0
        %3866 = vmatprep.subr.bf16.mxu0 0
        %3867 = vmatpush1.bf16.msra.mxu0 0
        %3868 = vmatprep.subr.bf16.mxu0 0
        %3869 = vmatpush1.bf16.msra.mxu0 0
        %3870 = vmatprep.subr.bf16.mxu0 0
        %3871 = vmatpush1.bf16.msra.mxu0 %v3858
        %3872 = vmatprep.subr.bf16.mxu0 0
        %3873 = vmatpush1.bf16.msra.mxu0 %v3820
        %3874 = vmatprep.subr.bf16.mxu0 0
        %3875 = vmatpush1.bf16.msra.mxu0 %v3819
        %3876 = vmatprep.subr.bf16.mxu0 0
        %3877 = vmatpush2.bf16.msra.mxu0 0
        %3878 = vmatprep.subr.bf16.mxu0 0
        %3879 = vmatpush2.bf16.msra.mxu0 0
        %3880 = vmatprep.subr.bf16.mxu0 0
        %3881 = vmatpush2.bf16.msra.mxu0 0
        %3882 = vmatprep.subr.bf16.mxu0 0
        %3883 = vmatpush2.bf16.msra.mxu0 0
        %3884 = vmatprep.subr.bf16.mxu0 0
        %3885 = vmatpush2.bf16.msra.mxu0 0
        %3886 = vmatprep.subr.bf16.mxu0 0
        %3887 = vmatpush2.bf16.msra.mxu0 0
        %3888 = vmatprep.subr.bf16.mxu0 0
        %3889 = vmatpush2.bf16.msra.mxu0 0
        %3890 = vmatprep.subr.bf16.mxu0 0
        %3891 = vmatpush2.bf16.msra.mxu0 0
        %3892 = vmatprep.mubr.bf16.mxu0 0
        %3893 = vmatmul.mubr.bf16.gmra.mxu0 %v3825
        %v3894 = vpop.f32.mrf.mxu0
        %v3895 = vadd.f32 %v3807, %v3894
        %v3896 = vpop.f32.mrf.mxu0
        %v3897 = vpop.f32.mrf.mxu0
        %v3898 = vadd.f32 %v3807, %v3897
        %v3899 = vpop.f32.mrf.mxu0
        %3900 = vmatprep.mubr.bf16.mxu0 0
        %3901 = vmatmul.mubr.bf16.gmra.mxu0 %v3827
        %v3902 = vpop.f32.mrf.mxu0
        %v3903 = vadd.f32 %v3807, %v3902
        %v3904 = vpop.f32.mrf.mxu0
        %v3905 = vpop.f32.mrf.mxu0
        %v3906 = vadd.f32 %v3807, %v3905
        %v3907 = vpop.f32.mrf.mxu0
        %3908 = vmatprep.mubr.bf16.mxu0 0
        %3909 = vmatmul.mubr.bf16.gmra.mxu0 %v3829
        %v3910 = vpop.f32.mrf.mxu0
        %v3911 = vadd.f32 %v3807, %v3910
        %v3912 = vpop.f32.mrf.mxu0
        %v3913 = vpop.f32.mrf.mxu0
        %v3914 = vadd.f32 %v3807, %v3913
        %v3915 = vpop.f32.mrf.mxu0
        %3916 = vmatprep.mubr.bf16.mxu0 0
        %3917 = vmatmul.mubr.bf16.gmra.mxu0 %v3831
        %v3918 = vpop.f32.mrf.mxu0
        %v3919 = vadd.f32 %v3807, %v3918
        %v3920 = vpop.f32.mrf.mxu0
        %v3921 = vpop.f32.mrf.mxu0
        %v3922 = vadd.f32 %v3807, %v3921
        %v3923 = vpop.f32.mrf.mxu0
        %3924 = vmatprep.mubr.bf16.mxu0 0
        %3925 = vmatmul.mubr.bf16.gmra.mxu0 %v3833
        %v3926 = vpop.f32.mrf.mxu0
        %v3927 = vadd.f32 %v3807, %v3926
        %v3928 = vpop.f32.mrf.mxu0
        %v3929 = vpop.f32.mrf.mxu0
        %v3930 = vadd.f32 %v3807, %v3929
        %v3931 = vpop.f32.mrf.mxu0
        %3932 = vmatprep.mubr.bf16.mxu0 0
        %3933 = vmatmul.mubr.bf16.gmra.mxu0 %v3835
        %v3934 = vpop.f32.mrf.mxu0
        %v3935 = vadd.f32 %v3807, %v3934
        %v3936 = vpop.f32.mrf.mxu0
        %v3937 = vpop.f32.mrf.mxu0
        %v3938 = vadd.f32 %v3807, %v3937
        %v3939 = vpop.f32.mrf.mxu0
        %3940 = vmatprep.mubr.bf16.mxu0 0
        %3941 = vmatmul.mubr.bf16.gmra.mxu0 %v3837
        %v3942 = vpop.f32.mrf.mxu0
        %v3943 = vadd.f32 %v3807, %v3942
        %v3944 = vpop.f32.mrf.mxu0
        %v3945 = vpop.f32.mrf.mxu0
        %v3946 = vadd.f32 %v3807, %v3945
        %v3947 = vpop.f32.mrf.mxu0
        %3948 = vmatprep.mubr.bf16.mxu0 0
        %3949 = vmatmul.mubr.bf16.gmra.mxu0 %v3839
        %v3950 = vpop.f32.mrf.mxu0
        %v3951 = vadd.f32 %v3807, %v3950
        %v3952 = vpop.f32.mrf.mxu0
        %v3953 = vpop.f32.mrf.mxu0
        %v3954 = vadd.f32 %v3807, %v3953
        %v3955 = vpop.f32.mrf.mxu0
        %3956 = vmatprep.mubr.bf16.mxu0 0
        %3957 = vmatmul.mubr.bf16.gmra.mxu0 %v3841
        %v3958 = vpop.f32.mrf.mxu0
        %v3959 = vadd.f32 %v3807, %v3958
        %v3960 = vpop.f32.mrf.mxu0
        %v3961 = vpop.f32.mrf.mxu0
        %v3962 = vadd.f32 %v3807, %v3961
        %v3963 = vpop.f32.mrf.mxu0
        %3964 = vmatprep.mubr.bf16.mxu0 0
        %3965 = vmatmul.mubr.bf16.gmra.mxu0 %v3843
        %v3966 = vpop.f32.mrf.mxu0
        %v3967 = vadd.f32 %v3807, %v3966
        %v3968 = vpop.f32.mrf.mxu0
        %v3969 = vpop.f32.mrf.mxu0
        %v3970 = vadd.f32 %v3807, %v3969
        %v3971 = vpop.f32.mrf.mxu0
        %3972 = vmatprep.mubr.bf16.mxu0 0
        %3973 = vmatmul.mubr.bf16.gmra.mxu0 %v3845
        %v3974 = vpop.f32.mrf.mxu0
        %v3975 = vadd.f32 %v3807, %v3974
        %v3976 = vpop.f32.mrf.mxu0
        %v3977 = vpop.f32.mrf.mxu0
        %v3978 = vadd.f32 %v3807, %v3977
        %v3979 = vpop.f32.mrf.mxu0
        %3980 = vmatprep.mubr.bf16.mxu0 0
        %3981 = vmatmul.mubr.bf16.gmra.mxu0 %v3847
        %v3982 = vpop.f32.mrf.mxu0
        %v3983 = vadd.f32 %v3807, %v3982
        %v3984 = vpop.f32.mrf.mxu0
        %v3985 = vpop.f32.mrf.mxu0
        %v3986 = vadd.f32 %v3807, %v3985
        %v3987 = vpop.f32.mrf.mxu0
        %3988 = vmatprep.mubr.bf16.mxu0 0
        %3989 = vmatmul.mubr.bf16.gmra.mxu0 %v3849
        %v3990 = vpop.f32.mrf.mxu0
        %v3991 = vadd.f32 %v3807, %v3990
        %v3992 = vpop.f32.mrf.mxu0
        %v3993 = vpop.f32.mrf.mxu0
        %v3994 = vadd.f32 %v3807, %v3993
        %v3995 = vpop.f32.mrf.mxu0
        %3996 = vmatprep.mubr.bf16.mxu0 0
        %3997 = vmatmul.mubr.bf16.gmra.mxu0 %v3851
        %v3998 = vpop.f32.mrf.mxu0
        %v3999 = vadd.f32 %v3807, %v3998
        %v4000 = vpop.f32.mrf.mxu0
        %v4001 = vpop.f32.mrf.mxu0
        %v4002 = vadd.f32 %v3807, %v4001
        %v4003 = vpop.f32.mrf.mxu0
        %4004 = vmatprep.mubr.bf16.mxu0 0
        %4005 = vmatmul.mubr.bf16.gmra.mxu0 %v3853
        %v4006 = vpop.f32.mrf.mxu0
        %v4007 = vadd.f32 %v3807, %v4006
        %v4008 = vpop.f32.mrf.mxu0
        %v4009 = vpop.f32.mrf.mxu0
        %v4010 = vadd.f32 %v3807, %v4009
        %v4011 = vpop.f32.mrf.mxu0
        %4012 = vmatprep.mubr.bf16.mxu0 0
        %4013 = vmatmul.mubr.bf16.gmra.mxu0 %v3855
        %v4014 = vpop.f32.mrf.mxu0
        %v4015 = vadd.f32 %v3807, %v4014
        %v4016 = vpop.f32.mrf.mxu0
        %v4017 = vpop.f32.mrf.mxu0
        %v4018 = vadd.f32 %v3807, %v4017
        %v4019 = vpop.f32.mrf.mxu0
        %4020 = vdwg.mxu0
        %4053 = vrot.lane.b32.xlu0 %v3895, 4
        %v4054 = vpop.permute.xlu0 %4053
        %4055 = vrot.lane.b32.xlu0 %v3898, 4
        %v4056 = vpop.permute.xlu0 %4055
        %4057 = vrot.lane.b32.xlu0 %v3903, 4
        %v4058 = vpop.permute.xlu0 %4057
        %4059 = vrot.lane.b32.xlu0 %v3906, 4
        %v4060 = vpop.permute.xlu0 %4059
        %4061 = vrot.lane.b32.xlu0 %v3911, 4
        %v4062 = vpop.permute.xlu0 %4061
        %4063 = vrot.lane.b32.xlu0 %v3914, 4
        %v4064 = vpop.permute.xlu0 %4063
        %4065 = vrot.lane.b32.xlu0 %v3919, 4
        %v4066 = vpop.permute.xlu0 %4065
        %4067 = vrot.lane.b32.xlu0 %v3922, 4
        %v4068 = vpop.permute.xlu0 %4067
        %4069 = vrot.lane.b32.xlu0 %v3927, 4
        %v4070 = vpop.permute.xlu0 %4069
        %4071 = vrot.lane.b32.xlu0 %v3930, 4
        %v4072 = vpop.permute.xlu0 %4071
        %4073 = vrot.lane.b32.xlu0 %v3935, 4
        %v4074 = vpop.permute.xlu0 %4073
        %4075 = vrot.lane.b32.xlu0 %v3938, 4
        %v4076 = vpop.permute.xlu0 %4075
        %4077 = vrot.lane.b32.xlu0 %v3943, 4
        %v4078 = vpop.permute.xlu0 %4077
        %4079 = vrot.lane.b32.xlu0 %v3946, 4
        %v4080 = vpop.permute.xlu0 %4079
        %4081 = vrot.lane.b32.xlu0 %v3951, 4
        %v4082 = vpop.permute.xlu0 %4081
        %4083 = vrot.lane.b32.xlu0 %v3954, 4
        %v4084 = vpop.permute.xlu0 %4083
        %4085 = vrot.lane.b32.xlu0 %v3959, 4
        %v4086 = vpop.permute.xlu0 %4085
        %4087 = vrot.lane.b32.xlu0 %v3962, 4
        %v4088 = vpop.permute.xlu0 %4087
        %4089 = vrot.lane.b32.xlu0 %v3967, 4
        %v4090 = vpop.permute.xlu0 %4089
        %4091 = vrot.lane.b32.xlu0 %v3970, 4
        %v4092 = vpop.permute.xlu0 %4091
        %4093 = vrot.lane.b32.xlu0 %v3975, 4
        %v4094 = vpop.permute.xlu0 %4093
        %4095 = vrot.lane.b32.xlu0 %v3978, 4
        %v4096 = vpop.permute.xlu0 %4095
        %4097 = vrot.lane.b32.xlu0 %v3983, 4
        %v4098 = vpop.permute.xlu0 %4097
        %4099 = vrot.lane.b32.xlu0 %v3986, 4
        %v4100 = vpop.permute.xlu0 %4099
        %4101 = vrot.lane.b32.xlu0 %v3991, 4
        %v4102 = vpop.permute.xlu0 %4101
        %4103 = vrot.lane.b32.xlu0 %v3994, 4
        %v4104 = vpop.permute.xlu0 %4103
        %4105 = vrot.lane.b32.xlu0 %v3999, 4
        %v4106 = vpop.permute.xlu0 %4105
        %4107 = vrot.lane.b32.xlu0 %v4002, 4
        %v4108 = vpop.permute.xlu0 %4107
        %4109 = vrot.lane.b32.xlu0 %v4007, 4
        %v4110 = vpop.permute.xlu0 %4109
        %4111 = vrot.lane.b32.xlu0 %v4010, 4
        %v4112 = vpop.permute.xlu0 %4111
        %4113 = vrot.lane.b32.xlu0 %v4015, 4
        %v4114 = vpop.permute.xlu0 %4113
        %4115 = vrot.lane.b32.xlu0 %v4018, 4
        %v4116 = vpop.permute.xlu0 %4115
        %vm4149 = vcmask 97312
        %4150 = vst.msk [vmem:[%s339] sm:$0xff] %vm4149, %v4054
        %4151 = vst.msk [vmem:[%s339 + $0x8] sm:$0xff] %vm4149, %v4056
        %4152 = vst.msk [vmem:[%s339 + $0x10] sm:$0xff] %vm4149, %v4058
        %4153 = vst.msk [vmem:[%s339 + $0x18] sm:$0xff] %vm4149, %v4060
        %4154 = vst.msk [vmem:[%s339 + $0x20] sm:$0xff] %vm4149, %v4062
        %4155 = vst.msk [vmem:[%s339 + $0x28] sm:$0xff] %vm4149, %v4064
        %4156 = vst.msk [vmem:[%s339 + $0x30] sm:$0xff] %vm4149, %v4066
        %4157 = vst.msk [vmem:[%s339 + $0x38] sm:$0xff] %vm4149, %v4068
        %4158 = vst.msk [vmem:[%s339 + $0x40] sm:$0xff] %vm4149, %v4070
        %4159 = vst.msk [vmem:[%s339 + $0x48] sm:$0xff] %vm4149, %v4072
        %4160 = vst.msk [vmem:[%s339 + $0x50] sm:$0xff] %vm4149, %v4074
        %4161 = vst.msk [vmem:[%s339 + $0x58] sm:$0xff] %vm4149, %v4076
        %4162 = vst.msk [vmem:[%s339 + $0x60] sm:$0xff] %vm4149, %v4078
        %4163 = vst.msk [vmem:[%s339 + $0x68] sm:$0xff] %vm4149, %v4080
        %4164 = vst.msk [vmem:[%s339 + $0x70] sm:$0xff] %vm4149, %v4082
        %4165 = vst.msk [vmem:[%s339 + $0x78] sm:$0xff] %vm4149, %v4084
        %4166 = vst.msk [vmem:[%s339 + $0x80] sm:$0xff] %vm4149, %v4086
        %4167 = vst.msk [vmem:[%s339 + $0x88] sm:$0xff] %vm4149, %v4088
        %4168 = vst.msk [vmem:[%s339 + $0x90] sm:$0xff] %vm4149, %v4090
        %4169 = vst.msk [vmem:[%s339 + $0x98] sm:$0xff] %vm4149, %v4092
        %4170 = vst.msk [vmem:[%s339 + $0xa0] sm:$0xff] %vm4149, %v4094
        %4171 = vst.msk [vmem:[%s339 + $0xa8] sm:$0xff] %vm4149, %v4096
        %4172 = vst.msk [vmem:[%s339 + $0xb0] sm:$0xff] %vm4149, %v4098
        %4173 = vst.msk [vmem:[%s339 + $0xb8] sm:$0xff] %vm4149, %v4100
        %4174 = vst.msk [vmem:[%s339 + $0xc0] sm:$0xff] %vm4149, %v4102
        %4175 = vst.msk [vmem:[%s339 + $0xc8] sm:$0xff] %vm4149, %v4104
        %4176 = vst.msk [vmem:[%s339 + $0xd0] sm:$0xff] %vm4149, %v4106
        %4177 = vst.msk [vmem:[%s339 + $0xd8] sm:$0xff] %vm4149, %v4108
        %4178 = vst.msk [vmem:[%s339 + $0xe0] sm:$0xff] %vm4149, %v4110
        %4179 = vst.msk [vmem:[%s339 + $0xe8] sm:$0xff] %vm4149, %v4112
        %4180 = vst.msk [vmem:[%s339 + $0xf0] sm:$0xff] %vm4149, %v4114
        %4181 = vst.msk [vmem:[%s339 + $0xf8] sm:$0xff] %vm4149, %v4116
        %v4185 = vrot.slane %v2751, 6
        %v4186 = vrot.slane %v2752, 6
        %v4187 = vsel %vm852, %v4185, %v4186
        %v4188 = vrot.slane %v2753, 6
        %v4189 = vsel %vm852, %v4186, %v4188
        %v4190 = vrot.slane %v2755, 6
        %v4191 = vrot.slane %v2756, 6
        %v4192 = vsel %vm852, %v4190, %v4191
        %v4193 = vrot.slane %v2757, 6
        %v4194 = vsel %vm852, %v4191, %v4193
        %v4195 = vrot.slane %v2759, 6
        %v4196 = vrot.slane %v2760, 6
        %v4197 = vsel %vm852, %v4195, %v4196
        %v4198 = vrot.slane %v2761, 6
        %v4199 = vsel %vm852, %v4196, %v4198
        %v4200 = vrot.slane %v2763, 6
        %v4201 = vrot.slane %v2764, 6
        %v4202 = vsel %vm852, %v4200, %v4201
        %v4203 = vrot.slane %v2765, 6
        %v4204 = vsel %vm852, %v4201, %v4203
        %v4205 = vrot.slane %v2767, 6
        %v4206 = vrot.slane %v2768, 6
        %v4207 = vsel %vm852, %v4205, %v4206
        %v4208 = vrot.slane %v2769, 6
        %v4209 = vsel %vm852, %v4206, %v4208
        %v4210 = vrot.slane %v2771, 6
        %v4211 = vrot.slane %v2772, 6
        %v4212 = vsel %vm852, %v4210, %v4211
        %v4213 = vrot.slane %v2773, 6
        %v4214 = vsel %vm852, %v4211, %v4213
        %v4215 = vrot.slane %v2775, 6
        %v4216 = vrot.slane %v2776, 6
        %v4217 = vsel %vm852, %v4215, %v4216
        %v4218 = vrot.slane %v2777, 6
        %v4219 = vsel %vm852, %v4216, %v4218
        %v4220 = vrot.slane %v2779, 6
        %v4221 = vrot.slane %v2780, 6
        %v4222 = vsel %vm852, %v4220, %v4221
        %v4223 = vrot.slane %v2781, 6
        %v4224 = vsel %vm852, %v4221, %v4223
        %v4225 = vrot.slane %v2783, 6
        %v4226 = vrot.slane %v2784, 6
        %v4227 = vsel %vm852, %v4225, %v4226
        %v4228 = vrot.slane %v2785, 6
        %v4229 = vsel %vm852, %v4226, %v4228
        %v4230 = vrot.slane %v2787, 6
        %v4231 = vrot.slane %v2788, 6
        %v4232 = vsel %vm852, %v4230, %v4231
        %v4233 = vrot.slane %v2789, 6
        %v4234 = vsel %vm852, %v4231, %v4233
        %v4235 = vrot.slane %v2791, 6
        %v4236 = vrot.slane %v2792, 6
        %v4237 = vsel %vm852, %v4235, %v4236
        %v4238 = vrot.slane %v2793, 6
        %v4239 = vsel %vm852, %v4236, %v4238
        %v4240 = vrot.slane %v2795, 6
        %v4241 = vrot.slane %v2796, 6
        %v4242 = vsel %vm852, %v4240, %v4241
        %v4243 = vrot.slane %v2797, 6
        %v4244 = vsel %vm852, %v4241, %v4243
        %v4245 = vrot.slane %v2799, 6
        %v4246 = vrot.slane %v2800, 6
        %v4247 = vsel %vm852, %v4245, %v4246
        %v4248 = vrot.slane %v2801, 6
        %v4249 = vsel %vm852, %v4246, %v4248
        %v4250 = vrot.slane %v2803, 6
        %v4251 = vrot.slane %v2804, 6
        %v4252 = vsel %vm852, %v4250, %v4251
        %v4253 = vrot.slane %v2805, 6
        %v4254 = vsel %vm852, %v4251, %v4253
        %v4255 = vrot.slane %v2807, 6
        %v4256 = vrot.slane %v2808, 6
        %v4257 = vsel %vm852, %v4255, %v4256
        %v4258 = vrot.slane %v2809, 6
        %v4259 = vsel %vm852, %v4256, %v4258
        %v4260 = vrot.slane %v2811, 6
        %v4261 = vrot.slane %v2812, 6
        %v4262 = vsel %vm852, %v4260, %v4261
        %v4263 = vrot.slane %v2813, 6
        %v4264 = vsel %vm852, %v4261, %v4263
        %v4297 = vpack.c.bf16 %v4189, %v4187
        %v4298 = vpack.c.bf16 %v4194, %v4192
        %v4299 = vpack.c.bf16 %v4199, %v4197
        %v4300 = vpack.c.bf16 %v4204, %v4202
        %v4301 = vpack.c.bf16 %v4209, %v4207
        %v4302 = vpack.c.bf16 %v4214, %v4212
        %v4303 = vpack.c.bf16 %v4219, %v4217
        %v4304 = vpack.c.bf16 %v4224, %v4222
        %v4305 = vpack.c.bf16 %v4229, %v4227
        %v4306 = vpack.c.bf16 %v4234, %v4232
        %v4307 = vpack.c.bf16 %v4239, %v4237
        %v4308 = vpack.c.bf16 %v4244, %v4242
        %v4309 = vpack.c.bf16 %v4249, %v4247
        %v4310 = vpack.c.bf16 %v4254, %v4252
        %v4311 = vpack.c.bf16 %v4259, %v4257
        %v4312 = vpack.c.bf16 %v4264, %v4262
        %v4313 = vrot.slane %v2751, 7
        %v4314 = vrot.slane %v2752, 7
        %v4315 = vsel %vm2153, %v4313, %v4314
        %v4316 = vrot.slane %v2753, 7
        %v4317 = vsel %vm2153, %v4314, %v4316
        %v4320 = vpack.c.bf16 %v4317, %v4315
        %v4321 = vpack.c.bf16 %v2753, %v2752
        %v4323 = vrot.slane %v2752, 1
        %v4324 = vrot.slane %v2753, 1
        %v4325 = vsel %vm1629, %v4323, %v4324
        %v4326 = vrot.slane %v2754, 1
        %v4327 = vsel %vm1629, %v4324, %v4326
        %v4330 = vpack.c.bf16 %v4327, %v4325
        %v4331 = vrot.slane %v2752, 2
        %v4332 = vrot.slane %v2753, 2
        %v4333 = vsel %vm1810, %v4331, %v4332
        %v4334 = vrot.slane %v2754, 2
        %v4335 = vsel %vm1810, %v4332, %v4334
        %v4336 = vrot.slane %v2756, 2
        %v4337 = vrot.slane %v2757, 2
        %v4338 = vsel %vm1810, %v4336, %v4337
        %v4339 = vrot.slane %v2758, 2
        %v4340 = vsel %vm1810, %v4337, %v4339
        %v4341 = vrot.slane %v2760, 2
        %v4342 = vrot.slane %v2761, 2
        %v4343 = vsel %vm1810, %v4341, %v4342
        %v4344 = vrot.slane %v2762, 2
        %v4345 = vsel %vm1810, %v4342, %v4344
        %v4346 = vrot.slane %v2764, 2
        %v4347 = vrot.slane %v2765, 2
        %v4348 = vsel %vm1810, %v4346, %v4347
        %v4349 = vrot.slane %v2766, 2
        %v4350 = vsel %vm1810, %v4347, %v4349
        %v4351 = vrot.slane %v2768, 2
        %v4352 = vrot.slane %v2769, 2
        %v4353 = vsel %vm1810, %v4351, %v4352
        %v4354 = vrot.slane %v2770, 2
        %v4355 = vsel %vm1810, %v4352, %v4354
        %v4356 = vrot.slane %v2772, 2
        %v4357 = vrot.slane %v2773, 2
        %v4358 = vsel %vm1810, %v4356, %v4357
        %v4359 = vrot.slane %v2774, 2
        %v4360 = vsel %vm1810, %v4357, %v4359
        %v4361 = vrot.slane %v2776, 2
        %v4362 = vrot.slane %v2777, 2
        %v4363 = vsel %vm1810, %v4361, %v4362
        %v4364 = vrot.slane %v2778, 2
        %v4365 = vsel %vm1810, %v4362, %v4364
        %v4366 = vrot.slane %v2780, 2
        %v4367 = vrot.slane %v2781, 2
        %v4368 = vsel %vm1810, %v4366, %v4367
        %v4369 = vrot.slane %v2782, 2
        %v4370 = vsel %vm1810, %v4367, %v4369
        %v4371 = vrot.slane %v2784, 2
        %v4372 = vrot.slane %v2785, 2
        %v4373 = vsel %vm1810, %v4371, %v4372
        %v4374 = vrot.slane %v2786, 2
        %v4375 = vsel %vm1810, %v4372, %v4374
        %v4376 = vrot.slane %v2788, 2
        %v4377 = vrot.slane %v2789, 2
        %v4378 = vsel %vm1810, %v4376, %v4377
        %v4379 = vrot.slane %v2790, 2
        %v4380 = vsel %vm1810, %v4377, %v4379
        %v4381 = vrot.slane %v2792, 2
        %v4382 = vrot.slane %v2793, 2
        %v4383 = vsel %vm1810, %v4381, %v4382
        %v4384 = vrot.slane %v2794, 2
        %v4385 = vsel %vm1810, %v4382, %v4384
        %v4386 = vrot.slane %v2796, 2
        %v4387 = vrot.slane %v2797, 2
        %v4388 = vsel %vm1810, %v4386, %v4387
        %v4389 = vrot.slane %v2798, 2
        %v4390 = vsel %vm1810, %v4387, %v4389
        %v4391 = vrot.slane %v2800, 2
        %v4392 = vrot.slane %v2801, 2
        %v4393 = vsel %vm1810, %v4391, %v4392
        %v4394 = vrot.slane %v2802, 2
        %v4395 = vsel %vm1810, %v4392, %v4394
        %v4396 = vrot.slane %v2804, 2
        %v4397 = vrot.slane %v2805, 2
        %v4398 = vsel %vm1810, %v4396, %v4397
        %v4399 = vrot.slane %v2806, 2
        %v4400 = vsel %vm1810, %v4397, %v4399
        %v4401 = vrot.slane %v2808, 2
        %v4402 = vrot.slane %v2809, 2
        %v4403 = vsel %vm1810, %v4401, %v4402
        %v4404 = vrot.slane %v2810, 2
        %v4405 = vsel %vm1810, %v4402, %v4404
        %v4406 = vrot.slane %v2812, 2
        %v4407 = vrot.slane %v2813, 2
        %v4408 = vsel %vm1810, %v4406, %v4407
        %v4409 = vrot.slane %v2814, 2
        %v4410 = vsel %vm1810, %v4407, %v4409
        %v4443 = vpack.c.bf16 %v4335, %v4333
        %v4444 = vpack.c.bf16 %v4340, %v4338
        %v4445 = vpack.c.bf16 %v4345, %v4343
        %v4446 = vpack.c.bf16 %v4350, %v4348
        %v4447 = vpack.c.bf16 %v4355, %v4353
        %v4448 = vpack.c.bf16 %v4360, %v4358
        %v4449 = vpack.c.bf16 %v4365, %v4363
        %v4450 = vpack.c.bf16 %v4370, %v4368
        %v4451 = vpack.c.bf16 %v4375, %v4373
        %v4452 = vpack.c.bf16 %v4380, %v4378
        %v4453 = vpack.c.bf16 %v4385, %v4383
        %v4454 = vpack.c.bf16 %v4390, %v4388
        %v4455 = vpack.c.bf16 %v4395, %v4393
        %v4456 = vpack.c.bf16 %v4400, %v4398
        %v4457 = vpack.c.bf16 %v4405, %v4403
        %v4458 = vpack.c.bf16 %v4410, %v4408
        %v4459 = vrot.slane %v2815, 6
        %v4460 = vrot.slane %v2816, 6
        %v4461 = vsel %vm852, %v4459, %v4460
        %v4462 = vrot.slane %v2817, 6
        %v4463 = vsel %vm852, %v4460, %v4462
        %v4466 = vpack.c.bf16 %v4463, %v4461
        %v4467 = vrot.slane %v2816, 2
        %v4468 = vrot.slane %v2817, 2
        %v4469 = vsel %vm1810, %v4467, %v4468
        %v4470 = vrot.slane %v2818, 2
        %v4471 = vsel %vm1810, %v4468, %v4470
        %v4474 = vpack.c.bf16 %v4471, %v4469
        %v4475 = vrot.slane %v2819, 6
        %v4476 = vrot.slane %v2820, 6
        %v4477 = vsel %vm852, %v4475, %v4476
        %v4478 = vrot.slane %v2821, 6
        %v4479 = vsel %vm852, %v4476, %v4478
        %v4482 = vpack.c.bf16 %v4479, %v4477
        %v4483 = vrot.slane %v2820, 2
        %v4484 = vrot.slane %v2821, 2
        %v4485 = vsel %vm1810, %v4483, %v4484
        %v4486 = vrot.slane %v2822, 2
        %v4487 = vsel %vm1810, %v4484, %v4486
        %v4490 = vpack.c.bf16 %v4487, %v4485
        %v4491 = vrot.slane %v2823, 6
        %v4492 = vrot.slane %v2824, 6
        %v4493 = vsel %vm852, %v4491, %v4492
        %v4494 = vrot.slane %v2825, 6
        %v4495 = vsel %vm852, %v4492, %v4494
        %v4498 = vpack.c.bf16 %v4495, %v4493
        %v4499 = vrot.slane %v2824, 2
        %v4500 = vrot.slane %v2825, 2
        %v4501 = vsel %vm1810, %v4499, %v4500
        %v4502 = vrot.slane %v2826, 2
        %v4503 = vsel %vm1810, %v4500, %v4502
        %v4506 = vpack.c.bf16 %v4503, %v4501
        %v4510 = vrot.slane %v2827, 6
        %v4511 = vrot.slane %v2828, 6
        %v4512 = vsel %vm852, %v4510, %v4511
        %v4513 = vrot.slane %v2829, 6
        %v4514 = vsel %vm852, %v4511, %v4513
        %v4517 = vpack.c.bf16 %v4514, %v4512
        %v4518 = vrot.slane %v2827, 7
        %v4519 = vrot.slane %v2828, 7
        %v4520 = vsel %vm2153, %v4518, %v4519
        %v4521 = vrot.slane %v2829, 7
        %v4522 = vsel %vm2153, %v4519, %v4521
        %v4525 = vpack.c.bf16 %v4522, %v4520
        %v4526 = vpack.c.bf16 %v2829, %v2828
        %v4528 = vrot.slane %v2828, 1
        %v4529 = vrot.slane %v2829, 1
        %v4530 = vsel %vm1629, %v4528, %v4529
        %v4531 = vrot.slane %v2830, 1
        %v4532 = vsel %vm1629, %v4529, %v4531
        %v4535 = vpack.c.bf16 %v4532, %v4530
        %v4536 = vrot.slane %v2828, 2
        %v4537 = vrot.slane %v2829, 2
        %v4538 = vsel %vm1810, %v4536, %v4537
        %v4539 = vrot.slane %v2830, 2
        %v4540 = vsel %vm1810, %v4537, %v4539
        %v4543 = vpack.c.bf16 %v4540, %v4538
        %4560 = vrot.lane.b32.xlu0 %v4297, 124
        %v4561 = vpop.permute.xlu0 %4560
        %4562 = vrot.lane.b32.xlu0 %v4298, 124
        %v4563 = vpop.permute.xlu0 %4562
        %4564 = vrot.lane.b32.xlu0 %v4299, 124
        %v4565 = vpop.permute.xlu0 %4564
        %4566 = vrot.lane.b32.xlu0 %v4300, 124
        %v4567 = vpop.permute.xlu0 %4566
        %4568 = vrot.lane.b32.xlu0 %v4301, 124
        %v4569 = vpop.permute.xlu0 %4568
        %4570 = vrot.lane.b32.xlu0 %v4302, 124
        %v4571 = vpop.permute.xlu0 %4570
        %4572 = vrot.lane.b32.xlu0 %v4303, 124
        %v4573 = vpop.permute.xlu0 %4572
        %4574 = vrot.lane.b32.xlu0 %v4304, 124
        %v4575 = vpop.permute.xlu0 %4574
        %4576 = vrot.lane.b32.xlu0 %v4305, 124
        %v4577 = vpop.permute.xlu0 %4576
        %4578 = vrot.lane.b32.xlu0 %v4306, 124
        %v4579 = vpop.permute.xlu0 %4578
        %4580 = vrot.lane.b32.xlu0 %v4307, 124
        %v4581 = vpop.permute.xlu0 %4580
        %4582 = vrot.lane.b32.xlu0 %v4308, 124
        %v4583 = vpop.permute.xlu0 %4582
        %4584 = vrot.lane.b32.xlu0 %v4309, 124
        %v4585 = vpop.permute.xlu0 %4584
        %4586 = vrot.lane.b32.xlu0 %v4310, 124
        %v4587 = vpop.permute.xlu0 %4586
        %4588 = vrot.lane.b32.xlu0 %v4311, 124
        %v4589 = vpop.permute.xlu0 %4588
        %4590 = vrot.lane.b32.xlu0 %v4312, 124
        %v4591 = vpop.permute.xlu0 %4590
        %4593 = vrot.lane.b32.xlu0 %v4321, 4
        %v4594 = vpop.permute.xlu0 %4593
        %4596 = vrot.lane.b32.xlu0 %v4330, 8
        %v4597 = vpop.permute.xlu0 %4596
        %4614 = vrot.lane.b32.xlu0 %v4443, 12
        %v4615 = vpop.permute.xlu0 %4614
        %4616 = vrot.lane.b32.xlu0 %v4444, 12
        %v4617 = vpop.permute.xlu0 %4616
        %4618 = vrot.lane.b32.xlu0 %v4445, 12
        %v4619 = vpop.permute.xlu0 %4618
        %4620 = vrot.lane.b32.xlu0 %v4446, 12
        %v4621 = vpop.permute.xlu0 %4620
        %4622 = vrot.lane.b32.xlu0 %v4447, 12
        %v4623 = vpop.permute.xlu0 %4622
        %4624 = vrot.lane.b32.xlu0 %v4448, 12
        %v4625 = vpop.permute.xlu0 %4624
        %4626 = vrot.lane.b32.xlu0 %v4449, 12
        %v4627 = vpop.permute.xlu0 %4626
        %4628 = vrot.lane.b32.xlu0 %v4450, 12
        %v4629 = vpop.permute.xlu0 %4628
        %4630 = vrot.lane.b32.xlu0 %v4451, 12
        %v4631 = vpop.permute.xlu0 %4630
        %4632 = vrot.lane.b32.xlu0 %v4452, 12
        %v4633 = vpop.permute.xlu0 %4632
        %4634 = vrot.lane.b32.xlu0 %v4453, 12
        %v4635 = vpop.permute.xlu0 %4634
        %4636 = vrot.lane.b32.xlu0 %v4454, 12
        %v4637 = vpop.permute.xlu0 %4636
        %4638 = vrot.lane.b32.xlu0 %v4455, 12
        %v4639 = vpop.permute.xlu0 %4638
        %4640 = vrot.lane.b32.xlu0 %v4456, 12
        %v4641 = vpop.permute.xlu0 %4640
        %4642 = vrot.lane.b32.xlu0 %v4457, 12
        %v4643 = vpop.permute.xlu0 %4642
        %4644 = vrot.lane.b32.xlu0 %v4458, 12
        %v4645 = vpop.permute.xlu0 %4644
        %4647 = vrot.lane.b32.xlu0 %v4298, 16
        %v4648 = vpop.permute.xlu0 %4647
        %4649 = vrot.lane.b32.xlu0 %v4299, 16
        %v4650 = vpop.permute.xlu0 %4649
        %4651 = vrot.lane.b32.xlu0 %v4300, 16
        %v4652 = vpop.permute.xlu0 %4651
        %4653 = vrot.lane.b32.xlu0 %v4301, 16
        %v4654 = vpop.permute.xlu0 %4653
        %4655 = vrot.lane.b32.xlu0 %v4302, 16
        %v4656 = vpop.permute.xlu0 %4655
        %4657 = vrot.lane.b32.xlu0 %v4303, 16
        %v4658 = vpop.permute.xlu0 %4657
        %4659 = vrot.lane.b32.xlu0 %v4304, 16
        %v4660 = vpop.permute.xlu0 %4659
        %4661 = vrot.lane.b32.xlu0 %v4305, 16
        %v4662 = vpop.permute.xlu0 %4661
        %4663 = vrot.lane.b32.xlu0 %v4306, 16
        %v4664 = vpop.permute.xlu0 %4663
        %4665 = vrot.lane.b32.xlu0 %v4307, 16
        %v4666 = vpop.permute.xlu0 %4665
        %4667 = vrot.lane.b32.xlu0 %v4308, 16
        %v4668 = vpop.permute.xlu0 %4667
        %4669 = vrot.lane.b32.xlu0 %v4309, 16
        %v4670 = vpop.permute.xlu0 %4669
        %4671 = vrot.lane.b32.xlu0 %v4310, 16
        %v4672 = vpop.permute.xlu0 %4671
        %4673 = vrot.lane.b32.xlu0 %v4311, 16
        %v4674 = vpop.permute.xlu0 %4673
        %4675 = vrot.lane.b32.xlu0 %v4312, 16
        %v4676 = vpop.permute.xlu0 %4675
        %4677 = vrot.lane.b32.xlu0 %v4466, 16
        %v4678 = vpop.permute.xlu0 %4677
        %4680 = vrot.lane.b32.xlu0 %v2991, 20
        %v4681 = vpop.permute.xlu0 %4680
        %4682 = vrot.lane.b32.xlu0 %v2992, 20
        %v4683 = vpop.permute.xlu0 %4682
        %4684 = vrot.lane.b32.xlu0 %v2993, 20
        %v4685 = vpop.permute.xlu0 %4684
        %4686 = vrot.lane.b32.xlu0 %v2994, 20
        %v4687 = vpop.permute.xlu0 %4686
        %4688 = vrot.lane.b32.xlu0 %v2995, 20
        %v4689 = vpop.permute.xlu0 %4688
        %4690 = vrot.lane.b32.xlu0 %v2996, 20
        %v4691 = vpop.permute.xlu0 %4690
        %4692 = vrot.lane.b32.xlu0 %v2997, 20
        %v4693 = vpop.permute.xlu0 %4692
        %4694 = vrot.lane.b32.xlu0 %v2998, 20
        %v4695 = vpop.permute.xlu0 %4694
        %4696 = vrot.lane.b32.xlu0 %v2999, 20
        %v4697 = vpop.permute.xlu0 %4696
        %4698 = vrot.lane.b32.xlu0 %v3000, 20
        %v4699 = vpop.permute.xlu0 %4698
        %4700 = vrot.lane.b32.xlu0 %v3001, 20
        %v4701 = vpop.permute.xlu0 %4700
        %4702 = vrot.lane.b32.xlu0 %v3002, 20
        %v4703 = vpop.permute.xlu0 %4702
        %4704 = vrot.lane.b32.xlu0 %v3003, 20
        %v4705 = vpop.permute.xlu0 %4704
        %4706 = vrot.lane.b32.xlu0 %v3004, 20
        %v4707 = vpop.permute.xlu0 %4706
        %4708 = vrot.lane.b32.xlu0 %v3005, 20
        %v4709 = vpop.permute.xlu0 %4708
        %4710 = vrot.lane.b32.xlu0 %v3006, 20
        %v4711 = vpop.permute.xlu0 %4710
        %4712 = vrot.lane.b32.xlu0 %v3007, 24
        %v4713 = vpop.permute.xlu0 %4712
        %4714 = vrot.lane.b32.xlu0 %v3008, 24
        %v4715 = vpop.permute.xlu0 %4714
        %4716 = vrot.lane.b32.xlu0 %v3009, 24
        %v4717 = vpop.permute.xlu0 %4716
        %4718 = vrot.lane.b32.xlu0 %v3010, 24
        %v4719 = vpop.permute.xlu0 %4718
        %4720 = vrot.lane.b32.xlu0 %v3011, 24
        %v4721 = vpop.permute.xlu0 %4720
        %4722 = vrot.lane.b32.xlu0 %v3012, 24
        %v4723 = vpop.permute.xlu0 %4722
        %4724 = vrot.lane.b32.xlu0 %v3013, 24
        %v4725 = vpop.permute.xlu0 %4724
        %4726 = vrot.lane.b32.xlu0 %v3014, 24
        %v4727 = vpop.permute.xlu0 %4726
        %4728 = vrot.lane.b32.xlu0 %v3015, 24
        %v4729 = vpop.permute.xlu0 %4728
        %4730 = vrot.lane.b32.xlu0 %v3016, 24
        %v4731 = vpop.permute.xlu0 %4730
        %4732 = vrot.lane.b32.xlu0 %v3017, 24
        %v4733 = vpop.permute.xlu0 %4732
        %4734 = vrot.lane.b32.xlu0 %v3018, 24
        %v4735 = vpop.permute.xlu0 %4734
        %4736 = vrot.lane.b32.xlu0 %v3019, 24
        %v4737 = vpop.permute.xlu0 %4736
        %4738 = vrot.lane.b32.xlu0 %v3020, 24
        %v4739 = vpop.permute.xlu0 %4738
        %4740 = vrot.lane.b32.xlu0 %v3021, 24
        %v4741 = vpop.permute.xlu0 %4740
        %4742 = vrot.lane.b32.xlu0 %v3022, 24
        %v4743 = vpop.permute.xlu0 %4742
        %4744 = vrot.lane.b32.xlu0 %v3151, 28
        %v4745 = vpop.permute.xlu0 %4744
        %4746 = vrot.lane.b32.xlu0 %v3152, 28
        %v4747 = vpop.permute.xlu0 %4746
        %4748 = vrot.lane.b32.xlu0 %v3153, 28
        %v4749 = vpop.permute.xlu0 %4748
        %4750 = vrot.lane.b32.xlu0 %v3154, 28
        %v4751 = vpop.permute.xlu0 %4750
        %4752 = vrot.lane.b32.xlu0 %v3155, 28
        %v4753 = vpop.permute.xlu0 %4752
        %4754 = vrot.lane.b32.xlu0 %v3156, 28
        %v4755 = vpop.permute.xlu0 %4754
        %4756 = vrot.lane.b32.xlu0 %v3157, 28
        %v4757 = vpop.permute.xlu0 %4756
        %4758 = vrot.lane.b32.xlu0 %v3158, 28
        %v4759 = vpop.permute.xlu0 %4758
        %4760 = vrot.lane.b32.xlu0 %v3159, 28
        %v4761 = vpop.permute.xlu0 %4760
        %4762 = vrot.lane.b32.xlu0 %v3160, 28
        %v4763 = vpop.permute.xlu0 %4762
        %4764 = vrot.lane.b32.xlu0 %v3161, 28
        %v4765 = vpop.permute.xlu0 %4764
        %4766 = vrot.lane.b32.xlu0 %v3162, 28
        %v4767 = vpop.permute.xlu0 %4766
        %4768 = vrot.lane.b32.xlu0 %v3163, 28
        %v4769 = vpop.permute.xlu0 %4768
        %4770 = vrot.lane.b32.xlu0 %v3164, 28
        %v4771 = vpop.permute.xlu0 %4770
        %4772 = vrot.lane.b32.xlu0 %v3165, 28
        %v4773 = vpop.permute.xlu0 %4772
        %4774 = vrot.lane.b32.xlu0 %v3166, 28
        %v4775 = vpop.permute.xlu0 %4774
        %4777 = vrot.lane.b32.xlu0 %v4444, 32
        %v4778 = vpop.permute.xlu0 %4777
        %4779 = vrot.lane.b32.xlu0 %v4445, 32
        %v4780 = vpop.permute.xlu0 %4779
        %4781 = vrot.lane.b32.xlu0 %v4446, 32
        %v4782 = vpop.permute.xlu0 %4781
        %4783 = vrot.lane.b32.xlu0 %v4447, 32
        %v4784 = vpop.permute.xlu0 %4783
        %4785 = vrot.lane.b32.xlu0 %v4448, 32
        %v4786 = vpop.permute.xlu0 %4785
        %4787 = vrot.lane.b32.xlu0 %v4449, 32
        %v4788 = vpop.permute.xlu0 %4787
        %4789 = vrot.lane.b32.xlu0 %v4450, 32
        %v4790 = vpop.permute.xlu0 %4789
        %4791 = vrot.lane.b32.xlu0 %v4451, 32
        %v4792 = vpop.permute.xlu0 %4791
        %4793 = vrot.lane.b32.xlu0 %v4452, 32
        %v4794 = vpop.permute.xlu0 %4793
        %4795 = vrot.lane.b32.xlu0 %v4453, 32
        %v4796 = vpop.permute.xlu0 %4795
        %4797 = vrot.lane.b32.xlu0 %v4454, 32
        %v4798 = vpop.permute.xlu0 %4797
        %4799 = vrot.lane.b32.xlu0 %v4455, 32
        %v4800 = vpop.permute.xlu0 %4799
        %4801 = vrot.lane.b32.xlu0 %v4456, 32
        %v4802 = vpop.permute.xlu0 %4801
        %4803 = vrot.lane.b32.xlu0 %v4457, 32
        %v4804 = vpop.permute.xlu0 %4803
        %4805 = vrot.lane.b32.xlu0 %v4458, 32
        %v4806 = vpop.permute.xlu0 %4805
        %4807 = vrot.lane.b32.xlu0 %v4474, 32
        %v4808 = vpop.permute.xlu0 %4807
        %4810 = vrot.lane.b32.xlu0 %v4299, 36
        %v4811 = vpop.permute.xlu0 %4810
        %4812 = vrot.lane.b32.xlu0 %v4300, 36
        %v4813 = vpop.permute.xlu0 %4812
        %4814 = vrot.lane.b32.xlu0 %v4301, 36
        %v4815 = vpop.permute.xlu0 %4814
        %4816 = vrot.lane.b32.xlu0 %v4302, 36
        %v4817 = vpop.permute.xlu0 %4816
        %4818 = vrot.lane.b32.xlu0 %v4303, 36
        %v4819 = vpop.permute.xlu0 %4818
        %4820 = vrot.lane.b32.xlu0 %v4304, 36
        %v4821 = vpop.permute.xlu0 %4820
        %4822 = vrot.lane.b32.xlu0 %v4305, 36
        %v4823 = vpop.permute.xlu0 %4822
        %4824 = vrot.lane.b32.xlu0 %v4306, 36
        %v4825 = vpop.permute.xlu0 %4824
        %4826 = vrot.lane.b32.xlu0 %v4307, 36
        %v4827 = vpop.permute.xlu0 %4826
        %4828 = vrot.lane.b32.xlu0 %v4308, 36
        %v4829 = vpop.permute.xlu0 %4828
        %4830 = vrot.lane.b32.xlu0 %v4309, 36
        %v4831 = vpop.permute.xlu0 %4830
        %4832 = vrot.lane.b32.xlu0 %v4310, 36
        %v4833 = vpop.permute.xlu0 %4832
        %4834 = vrot.lane.b32.xlu0 %v4311, 36
        %v4835 = vpop.permute.xlu0 %4834
        %4836 = vrot.lane.b32.xlu0 %v4312, 36
        %v4837 = vpop.permute.xlu0 %4836
        %4838 = vrot.lane.b32.xlu0 %v4466, 36
        %v4839 = vpop.permute.xlu0 %4838
        %4840 = vrot.lane.b32.xlu0 %v4482, 36
        %v4841 = vpop.permute.xlu0 %4840
        %4842 = vrot.lane.b32.xlu0 %v2992, 40
        %v4843 = vpop.permute.xlu0 %4842
        %4844 = vrot.lane.b32.xlu0 %v2993, 40
        %v4845 = vpop.permute.xlu0 %4844
        %4846 = vrot.lane.b32.xlu0 %v2994, 40
        %v4847 = vpop.permute.xlu0 %4846
        %4848 = vrot.lane.b32.xlu0 %v2995, 40
        %v4849 = vpop.permute.xlu0 %4848
        %4850 = vrot.lane.b32.xlu0 %v2996, 40
        %v4851 = vpop.permute.xlu0 %4850
        %4852 = vrot.lane.b32.xlu0 %v2997, 40
        %v4853 = vpop.permute.xlu0 %4852
        %4854 = vrot.lane.b32.xlu0 %v2998, 40
        %v4855 = vpop.permute.xlu0 %4854
        %4856 = vrot.lane.b32.xlu0 %v2999, 40
        %v4857 = vpop.permute.xlu0 %4856
        %4858 = vrot.lane.b32.xlu0 %v3000, 40
        %v4859 = vpop.permute.xlu0 %4858
        %4860 = vrot.lane.b32.xlu0 %v3001, 40
        %v4861 = vpop.permute.xlu0 %4860
        %4862 = vrot.lane.b32.xlu0 %v3002, 40
        %v4863 = vpop.permute.xlu0 %4862
        %4864 = vrot.lane.b32.xlu0 %v3003, 40
        %v4865 = vpop.permute.xlu0 %4864
        %4866 = vrot.lane.b32.xlu0 %v3004, 40
        %v4867 = vpop.permute.xlu0 %4866
        %4868 = vrot.lane.b32.xlu0 %v3005, 40
        %v4869 = vpop.permute.xlu0 %4868
        %4870 = vrot.lane.b32.xlu0 %v3006, 40
        %v4871 = vpop.permute.xlu0 %4870
        %4872 = vrot.lane.b32.xlu0 %v3177, 40
        %v4873 = vpop.permute.xlu0 %4872
        %4874 = vrot.lane.b32.xlu0 %v3008, 44
        %v4875 = vpop.permute.xlu0 %4874
        %4876 = vrot.lane.b32.xlu0 %v3009, 44
        %v4877 = vpop.permute.xlu0 %4876
        %4878 = vrot.lane.b32.xlu0 %v3010, 44
        %v4879 = vpop.permute.xlu0 %4878
        %4880 = vrot.lane.b32.xlu0 %v3011, 44
        %v4881 = vpop.permute.xlu0 %4880
        %4882 = vrot.lane.b32.xlu0 %v3012, 44
        %v4883 = vpop.permute.xlu0 %4882
        %4884 = vrot.lane.b32.xlu0 %v3013, 44
        %v4885 = vpop.permute.xlu0 %4884
        %4886 = vrot.lane.b32.xlu0 %v3014, 44
        %v4887 = vpop.permute.xlu0 %4886
        %4888 = vrot.lane.b32.xlu0 %v3015, 44
        %v4889 = vpop.permute.xlu0 %4888
        %4890 = vrot.lane.b32.xlu0 %v3016, 44
        %v4891 = vpop.permute.xlu0 %4890
        %4892 = vrot.lane.b32.xlu0 %v3017, 44
        %v4893 = vpop.permute.xlu0 %4892
        %4894 = vrot.lane.b32.xlu0 %v3018, 44
        %v4895 = vpop.permute.xlu0 %4894
        %4896 = vrot.lane.b32.xlu0 %v3019, 44
        %v4897 = vpop.permute.xlu0 %4896
        %4898 = vrot.lane.b32.xlu0 %v3020, 44
        %v4899 = vpop.permute.xlu0 %4898
        %4900 = vrot.lane.b32.xlu0 %v3021, 44
        %v4901 = vpop.permute.xlu0 %4900
        %4902 = vrot.lane.b32.xlu0 %v3022, 44
        %v4903 = vpop.permute.xlu0 %4902
        %4904 = vrot.lane.b32.xlu0 %v3178, 44
        %v4905 = vpop.permute.xlu0 %4904
        %4906 = vrot.lane.b32.xlu0 %v3152, 48
        %v4907 = vpop.permute.xlu0 %4906
        %4908 = vrot.lane.b32.xlu0 %v3153, 48
        %v4909 = vpop.permute.xlu0 %4908
        %4910 = vrot.lane.b32.xlu0 %v3154, 48
        %v4911 = vpop.permute.xlu0 %4910
        %4912 = vrot.lane.b32.xlu0 %v3155, 48
        %v4913 = vpop.permute.xlu0 %4912
        %4914 = vrot.lane.b32.xlu0 %v3156, 48
        %v4915 = vpop.permute.xlu0 %4914
        %4916 = vrot.lane.b32.xlu0 %v3157, 48
        %v4917 = vpop.permute.xlu0 %4916
        %4918 = vrot.lane.b32.xlu0 %v3158, 48
        %v4919 = vpop.permute.xlu0 %4918
        %4920 = vrot.lane.b32.xlu0 %v3159, 48
        %v4921 = vpop.permute.xlu0 %4920
        %4922 = vrot.lane.b32.xlu0 %v3160, 48
        %v4923 = vpop.permute.xlu0 %4922
        %4924 = vrot.lane.b32.xlu0 %v3161, 48
        %v4925 = vpop.permute.xlu0 %4924
        %4926 = vrot.lane.b32.xlu0 %v3162, 48
        %v4927 = vpop.permute.xlu0 %4926
        %4928 = vrot.lane.b32.xlu0 %v3163, 48
        %v4929 = vpop.permute.xlu0 %4928
        %4930 = vrot.lane.b32.xlu0 %v3164, 48
        %v4931 = vpop.permute.xlu0 %4930
        %4932 = vrot.lane.b32.xlu0 %v3165, 48
        %v4933 = vpop.permute.xlu0 %4932
        %4934 = vrot.lane.b32.xlu0 %v3166, 48
        %v4935 = vpop.permute.xlu0 %4934
        %4936 = vrot.lane.b32.xlu0 %v3187, 48
        %v4937 = vpop.permute.xlu0 %4936
        %4939 = vrot.lane.b32.xlu0 %v4445, 52
        %v4940 = vpop.permute.xlu0 %4939
        %4941 = vrot.lane.b32.xlu0 %v4446, 52
        %v4942 = vpop.permute.xlu0 %4941
        %4943 = vrot.lane.b32.xlu0 %v4447, 52
        %v4944 = vpop.permute.xlu0 %4943
        %4945 = vrot.lane.b32.xlu0 %v4448, 52
        %v4946 = vpop.permute.xlu0 %4945
        %4947 = vrot.lane.b32.xlu0 %v4449, 52
        %v4948 = vpop.permute.xlu0 %4947
        %4949 = vrot.lane.b32.xlu0 %v4450, 52
        %v4950 = vpop.permute.xlu0 %4949
        %4951 = vrot.lane.b32.xlu0 %v4451, 52
        %v4952 = vpop.permute.xlu0 %4951
        %4953 = vrot.lane.b32.xlu0 %v4452, 52
        %v4954 = vpop.permute.xlu0 %4953
        %4955 = vrot.lane.b32.xlu0 %v4453, 52
        %v4956 = vpop.permute.xlu0 %4955
        %4957 = vrot.lane.b32.xlu0 %v4454, 52
        %v4958 = vpop.permute.xlu0 %4957
        %4959 = vrot.lane.b32.xlu0 %v4455, 52
        %v4960 = vpop.permute.xlu0 %4959
        %4961 = vrot.lane.b32.xlu0 %v4456, 52
        %v4962 = vpop.permute.xlu0 %4961
        %4963 = vrot.lane.b32.xlu0 %v4457, 52
        %v4964 = vpop.permute.xlu0 %4963
        %4965 = vrot.lane.b32.xlu0 %v4458, 52
        %v4966 = vpop.permute.xlu0 %4965
        %4967 = vrot.lane.b32.xlu0 %v4474, 52
        %v4968 = vpop.permute.xlu0 %4967
        %4969 = vrot.lane.b32.xlu0 %v4490, 52
        %v4970 = vpop.permute.xlu0 %4969
        %4972 = vrot.lane.b32.xlu0 %v4300, 56
        %v4973 = vpop.permute.xlu0 %4972
        %4974 = vrot.lane.b32.xlu0 %v4301, 56
        %v4975 = vpop.permute.xlu0 %4974
        %4976 = vrot.lane.b32.xlu0 %v4302, 56
        %v4977 = vpop.permute.xlu0 %4976
        %4978 = vrot.lane.b32.xlu0 %v4303, 56
        %v4979 = vpop.permute.xlu0 %4978
        %4980 = vrot.lane.b32.xlu0 %v4304, 56
        %v4981 = vpop.permute.xlu0 %4980
        %4982 = vrot.lane.b32.xlu0 %v4305, 56
        %v4983 = vpop.permute.xlu0 %4982
        %4984 = vrot.lane.b32.xlu0 %v4306, 56
        %v4985 = vpop.permute.xlu0 %4984
        %4986 = vrot.lane.b32.xlu0 %v4307, 56
        %v4987 = vpop.permute.xlu0 %4986
        %4988 = vrot.lane.b32.xlu0 %v4308, 56
        %v4989 = vpop.permute.xlu0 %4988
        %4990 = vrot.lane.b32.xlu0 %v4309, 56
        %v4991 = vpop.permute.xlu0 %4990
        %4992 = vrot.lane.b32.xlu0 %v4310, 56
        %v4993 = vpop.permute.xlu0 %4992
        %4994 = vrot.lane.b32.xlu0 %v4311, 56
        %v4995 = vpop.permute.xlu0 %4994
        %4996 = vrot.lane.b32.xlu0 %v4312, 56
        %v4997 = vpop.permute.xlu0 %4996
        %4998 = vrot.lane.b32.xlu0 %v4466, 56
        %v4999 = vpop.permute.xlu0 %4998
        %5000 = vrot.lane.b32.xlu0 %v4482, 56
        %v5001 = vpop.permute.xlu0 %5000
        %5002 = vrot.lane.b32.xlu0 %v4498, 56
        %v5003 = vpop.permute.xlu0 %5002
        %v5006 = vsel %vm731, %v4561, %v4320
        %v5008 = vsel %vm731, %v4563, %v2991
        %v5010 = vsel %vm731, %v4565, %v2992
        %v5012 = vsel %vm731, %v4567, %v2993
        %v5014 = vsel %vm731, %v4569, %v2994
        %v5016 = vsel %vm731, %v4571, %v2995
        %v5018 = vsel %vm731, %v4573, %v2996
        %v5020 = vsel %vm731, %v4575, %v2997
        %v5022 = vsel %vm731, %v4577, %v2998
        %v5024 = vsel %vm731, %v4579, %v2999
        %v5026 = vsel %vm731, %v4581, %v3000
        %v5028 = vsel %vm731, %v4583, %v3001
        %v5030 = vsel %vm731, %v4585, %v3002
        %v5032 = vsel %vm731, %v4587, %v3003
        %v5034 = vsel %vm731, %v4589, %v3004
        %v5036 = vsel %vm731, %v4591, %v3005
        %v5038 = vsel %vm3566, %v5006, %v4594
        %v5039 = vsel %vm3566, %v5008, %v3226
        %v5040 = vsel %vm3566, %v5010, %v3228
        %v5041 = vsel %vm3566, %v5012, %v3230
        %v5042 = vsel %vm3566, %v5014, %v3232
        %v5043 = vsel %vm3566, %v5016, %v3234
        %v5044 = vsel %vm3566, %v5018, %v3236
        %v5045 = vsel %vm3566, %v5020, %v3238
        %v5046 = vsel %vm3566, %v5022, %v3240
        %v5047 = vsel %vm3566, %v5024, %v3242
        %v5048 = vsel %vm3566, %v5026, %v3244
        %v5049 = vsel %vm3566, %v5028, %v3246
        %v5050 = vsel %vm3566, %v5030, %v3248
        %v5051 = vsel %vm3566, %v5032, %v3250
        %v5052 = vsel %vm3566, %v5034, %v3252
        %v5053 = vsel %vm3566, %v5036, %v3254
        %v5055 = vsel %vm3599, %v5038, %v4597
        %v5056 = vsel %vm3599, %v5039, %v3274
        %v5057 = vsel %vm3599, %v5040, %v3276
        %v5058 = vsel %vm3599, %v5041, %v3278
        %v5059 = vsel %vm3599, %v5042, %v3280
        %v5060 = vsel %vm3599, %v5043, %v3282
        %v5061 = vsel %vm3599, %v5044, %v3284
        %v5062 = vsel %vm3599, %v5045, %v3286
        %v5063 = vsel %vm3599, %v5046, %v3288
        %v5064 = vsel %vm3599, %v5047, %v3290
        %v5065 = vsel %vm3599, %v5048, %v3292
        %v5066 = vsel %vm3599, %v5049, %v3294
        %v5067 = vsel %vm3599, %v5050, %v3296
        %v5068 = vsel %vm3599, %v5051, %v3298
        %v5069 = vsel %vm3599, %v5052, %v3300
        %v5070 = vsel %vm3599, %v5053, %v3302
        %v5072 = vsel %vm3632, %v5055, %v4615
        %v5074 = vsel %vm3632, %v5056, %v4617
        %v5076 = vsel %vm3632, %v5057, %v4619
        %v5078 = vsel %vm3632, %v5058, %v4621
        %v5080 = vsel %vm3632, %v5059, %v4623
        %v5082 = vsel %vm3632, %v5060, %v4625
        %v5084 = vsel %vm3632, %v5061, %v4627
        %v5086 = vsel %vm3632, %v5062, %v4629
        %v5088 = vsel %vm3632, %v5063, %v4631
        %v5090 = vsel %vm3632, %v5064, %v4633
        %v5092 = vsel %vm3632, %v5065, %v4635
        %v5094 = vsel %vm3632, %v5066, %v4637
        %v5096 = vsel %vm3632, %v5067, %v4639
        %v5098 = vsel %vm3632, %v5068, %v4641
        %v5100 = vsel %vm3632, %v5069, %v4643
        %v5102 = vsel %vm3632, %v5070, %v4645
        %v5104 = vsel %vm3665, %v5072, %v4648
        %v5106 = vsel %vm3665, %v5074, %v4650
        %v5108 = vsel %vm3665, %v5076, %v4652
        %v5110 = vsel %vm3665, %v5078, %v4654
        %v5112 = vsel %vm3665, %v5080, %v4656
        %v5114 = vsel %vm3665, %v5082, %v4658
        %v5116 = vsel %vm3665, %v5084, %v4660
        %v5118 = vsel %vm3665, %v5086, %v4662
        %v5120 = vsel %vm3665, %v5088, %v4664
        %v5122 = vsel %vm3665, %v5090, %v4666
        %v5124 = vsel %vm3665, %v5092, %v4668
        %v5126 = vsel %vm3665, %v5094, %v4670
        %v5128 = vsel %vm3665, %v5096, %v4672
        %v5130 = vsel %vm3665, %v5098, %v4674
        %v5132 = vsel %vm3665, %v5100, %v4676
        %v5134 = vsel %vm3665, %v5102, %v4678
        %v5136 = vsel %vm3698, %v5104, %v4681
        %v5138 = vsel %vm3698, %v5106, %v4683
        %v5140 = vsel %vm3698, %v5108, %v4685
        %v5142 = vsel %vm3698, %v5110, %v4687
        %v5144 = vsel %vm3698, %v5112, %v4689
        %v5146 = vsel %vm3698, %v5114, %v4691
        %v5148 = vsel %vm3698, %v5116, %v4693
        %v5150 = vsel %vm3698, %v5118, %v4695
        %v5152 = vsel %vm3698, %v5120, %v4697
        %v5154 = vsel %vm3698, %v5122, %v4699
        %v5156 = vsel %vm3698, %v5124, %v4701
        %v5158 = vsel %vm3698, %v5126, %v4703
        %v5160 = vsel %vm3698, %v5128, %v4705
        %v5162 = vsel %vm3698, %v5130, %v4707
        %v5164 = vsel %vm3698, %v5132, %v4709
        %v5166 = vsel %vm3698, %v5134, %v4711
        %v5168 = vsel %vm3731, %v5136, %v4713
        %v5170 = vsel %vm3731, %v5138, %v4715
        %v5172 = vsel %vm3731, %v5140, %v4717
        %v5174 = vsel %vm3731, %v5142, %v4719
        %v5176 = vsel %vm3731, %v5144, %v4721
        %v5178 = vsel %vm3731, %v5146, %v4723
        %v5180 = vsel %vm3731, %v5148, %v4725
        %v5182 = vsel %vm3731, %v5150, %v4727
        %v5184 = vsel %vm3731, %v5152, %v4729
        %v5186 = vsel %vm3731, %v5154, %v4731
        %v5188 = vsel %vm3731, %v5156, %v4733
        %v5190 = vsel %vm3731, %v5158, %v4735
        %v5192 = vsel %vm3731, %v5160, %v4737
        %v5194 = vsel %vm3731, %v5162, %v4739
        %v5196 = vsel %vm3731, %v5164, %v4741
        %v5198 = vsel %vm3731, %v5166, %v4743
        %v5200 = vsel %vm3764, %v5168, %v4745
        %v5202 = vsel %vm3764, %v5170, %v4747
        %v5204 = vsel %vm3764, %v5172, %v4749
        %v5206 = vsel %vm3764, %v5174, %v4751
        %v5208 = vsel %vm3764, %v5176, %v4753
        %v5210 = vsel %vm3764, %v5178, %v4755
        %v5212 = vsel %vm3764, %v5180, %v4757
        %v5214 = vsel %vm3764, %v5182, %v4759
        %v5216 = vsel %vm3764, %v5184, %v4761
        %v5218 = vsel %vm3764, %v5186, %v4763
        %v5220 = vsel %vm3764, %v5188, %v4765
        %v5222 = vsel %vm3764, %v5190, %v4767
        %v5224 = vsel %vm3764, %v5192, %v4769
        %v5226 = vsel %vm3764, %v5194, %v4771
        %v5228 = vsel %vm3764, %v5196, %v4773
        %v5230 = vsel %vm3764, %v5198, %v4775
        %v5232 = vsel %vm3824, %v5200, %v4778
        %v5234 = vsel %vm3824, %v5202, %v4780
        %v5236 = vsel %vm3824, %v5204, %v4782
        %v5238 = vsel %vm3824, %v5206, %v4784
        %v5240 = vsel %vm3824, %v5208, %v4786
        %v5242 = vsel %vm3824, %v5210, %v4788
        %v5244 = vsel %vm3824, %v5212, %v4790
        %v5246 = vsel %vm3824, %v5214, %v4792
        %v5248 = vsel %vm3824, %v5216, %v4794
        %v5250 = vsel %vm3824, %v5218, %v4796
        %v5252 = vsel %vm3824, %v5220, %v4798
        %v5254 = vsel %vm3824, %v5222, %v4800
        %v5256 = vsel %vm3824, %v5224, %v4802
        %v5258 = vsel %vm3824, %v5226, %v4804
        %v5260 = vsel %vm3824, %v5228, %v4806
        %v5262 = vsel %vm3824, %v5230, %v4808
        %vm5263 = vcmask 326656
        %v5265 = vsel %vm5263, %v5232, %v4811
        %v5267 = vsel %vm5263, %v5234, %v4813
        %v5269 = vsel %vm5263, %v5236, %v4815
        %v5271 = vsel %vm5263, %v5238, %v4817
        %v5273 = vsel %vm5263, %v5240, %v4819
        %v5275 = vsel %vm5263, %v5242, %v4821
        %v5277 = vsel %vm5263, %v5244, %v4823
        %v5279 = vsel %vm5263, %v5246, %v4825
        %v5281 = vsel %vm5263, %v5248, %v4827
        %v5283 = vsel %vm5263, %v5250, %v4829
        %v5285 = vsel %vm5263, %v5252, %v4831
        %v5287 = vsel %vm5263, %v5254, %v4833
        %v5289 = vsel %vm5263, %v5256, %v4835
        %v5291 = vsel %vm5263, %v5258, %v4837
        %v5293 = vsel %vm5263, %v5260, %v4839
        %v5295 = vsel %vm5263, %v5262, %v4841
        %vm5296 = vcmask 359424
        %v5298 = vsel %vm5296, %v5265, %v4843
        %v5300 = vsel %vm5296, %v5267, %v4845
        %v5302 = vsel %vm5296, %v5269, %v4847
        %v5304 = vsel %vm5296, %v5271, %v4849
        %v5306 = vsel %vm5296, %v5273, %v4851
        %v5308 = vsel %vm5296, %v5275, %v4853
        %v5310 = vsel %vm5296, %v5277, %v4855
        %v5312 = vsel %vm5296, %v5279, %v4857
        %v5314 = vsel %vm5296, %v5281, %v4859
        %v5316 = vsel %vm5296, %v5283, %v4861
        %v5318 = vsel %vm5296, %v5285, %v4863
        %v5320 = vsel %vm5296, %v5287, %v4865
        %v5322 = vsel %vm5296, %v5289, %v4867
        %v5324 = vsel %vm5296, %v5291, %v4869
        %v5326 = vsel %vm5296, %v5293, %v4871
        %v5328 = vsel %vm5296, %v5295, %v4873
        %vm5329 = vcmask 392192
        %v5331 = vsel %vm5329, %v5298, %v4875
        %v5333 = vsel %vm5329, %v5300, %v4877
        %v5335 = vsel %vm5329, %v5302, %v4879
        %v5337 = vsel %vm5329, %v5304, %v4881
        %v5339 = vsel %vm5329, %v5306, %v4883
        %v5341 = vsel %vm5329, %v5308, %v4885
        %v5343 = vsel %vm5329, %v5310, %v4887
        %v5345 = vsel %vm5329, %v5312, %v4889
        %v5347 = vsel %vm5329, %v5314, %v4891
        %v5349 = vsel %vm5329, %v5316, %v4893
        %v5351 = vsel %vm5329, %v5318, %v4895
        %v5353 = vsel %vm5329, %v5320, %v4897
        %v5355 = vsel %vm5329, %v5322, %v4899
        %v5357 = vsel %vm5329, %v5324, %v4901
        %v5359 = vsel %vm5329, %v5326, %v4903
        %v5361 = vsel %vm5329, %v5328, %v4905
        %vm5362 = vcmask 424960
        %v5364 = vsel %vm5362, %v5331, %v4907
        %v5366 = vsel %vm5362, %v5333, %v4909
        %v5368 = vsel %vm5362, %v5335, %v4911
        %v5370 = vsel %vm5362, %v5337, %v4913
        %v5372 = vsel %vm5362, %v5339, %v4915
        %v5374 = vsel %vm5362, %v5341, %v4917
        %v5376 = vsel %vm5362, %v5343, %v4919
        %v5378 = vsel %vm5362, %v5345, %v4921
        %v5380 = vsel %vm5362, %v5347, %v4923
        %v5382 = vsel %vm5362, %v5349, %v4925
        %v5384 = vsel %vm5362, %v5351, %v4927
        %v5386 = vsel %vm5362, %v5353, %v4929
        %v5388 = vsel %vm5362, %v5355, %v4931
        %v5390 = vsel %vm5362, %v5357, %v4933
        %v5392 = vsel %vm5362, %v5359, %v4935
        %v5394 = vsel %vm5362, %v5361, %v4937
        %vm5395 = vcmask 457728
        %v5397 = vsel %vm5395, %v5364, %v4940
        %v5399 = vsel %vm5395, %v5366, %v4942
        %v5401 = vsel %vm5395, %v5368, %v4944
        %v5403 = vsel %vm5395, %v5370, %v4946
        %v5405 = vsel %vm5395, %v5372, %v4948
        %v5407 = vsel %vm5395, %v5374, %v4950
        %v5409 = vsel %vm5395, %v5376, %v4952
        %v5411 = vsel %vm5395, %v5378, %v4954
        %v5413 = vsel %vm5395, %v5380, %v4956
        %v5415 = vsel %vm5395, %v5382, %v4958
        %v5417 = vsel %vm5395, %v5384, %v4960
        %v5419 = vsel %vm5395, %v5386, %v4962
        %v5421 = vsel %vm5395, %v5388, %v4964
        %v5423 = vsel %vm5395, %v5390, %v4966
        %v5425 = vsel %vm5395, %v5392, %v4968
        %v5427 = vsel %vm5395, %v5394, %v4970
        %vm5428 = vcmask 490496
        %v5430 = vsel %vm5428, %v5397, %v4973
        %v5432 = vsel %vm5428, %v5399, %v4975
        %v5434 = vsel %vm5428, %v5401, %v4977
        %v5436 = vsel %vm5428, %v5403, %v4979
        %v5438 = vsel %vm5428, %v5405, %v4981
        %v5440 = vsel %vm5428, %v5407, %v4983
        %v5442 = vsel %vm5428, %v5409, %v4985
        %v5444 = vsel %vm5428, %v5411, %v4987
        %v5446 = vsel %vm5428, %v5413, %v4989
        %v5448 = vsel %vm5428, %v5415, %v4991
        %v5450 = vsel %vm5428, %v5417, %v4993
        %v5452 = vsel %vm5428, %v5419, %v4995
        %v5454 = vsel %vm5428, %v5421, %v4997
        %v5456 = vsel %vm5428, %v5423, %v4999
        %v5458 = vsel %vm5428, %v5425, %v5001
        %v5460 = vsel %vm5428, %v5427, %v5003
        %5461 = vrot.lane.b32.xlu0 %v2993, 124
        %v5462 = vpop.permute.xlu0 %5461
        %5463 = vrot.lane.b32.xlu0 %v2994, 124
        %v5464 = vpop.permute.xlu0 %5463
        %5465 = vrot.lane.b32.xlu0 %v2995, 124
        %v5466 = vpop.permute.xlu0 %5465
        %5467 = vrot.lane.b32.xlu0 %v2996, 124
        %v5468 = vpop.permute.xlu0 %5467
        %5469 = vrot.lane.b32.xlu0 %v2997, 124
        %v5470 = vpop.permute.xlu0 %5469
        %5471 = vrot.lane.b32.xlu0 %v2998, 124
        %v5472 = vpop.permute.xlu0 %5471
        %5473 = vrot.lane.b32.xlu0 %v2999, 124
        %v5474 = vpop.permute.xlu0 %5473
        %5475 = vrot.lane.b32.xlu0 %v3000, 124
        %v5476 = vpop.permute.xlu0 %5475
        %5477 = vrot.lane.b32.xlu0 %v3001, 124
        %v5478 = vpop.permute.xlu0 %5477
        %5479 = vrot.lane.b32.xlu0 %v3002, 124
        %v5480 = vpop.permute.xlu0 %5479
        %5481 = vrot.lane.b32.xlu0 %v3003, 124
        %v5482 = vpop.permute.xlu0 %5481
        %5483 = vrot.lane.b32.xlu0 %v3004, 124
        %v5484 = vpop.permute.xlu0 %5483
        %5485 = vrot.lane.b32.xlu0 %v3005, 124
        %v5486 = vpop.permute.xlu0 %5485
        %5487 = vrot.lane.b32.xlu0 %v3006, 124
        %v5488 = vpop.permute.xlu0 %5487
        %5489 = vrot.lane.b32.xlu0 %v3177, 124
        %v5490 = vpop.permute.xlu0 %5489
        %5491 = vrot.lane.b32.xlu0 %v3198, 124
        %v5492 = vpop.permute.xlu0 %5491
        %5493 = vrot.lane.b32.xlu0 %v3153, 4
        %v5494 = vpop.permute.xlu0 %5493
        %5495 = vrot.lane.b32.xlu0 %v3154, 4
        %v5496 = vpop.permute.xlu0 %5495
        %5497 = vrot.lane.b32.xlu0 %v3155, 4
        %v5498 = vpop.permute.xlu0 %5497
        %5499 = vrot.lane.b32.xlu0 %v3156, 4
        %v5500 = vpop.permute.xlu0 %5499
        %5501 = vrot.lane.b32.xlu0 %v3157, 4
        %v5502 = vpop.permute.xlu0 %5501
        %5503 = vrot.lane.b32.xlu0 %v3158, 4
        %v5504 = vpop.permute.xlu0 %5503
        %5505 = vrot.lane.b32.xlu0 %v3159, 4
        %v5506 = vpop.permute.xlu0 %5505
        %5507 = vrot.lane.b32.xlu0 %v3160, 4
        %v5508 = vpop.permute.xlu0 %5507
        %5509 = vrot.lane.b32.xlu0 %v3161, 4
        %v5510 = vpop.permute.xlu0 %5509
        %5511 = vrot.lane.b32.xlu0 %v3162, 4
        %v5512 = vpop.permute.xlu0 %5511
        %5513 = vrot.lane.b32.xlu0 %v3163, 4
        %v5514 = vpop.permute.xlu0 %5513
        %5515 = vrot.lane.b32.xlu0 %v3164, 4
        %v5516 = vpop.permute.xlu0 %5515
        %5517 = vrot.lane.b32.xlu0 %v3165, 4
        %v5518 = vpop.permute.xlu0 %5517
        %5519 = vrot.lane.b32.xlu0 %v3166, 4
        %v5520 = vpop.permute.xlu0 %5519
        %5521 = vrot.lane.b32.xlu0 %v3187, 4
        %v5522 = vpop.permute.xlu0 %5521
        %5523 = vrot.lane.b32.xlu0 %v3208, 4
        %v5524 = vpop.permute.xlu0 %5523
        %5526 = vrot.lane.b32.xlu0 %v4446, 8
        %v5527 = vpop.permute.xlu0 %5526
        %5528 = vrot.lane.b32.xlu0 %v4447, 8
        %v5529 = vpop.permute.xlu0 %5528
        %5530 = vrot.lane.b32.xlu0 %v4448, 8
        %v5531 = vpop.permute.xlu0 %5530
        %5532 = vrot.lane.b32.xlu0 %v4449, 8
        %v5533 = vpop.permute.xlu0 %5532
        %5534 = vrot.lane.b32.xlu0 %v4450, 8
        %v5535 = vpop.permute.xlu0 %5534
        %5536 = vrot.lane.b32.xlu0 %v4451, 8
        %v5537 = vpop.permute.xlu0 %5536
        %5538 = vrot.lane.b32.xlu0 %v4452, 8
        %v5539 = vpop.permute.xlu0 %5538
        %5540 = vrot.lane.b32.xlu0 %v4453, 8
        %v5541 = vpop.permute.xlu0 %5540
        %5542 = vrot.lane.b32.xlu0 %v4454, 8
        %v5543 = vpop.permute.xlu0 %5542
        %5544 = vrot.lane.b32.xlu0 %v4455, 8
        %v5545 = vpop.permute.xlu0 %5544
        %5546 = vrot.lane.b32.xlu0 %v4456, 8
        %v5547 = vpop.permute.xlu0 %5546
        %5548 = vrot.lane.b32.xlu0 %v4457, 8
        %v5549 = vpop.permute.xlu0 %5548
        %5550 = vrot.lane.b32.xlu0 %v4458, 8
        %v5551 = vpop.permute.xlu0 %5550
        %5552 = vrot.lane.b32.xlu0 %v4474, 8
        %v5553 = vpop.permute.xlu0 %5552
        %5554 = vrot.lane.b32.xlu0 %v4490, 8
        %v5555 = vpop.permute.xlu0 %5554
        %5556 = vrot.lane.b32.xlu0 %v4506, 8
        %v5557 = vpop.permute.xlu0 %5556
        %5559 = vrot.lane.b32.xlu0 %v4301, 12
        %v5560 = vpop.permute.xlu0 %5559
        %5561 = vrot.lane.b32.xlu0 %v4302, 12
        %v5562 = vpop.permute.xlu0 %5561
        %5563 = vrot.lane.b32.xlu0 %v4303, 12
        %v5564 = vpop.permute.xlu0 %5563
        %5565 = vrot.lane.b32.xlu0 %v4304, 12
        %v5566 = vpop.permute.xlu0 %5565
        %5567 = vrot.lane.b32.xlu0 %v4305, 12
        %v5568 = vpop.permute.xlu0 %5567
        %5569 = vrot.lane.b32.xlu0 %v4306, 12
        %v5570 = vpop.permute.xlu0 %5569
        %5571 = vrot.lane.b32.xlu0 %v4307, 12
        %v5572 = vpop.permute.xlu0 %5571
        %5573 = vrot.lane.b32.xlu0 %v4308, 12
        %v5574 = vpop.permute.xlu0 %5573
        %5575 = vrot.lane.b32.xlu0 %v4309, 12
        %v5576 = vpop.permute.xlu0 %5575
        %5577 = vrot.lane.b32.xlu0 %v4310, 12
        %v5578 = vpop.permute.xlu0 %5577
        %5579 = vrot.lane.b32.xlu0 %v4311, 12
        %v5580 = vpop.permute.xlu0 %5579
        %5581 = vrot.lane.b32.xlu0 %v4312, 12
        %v5582 = vpop.permute.xlu0 %5581
        %5583 = vrot.lane.b32.xlu0 %v4466, 12
        %v5584 = vpop.permute.xlu0 %5583
        %5585 = vrot.lane.b32.xlu0 %v4482, 12
        %v5586 = vpop.permute.xlu0 %5585
        %5587 = vrot.lane.b32.xlu0 %v4498, 12
        %v5588 = vpop.permute.xlu0 %5587
        %5589 = vrot.lane.b32.xlu0 %v4517, 12
        %v5590 = vpop.permute.xlu0 %5589
        %5592 = vrot.lane.b32.xlu0 %v2994, 16
        %v5593 = vpop.permute.xlu0 %5592
        %5594 = vrot.lane.b32.xlu0 %v2995, 16
        %v5595 = vpop.permute.xlu0 %5594
        %5596 = vrot.lane.b32.xlu0 %v2996, 16
        %v5597 = vpop.permute.xlu0 %5596
        %5598 = vrot.lane.b32.xlu0 %v2997, 16
        %v5599 = vpop.permute.xlu0 %5598
        %5600 = vrot.lane.b32.xlu0 %v2998, 16
        %v5601 = vpop.permute.xlu0 %5600
        %5602 = vrot.lane.b32.xlu0 %v2999, 16
        %v5603 = vpop.permute.xlu0 %5602
        %5604 = vrot.lane.b32.xlu0 %v3000, 16
        %v5605 = vpop.permute.xlu0 %5604
        %5606 = vrot.lane.b32.xlu0 %v3001, 16
        %v5607 = vpop.permute.xlu0 %5606
        %5608 = vrot.lane.b32.xlu0 %v3002, 16
        %v5609 = vpop.permute.xlu0 %5608
        %5610 = vrot.lane.b32.xlu0 %v3003, 16
        %v5611 = vpop.permute.xlu0 %5610
        %5612 = vrot.lane.b32.xlu0 %v3004, 16
        %v5613 = vpop.permute.xlu0 %5612
        %5614 = vrot.lane.b32.xlu0 %v3005, 16
        %v5615 = vpop.permute.xlu0 %5614
        %5616 = vrot.lane.b32.xlu0 %v3006, 16
        %v5617 = vpop.permute.xlu0 %5616
        %5618 = vrot.lane.b32.xlu0 %v3177, 16
        %v5619 = vpop.permute.xlu0 %5618
        %5620 = vrot.lane.b32.xlu0 %v3198, 16
        %v5621 = vpop.permute.xlu0 %5620
        %5622 = vrot.lane.b32.xlu0 %v4525, 16
        %v5623 = vpop.permute.xlu0 %5622
        %5625 = vrot.lane.b32.xlu0 %v3010, 20
        %v5626 = vpop.permute.xlu0 %5625
        %5627 = vrot.lane.b32.xlu0 %v3011, 20
        %v5628 = vpop.permute.xlu0 %5627
        %5629 = vrot.lane.b32.xlu0 %v3012, 20
        %v5630 = vpop.permute.xlu0 %5629
        %5631 = vrot.lane.b32.xlu0 %v3013, 20
        %v5632 = vpop.permute.xlu0 %5631
        %5633 = vrot.lane.b32.xlu0 %v3014, 20
        %v5634 = vpop.permute.xlu0 %5633
        %5635 = vrot.lane.b32.xlu0 %v3015, 20
        %v5636 = vpop.permute.xlu0 %5635
        %5637 = vrot.lane.b32.xlu0 %v3016, 20
        %v5638 = vpop.permute.xlu0 %5637
        %5639 = vrot.lane.b32.xlu0 %v3017, 20
        %v5640 = vpop.permute.xlu0 %5639
        %5641 = vrot.lane.b32.xlu0 %v3018, 20
        %v5642 = vpop.permute.xlu0 %5641
        %5643 = vrot.lane.b32.xlu0 %v3019, 20
        %v5644 = vpop.permute.xlu0 %5643
        %5645 = vrot.lane.b32.xlu0 %v3020, 20
        %v5646 = vpop.permute.xlu0 %5645
        %5647 = vrot.lane.b32.xlu0 %v3021, 20
        %v5648 = vpop.permute.xlu0 %5647
        %5649 = vrot.lane.b32.xlu0 %v3022, 20
        %v5650 = vpop.permute.xlu0 %5649
        %5651 = vrot.lane.b32.xlu0 %v3178, 20
        %v5652 = vpop.permute.xlu0 %5651
        %5653 = vrot.lane.b32.xlu0 %v3199, 20
        %v5654 = vpop.permute.xlu0 %5653
        %5655 = vrot.lane.b32.xlu0 %v4526, 20
        %v5656 = vpop.permute.xlu0 %5655
        %5658 = vrot.lane.b32.xlu0 %v3154, 24
        %v5659 = vpop.permute.xlu0 %5658
        %5660 = vrot.lane.b32.xlu0 %v3155, 24
        %v5661 = vpop.permute.xlu0 %5660
        %5662 = vrot.lane.b32.xlu0 %v3156, 24
        %v5663 = vpop.permute.xlu0 %5662
        %5664 = vrot.lane.b32.xlu0 %v3157, 24
        %v5665 = vpop.permute.xlu0 %5664
        %5666 = vrot.lane.b32.xlu0 %v3158, 24
        %v5667 = vpop.permute.xlu0 %5666
        %5668 = vrot.lane.b32.xlu0 %v3159, 24
        %v5669 = vpop.permute.xlu0 %5668
        %5670 = vrot.lane.b32.xlu0 %v3160, 24
        %v5671 = vpop.permute.xlu0 %5670
        %5672 = vrot.lane.b32.xlu0 %v3161, 24
        %v5673 = vpop.permute.xlu0 %5672
        %5674 = vrot.lane.b32.xlu0 %v3162, 24
        %v5675 = vpop.permute.xlu0 %5674
        %5676 = vrot.lane.b32.xlu0 %v3163, 24
        %v5677 = vpop.permute.xlu0 %5676
        %5678 = vrot.lane.b32.xlu0 %v3164, 24
        %v5679 = vpop.permute.xlu0 %5678
        %5680 = vrot.lane.b32.xlu0 %v3165, 24
        %v5681 = vpop.permute.xlu0 %5680
        %5682 = vrot.lane.b32.xlu0 %v3166, 24
        %v5683 = vpop.permute.xlu0 %5682
        %5684 = vrot.lane.b32.xlu0 %v3187, 24
        %v5685 = vpop.permute.xlu0 %5684
        %5686 = vrot.lane.b32.xlu0 %v3208, 24
        %v5687 = vpop.permute.xlu0 %5686
        %5688 = vrot.lane.b32.xlu0 %v4535, 24
        %v5689 = vpop.permute.xlu0 %5688
        %5691 = vrot.lane.b32.xlu0 %v4447, 28
        %v5692 = vpop.permute.xlu0 %5691
        %5693 = vrot.lane.b32.xlu0 %v4448, 28
        %v5694 = vpop.permute.xlu0 %5693
        %5695 = vrot.lane.b32.xlu0 %v4449, 28
        %v5696 = vpop.permute.xlu0 %5695
        %5697 = vrot.lane.b32.xlu0 %v4450, 28
        %v5698 = vpop.permute.xlu0 %5697
        %5699 = vrot.lane.b32.xlu0 %v4451, 28
        %v5700 = vpop.permute.xlu0 %5699
        %5701 = vrot.lane.b32.xlu0 %v4452, 28
        %v5702 = vpop.permute.xlu0 %5701
        %5703 = vrot.lane.b32.xlu0 %v4453, 28
        %v5704 = vpop.permute.xlu0 %5703
        %5705 = vrot.lane.b32.xlu0 %v4454, 28
        %v5706 = vpop.permute.xlu0 %5705
        %5707 = vrot.lane.b32.xlu0 %v4455, 28
        %v5708 = vpop.permute.xlu0 %5707
        %5709 = vrot.lane.b32.xlu0 %v4456, 28
        %v5710 = vpop.permute.xlu0 %5709
        %5711 = vrot.lane.b32.xlu0 %v4457, 28
        %v5712 = vpop.permute.xlu0 %5711
        %5713 = vrot.lane.b32.xlu0 %v4458, 28
        %v5714 = vpop.permute.xlu0 %5713
        %5715 = vrot.lane.b32.xlu0 %v4474, 28
        %v5716 = vpop.permute.xlu0 %5715
        %5717 = vrot.lane.b32.xlu0 %v4490, 28
        %v5718 = vpop.permute.xlu0 %5717
        %5719 = vrot.lane.b32.xlu0 %v4506, 28
        %v5720 = vpop.permute.xlu0 %5719
        %5721 = vrot.lane.b32.xlu0 %v4543, 28
        %v5722 = vpop.permute.xlu0 %5721
        %v5725 = vsel %vm731, %v5462, %v3009
        %v5728 = vsel %vm731, %v5464, %v3010
        %v5731 = vsel %vm731, %v5466, %v3011
        %v5734 = vsel %vm731, %v5468, %v3012
        %v5737 = vsel %vm731, %v5470, %v3013
        %v5740 = vsel %vm731, %v5472, %v3014
        %v5743 = vsel %vm731, %v5474, %v3015
        %v5746 = vsel %vm731, %v5476, %v3016
        %v5749 = vsel %vm731, %v5478, %v3017
        %v5752 = vsel %vm731, %v5480, %v3018
        %v5755 = vsel %vm731, %v5482, %v3019
        %v5758 = vsel %vm731, %v5484, %v3020
        %v5761 = vsel %vm731, %v5486, %v3021
        %v5764 = vsel %vm731, %v5488, %v3022
        %v5767 = vsel %vm731, %v5490, %v3178
        %v5770 = vsel %vm731, %v5492, %v3199
        %v5772 = vsel %vm3566, %v5725, %v5494
        %v5774 = vsel %vm3566, %v5728, %v5496
        %v5776 = vsel %vm3566, %v5731, %v5498
        %v5778 = vsel %vm3566, %v5734, %v5500
        %v5780 = vsel %vm3566, %v5737, %v5502
        %v5782 = vsel %vm3566, %v5740, %v5504
        %v5784 = vsel %vm3566, %v5743, %v5506
        %v5786 = vsel %vm3566, %v5746, %v5508
        %v5788 = vsel %vm3566, %v5749, %v5510
        %v5790 = vsel %vm3566, %v5752, %v5512
        %v5792 = vsel %vm3566, %v5755, %v5514
        %v5794 = vsel %vm3566, %v5758, %v5516
        %v5796 = vsel %vm3566, %v5761, %v5518
        %v5798 = vsel %vm3566, %v5764, %v5520
        %v5800 = vsel %vm3566, %v5767, %v5522
        %v5802 = vsel %vm3566, %v5770, %v5524
        %v5804 = vsel %vm3599, %v5772, %v5527
        %v5806 = vsel %vm3599, %v5774, %v5529
        %v5808 = vsel %vm3599, %v5776, %v5531
        %v5810 = vsel %vm3599, %v5778, %v5533
        %v5812 = vsel %vm3599, %v5780, %v5535
        %v5814 = vsel %vm3599, %v5782, %v5537
        %v5816 = vsel %vm3599, %v5784, %v5539
        %v5818 = vsel %vm3599, %v5786, %v5541
        %v5820 = vsel %vm3599, %v5788, %v5543
        %v5822 = vsel %vm3599, %v5790, %v5545
        %v5824 = vsel %vm3599, %v5792, %v5547
        %v5826 = vsel %vm3599, %v5794, %v5549
        %v5828 = vsel %vm3599, %v5796, %v5551
        %v5830 = vsel %vm3599, %v5798, %v5553
        %v5832 = vsel %vm3599, %v5800, %v5555
        %v5834 = vsel %vm3599, %v5802, %v5557
        %v5836 = vsel %vm3632, %v5804, %v5560
        %v5838 = vsel %vm3632, %v5806, %v5562
        %v5840 = vsel %vm3632, %v5808, %v5564
        %v5842 = vsel %vm3632, %v5810, %v5566
        %v5844 = vsel %vm3632, %v5812, %v5568
        %v5846 = vsel %vm3632, %v5814, %v5570
        %v5848 = vsel %vm3632, %v5816, %v5572
        %v5850 = vsel %vm3632, %v5818, %v5574
        %v5852 = vsel %vm3632, %v5820, %v5576
        %v5854 = vsel %vm3632, %v5822, %v5578
        %v5856 = vsel %vm3632, %v5824, %v5580
        %v5858 = vsel %vm3632, %v5826, %v5582
        %v5860 = vsel %vm3632, %v5828, %v5584
        %v5862 = vsel %vm3632, %v5830, %v5586
        %v5864 = vsel %vm3632, %v5832, %v5588
        %v5866 = vsel %vm3632, %v5834, %v5590
        %v5868 = vsel %vm3665, %v5836, %v5593
        %v5870 = vsel %vm3665, %v5838, %v5595
        %v5872 = vsel %vm3665, %v5840, %v5597
        %v5874 = vsel %vm3665, %v5842, %v5599
        %v5876 = vsel %vm3665, %v5844, %v5601
        %v5878 = vsel %vm3665, %v5846, %v5603
        %v5880 = vsel %vm3665, %v5848, %v5605
        %v5882 = vsel %vm3665, %v5850, %v5607
        %v5884 = vsel %vm3665, %v5852, %v5609
        %v5886 = vsel %vm3665, %v5854, %v5611
        %v5888 = vsel %vm3665, %v5856, %v5613
        %v5890 = vsel %vm3665, %v5858, %v5615
        %v5892 = vsel %vm3665, %v5860, %v5617
        %v5894 = vsel %vm3665, %v5862, %v5619
        %v5896 = vsel %vm3665, %v5864, %v5621
        %v5898 = vsel %vm3665, %v5866, %v5623
        %v5900 = vsel %vm3698, %v5868, %v5626
        %v5902 = vsel %vm3698, %v5870, %v5628
        %v5904 = vsel %vm3698, %v5872, %v5630
        %v5906 = vsel %vm3698, %v5874, %v5632
        %v5908 = vsel %vm3698, %v5876, %v5634
        %v5910 = vsel %vm3698, %v5878, %v5636
        %v5912 = vsel %vm3698, %v5880, %v5638
        %v5914 = vsel %vm3698, %v5882, %v5640
        %v5916 = vsel %vm3698, %v5884, %v5642
        %v5918 = vsel %vm3698, %v5886, %v5644
        %v5920 = vsel %vm3698, %v5888, %v5646
        %v5922 = vsel %vm3698, %v5890, %v5648
        %v5924 = vsel %vm3698, %v5892, %v5650
        %v5926 = vsel %vm3698, %v5894, %v5652
        %v5928 = vsel %vm3698, %v5896, %v5654
        %v5930 = vsel %vm3698, %v5898, %v5656
        %v5932 = vsel %vm3731, %v5900, %v5659
        %v5934 = vsel %vm3731, %v5902, %v5661
        %v5936 = vsel %vm3731, %v5904, %v5663
        %v5938 = vsel %vm3731, %v5906, %v5665
        %v5940 = vsel %vm3731, %v5908, %v5667
        %v5942 = vsel %vm3731, %v5910, %v5669
        %v5944 = vsel %vm3731, %v5912, %v5671
        %v5946 = vsel %vm3731, %v5914, %v5673
        %v5948 = vsel %vm3731, %v5916, %v5675
        %v5950 = vsel %vm3731, %v5918, %v5677
        %v5952 = vsel %vm3731, %v5920, %v5679
        %v5954 = vsel %vm3731, %v5922, %v5681
        %v5956 = vsel %vm3731, %v5924, %v5683
        %v5958 = vsel %vm3731, %v5926, %v5685
        %v5960 = vsel %vm3731, %v5928, %v5687
        %v5962 = vsel %vm3731, %v5930, %v5689
        %v5964 = vsel %vm3764, %v5932, %v5692
        %v5966 = vsel %vm3764, %v5934, %v5694
        %v5968 = vsel %vm3764, %v5936, %v5696
        %v5970 = vsel %vm3764, %v5938, %v5698
        %v5972 = vsel %vm3764, %v5940, %v5700
        %v5974 = vsel %vm3764, %v5942, %v5702
        %v5976 = vsel %vm3764, %v5944, %v5704
        %v5978 = vsel %vm3764, %v5946, %v5706
        %v5980 = vsel %vm3764, %v5948, %v5708
        %v5982 = vsel %vm3764, %v5950, %v5710
        %v5984 = vsel %vm3764, %v5952, %v5712
        %v5986 = vsel %vm3764, %v5954, %v5714
        %v5988 = vsel %vm3764, %v5956, %v5716
        %v5990 = vsel %vm3764, %v5958, %v5718
        %v5992 = vsel %vm3764, %v5960, %v5720
        %v5994 = vsel %vm3764, %v5962, %v5722
        %6011 = vrot.lane.b32.xlu0 %v5964, 64
        %v6012 = vpop.permute.xlu0 %6011
        %6013 = vrot.lane.b32.xlu0 %v5966, 64
        %v6014 = vpop.permute.xlu0 %6013
        %6015 = vrot.lane.b32.xlu0 %v5968, 64
        %v6016 = vpop.permute.xlu0 %6015
        %6017 = vrot.lane.b32.xlu0 %v5970, 64
        %v6018 = vpop.permute.xlu0 %6017
        %6019 = vrot.lane.b32.xlu0 %v5972, 64
        %v6020 = vpop.permute.xlu0 %6019
        %6021 = vrot.lane.b32.xlu0 %v5974, 64
        %v6022 = vpop.permute.xlu0 %6021
        %6023 = vrot.lane.b32.xlu0 %v5976, 64
        %v6024 = vpop.permute.xlu0 %6023
        %6025 = vrot.lane.b32.xlu0 %v5978, 64
        %v6026 = vpop.permute.xlu0 %6025
        %6027 = vrot.lane.b32.xlu0 %v5980, 64
        %v6028 = vpop.permute.xlu0 %6027
        %6029 = vrot.lane.b32.xlu0 %v5982, 64
        %v6030 = vpop.permute.xlu0 %6029
        %6031 = vrot.lane.b32.xlu0 %v5984, 64
        %v6032 = vpop.permute.xlu0 %6031
        %6033 = vrot.lane.b32.xlu0 %v5986, 64
        %v6034 = vpop.permute.xlu0 %6033
        %6035 = vrot.lane.b32.xlu0 %v5988, 64
        %v6036 = vpop.permute.xlu0 %6035
        %6037 = vrot.lane.b32.xlu0 %v5990, 64
        %v6038 = vpop.permute.xlu0 %6037
        %6039 = vrot.lane.b32.xlu0 %v5992, 64
        %v6040 = vpop.permute.xlu0 %6039
        %6041 = vrot.lane.b32.xlu0 %v5994, 64
        %v6042 = vpop.permute.xlu0 %6041
        %vm6043 = vcmask 523264
        %v6045 = vsel %vm6043, %v5430, %v6012
        %v6047 = vsel %vm6043, %v5432, %v6014
        %v6049 = vsel %vm6043, %v5434, %v6016
        %v6051 = vsel %vm6043, %v5436, %v6018
        %v6053 = vsel %vm6043, %v5438, %v6020
        %v6055 = vsel %vm6043, %v5440, %v6022
        %v6057 = vsel %vm6043, %v5442, %v6024
        %v6059 = vsel %vm6043, %v5444, %v6026
        %v6061 = vsel %vm6043, %v5446, %v6028
        %v6063 = vsel %vm6043, %v5448, %v6030
        %v6065 = vsel %vm6043, %v5450, %v6032
        %v6067 = vsel %vm6043, %v5452, %v6034
        %v6069 = vsel %vm6043, %v5454, %v6036
        %v6071 = vsel %vm6043, %v5456, %v6038
        %v6073 = vsel %vm6043, %v5458, %v6040
        %v6075 = vsel %vm6043, %v5460, %v6042
        %v6076 = vld [vmem:[%s5] sm:$0xf]
        %v6077 = vld [vmem:[%s5 + $0x4] sm:$0xf]
        %v6078 = vld [vmem:[%s5 + $0x8] sm:$0xf]
        %v6079 = vld [vmem:[%s5 + $0xc] sm:$0xf]
        %v6080 = vld [vmem:[%s5 + $0x10] sm:$0xf]
        %v6081 = vld [vmem:[%s5 + $0x14] sm:$0xf]
        %v6082 = vld [vmem:[%s5 + $0x18] sm:$0xf]
        %v6083 = vld [vmem:[%s5 + $0x1c] sm:$0xf]
        %v6084 = vld [vmem:[%s5 + $0x20] sm:$0xf]
        %v6085 = vld [vmem:[%s5 + $0x24] sm:$0xf]
        %v6086 = vld [vmem:[%s5 + $0x28] sm:$0xf]
        %v6087 = vld [vmem:[%s5 + $0x2c] sm:$0xf]
        %v6088 = vld [vmem:[%s5 + $0x30] sm:$0x3]
        %v6089 = vld [vmem:[%s6] sm:$0x1]
        %v6091 = vlaneseq
        %v6092 = vshrl.u32 %v6091, 7
        %v6093 = vsub.s32 0, %v6092
        %v6094 = vrot.slane %v6089, %v6093
        %v6109 = vunpack.c.l.b16 %v6076
        %v6110 = vunpack.c.l.b16 %v6077
        %v6111 = vunpack.c.l.b16 %v6078
        %v6112 = vunpack.c.l.b16 %v6079
        %v6113 = vunpack.c.l.b16 %v6080
        %v6114 = vunpack.c.l.b16 %v6081
        %v6115 = vunpack.c.l.b16 %v6082
        %v6116 = vunpack.c.l.b16 %v6083
        %v6117 = vunpack.c.l.b16 %v6084
        %v6118 = vunpack.c.l.b16 %v6085
        %v6119 = vunpack.c.l.b16 %v6086
        %v6120 = vunpack.c.l.b16 %v6087
        %v6121 = vunpack.c.l.b16 %v6088
        %v6122 = vpack.c.b16 %v6110, %v6109
        %v6123 = vpack.c.b16 %v6112, %v6111
        %v6124 = vpack.c.b16 %v6114, %v6113
        %v6125 = vpack.c.b16 %v6116, %v6115
        %v6126 = vpack.c.b16 %v6118, %v6117
        %v6127 = vpack.c.b16 %v6120, %v6119
        %v6128 = vpack.c.b16 %v6121, %v6121
        %vm6135 = vcmask 818176
        %v6136 = vsel %vm6135, %v6045, 0
        %v6138 = vsel %vm6135, %v6047, 0
        %v6140 = vsel %vm6135, %v6049, 0
        %v6142 = vsel %vm6135, %v6051, 0
        %v6144 = vsel %vm6135, %v6053, 0
        %v6146 = vsel %vm6135, %v6055, 0
        %v6148 = vsel %vm6135, %v6057, 0
        %v6150 = vsel %vm6135, %v6059, 0
        %v6152 = vsel %vm6135, %v6061, 0
        %v6154 = vsel %vm6135, %v6063, 0
        %v6156 = vsel %vm6135, %v6065, 0
        %v6158 = vsel %vm6135, %v6067, 0
        %v6160 = vsel %vm6135, %v6069, 0
        %v6162 = vsel %vm6135, %v6071, 0
        %v6164 = vsel %vm6135, %v6073, 0
        %v6166 = vsel %vm6135, %v6075, 0
        %v6169 = vsel %vm852, %v6128, 0
        %6171 = vmatprep.subr.bf16.mxu0 0
        %6172 = vmatpush1.bf16.msra.mxu0 0
        %6173 = vmatprep.subr.bf16.mxu0 0
        %6174 = vmatpush1.bf16.msra.mxu0 %v6169
        %6175 = vmatprep.subr.bf16.mxu0 0
        %6176 = vmatpush1.bf16.msra.mxu0 %v6127
        %6177 = vmatprep.subr.bf16.mxu0 0
        %6178 = vmatpush1.bf16.msra.mxu0 %v6126
        %6179 = vmatprep.subr.bf16.mxu0 0
        %6180 = vmatpush1.bf16.msra.mxu0 %v6125
        %6181 = vmatprep.subr.bf16.mxu0 0
        %6182 = vmatpush1.bf16.msra.mxu0 %v6124
        %6183 = vmatprep.subr.bf16.mxu0 0
        %6184 = vmatpush1.bf16.msra.mxu0 %v6123
        %6185 = vmatprep.subr.bf16.mxu0 0
        %6186 = vmatpush1.bf16.msra.mxu0 %v6122
        %6187 = vmatprep.subr.bf16.mxu0 0
        %6188 = vmatpush2.bf16.msra.mxu0 0
        %6189 = vmatprep.subr.bf16.mxu0 0
        %6190 = vmatpush2.bf16.msra.mxu0 0
        %6191 = vmatprep.subr.bf16.mxu0 0
        %6192 = vmatpush2.bf16.msra.mxu0 0
        %6193 = vmatprep.subr.bf16.mxu0 0
        %6194 = vmatpush2.bf16.msra.mxu0 0
        %6195 = vmatprep.subr.bf16.mxu0 0
        %6196 = vmatpush2.bf16.msra.mxu0 0
        %6197 = vmatprep.subr.bf16.mxu0 0
        %6198 = vmatpush2.bf16.msra.mxu0 0
        %6199 = vmatprep.subr.bf16.mxu0 0
        %6200 = vmatpush2.bf16.msra.mxu0 0
        %6201 = vmatprep.subr.bf16.mxu0 0
        %6202 = vmatpush2.bf16.msra.mxu0 0
        %6203 = vmatprep.mubr.bf16.mxu0 0
        %6204 = vmatmul.mubr.bf16.gmra.mxu0 %v6136
        %v6205 = vpop.f32.mrf.mxu0
        %v6206 = vadd.f32 %v6094, %v6205
        %v6207 = vpop.f32.mrf.mxu0
        %v6208 = vpop.f32.mrf.mxu0
        %v6209 = vadd.f32 %v6094, %v6208
        %v6210 = vpop.f32.mrf.mxu0
        %6211 = vmatprep.mubr.bf16.mxu0 0
        %6212 = vmatmul.mubr.bf16.gmra.mxu0 %v6138
        %v6213 = vpop.f32.mrf.mxu0
        %v6214 = vadd.f32 %v6094, %v6213
        %v6215 = vpop.f32.mrf.mxu0
        %v6216 = vpop.f32.mrf.mxu0
        %v6217 = vadd.f32 %v6094, %v6216
        %v6218 = vpop.f32.mrf.mxu0
        %6219 = vmatprep.mubr.bf16.mxu0 0
        %6220 = vmatmul.mubr.bf16.gmra.mxu0 %v6140
        %v6221 = vpop.f32.mrf.mxu0
        %v6222 = vadd.f32 %v6094, %v6221
        %v6223 = vpop.f32.mrf.mxu0
        %v6224 = vpop.f32.mrf.mxu0
        %v6225 = vadd.f32 %v6094, %v6224
        %v6226 = vpop.f32.mrf.mxu0
        %6227 = vmatprep.mubr.bf16.mxu0 0
        %6228 = vmatmul.mubr.bf16.gmra.mxu0 %v6142
        %v6229 = vpop.f32.mrf.mxu0
        %v6230 = vadd.f32 %v6094, %v6229
        %v6231 = vpop.f32.mrf.mxu0
        %v6232 = vpop.f32.mrf.mxu0
        %v6233 = vadd.f32 %v6094, %v6232
        %v6234 = vpop.f32.mrf.mxu0
        %6235 = vmatprep.mubr.bf16.mxu0 0
        %6236 = vmatmul.mubr.bf16.gmra.mxu0 %v6144
        %v6237 = vpop.f32.mrf.mxu0
        %v6238 = vadd.f32 %v6094, %v6237
        %v6239 = vpop.f32.mrf.mxu0
        %v6240 = vpop.f32.mrf.mxu0
        %v6241 = vadd.f32 %v6094, %v6240
        %v6242 = vpop.f32.mrf.mxu0
        %6243 = vmatprep.mubr.bf16.mxu0 0
        %6244 = vmatmul.mubr.bf16.gmra.mxu0 %v6146
        %v6245 = vpop.f32.mrf.mxu0
        %v6246 = vadd.f32 %v6094, %v6245
        %v6247 = vpop.f32.mrf.mxu0
        %v6248 = vpop.f32.mrf.mxu0
        %v6249 = vadd.f32 %v6094, %v6248
        %v6250 = vpop.f32.mrf.mxu0
        %6251 = vmatprep.mubr.bf16.mxu0 0
        %6252 = vmatmul.mubr.bf16.gmra.mxu0 %v6148
        %v6253 = vpop.f32.mrf.mxu0
        %v6254 = vadd.f32 %v6094, %v6253
        %v6255 = vpop.f32.mrf.mxu0
        %v6256 = vpop.f32.mrf.mxu0
        %v6257 = vadd.f32 %v6094, %v6256
        %v6258 = vpop.f32.mrf.mxu0
        %6259 = vmatprep.mubr.bf16.mxu0 0
        %6260 = vmatmul.mubr.bf16.gmra.mxu0 %v6150
        %v6261 = vpop.f32.mrf.mxu0
        %v6262 = vadd.f32 %v6094, %v6261
        %v6263 = vpop.f32.mrf.mxu0
        %v6264 = vpop.f32.mrf.mxu0
        %v6265 = vadd.f32 %v6094, %v6264
        %v6266 = vpop.f32.mrf.mxu0
        %6267 = vmatprep.mubr.bf16.mxu0 0
        %6268 = vmatmul.mubr.bf16.gmra.mxu0 %v6152
        %v6269 = vpop.f32.mrf.mxu0
        %v6270 = vadd.f32 %v6094, %v6269
        %v6271 = vpop.f32.mrf.mxu0
        %v6272 = vpop.f32.mrf.mxu0
        %v6273 = vadd.f32 %v6094, %v6272
        %v6274 = vpop.f32.mrf.mxu0
        %6275 = vmatprep.mubr.bf16.mxu0 0
        %6276 = vmatmul.mubr.bf16.gmra.mxu0 %v6154
        %v6277 = vpop.f32.mrf.mxu0
        %v6278 = vadd.f32 %v6094, %v6277
        %v6279 = vpop.f32.mrf.mxu0
        %v6280 = vpop.f32.mrf.mxu0
        %v6281 = vadd.f32 %v6094, %v6280
        %v6282 = vpop.f32.mrf.mxu0
        %6283 = vmatprep.mubr.bf16.mxu0 0
        %6284 = vmatmul.mubr.bf16.gmra.mxu0 %v6156
        %v6285 = vpop.f32.mrf.mxu0
        %v6286 = vadd.f32 %v6094, %v6285
        %v6287 = vpop.f32.mrf.mxu0
        %v6288 = vpop.f32.mrf.mxu0
        %v6289 = vadd.f32 %v6094, %v6288
        %v6290 = vpop.f32.mrf.mxu0
        %6291 = vmatprep.mubr.bf16.mxu0 0
        %6292 = vmatmul.mubr.bf16.gmra.mxu0 %v6158
        %v6293 = vpop.f32.mrf.mxu0
        %v6294 = vadd.f32 %v6094, %v6293
        %v6295 = vpop.f32.mrf.mxu0
        %v6296 = vpop.f32.mrf.mxu0
        %v6297 = vadd.f32 %v6094, %v6296
        %v6298 = vpop.f32.mrf.mxu0
        %6299 = vmatprep.mubr.bf16.mxu0 0
        %6300 = vmatmul.mubr.bf16.gmra.mxu0 %v6160
        %v6301 = vpop.f32.mrf.mxu0
        %v6302 = vadd.f32 %v6094, %v6301
        %v6303 = vpop.f32.mrf.mxu0
        %v6304 = vpop.f32.mrf.mxu0
        %v6305 = vadd.f32 %v6094, %v6304
        %v6306 = vpop.f32.mrf.mxu0
        %6307 = vmatprep.mubr.bf16.mxu0 0
        %6308 = vmatmul.mubr.bf16.gmra.mxu0 %v6162
        %v6309 = vpop.f32.mrf.mxu0
        %v6310 = vadd.f32 %v6094, %v6309
        %v6311 = vpop.f32.mrf.mxu0
        %v6312 = vpop.f32.mrf.mxu0
        %v6313 = vadd.f32 %v6094, %v6312
        %v6314 = vpop.f32.mrf.mxu0
        %6315 = vmatprep.mubr.bf16.mxu0 0
        %6316 = vmatmul.mubr.bf16.gmra.mxu0 %v6164
        %v6317 = vpop.f32.mrf.mxu0
        %v6318 = vadd.f32 %v6094, %v6317
        %v6319 = vpop.f32.mrf.mxu0
        %v6320 = vpop.f32.mrf.mxu0
        %v6321 = vadd.f32 %v6094, %v6320
        %v6322 = vpop.f32.mrf.mxu0
        %6323 = vmatprep.mubr.bf16.mxu0 0
        %6324 = vmatmul.mubr.bf16.gmra.mxu0 %v6166
        %v6325 = vpop.f32.mrf.mxu0
        %v6326 = vadd.f32 %v6094, %v6325
        %v6327 = vpop.f32.mrf.mxu0
        %v6328 = vpop.f32.mrf.mxu0
        %v6329 = vadd.f32 %v6094, %v6328
        %v6330 = vpop.f32.mrf.mxu0
        %6331 = vdwg.mxu0
        %6364 = vrot.lane.b32.xlu0 %v6206, 12
        %v6365 = vpop.permute.xlu0 %6364
        %6366 = vrot.lane.b32.xlu0 %v6209, 12
        %v6367 = vpop.permute.xlu0 %6366
        %6368 = vrot.lane.b32.xlu0 %v6214, 12
        %v6369 = vpop.permute.xlu0 %6368
        %6370 = vrot.lane.b32.xlu0 %v6217, 12
        %v6371 = vpop.permute.xlu0 %6370
        %6372 = vrot.lane.b32.xlu0 %v6222, 12
        %v6373 = vpop.permute.xlu0 %6372
        %6374 = vrot.lane.b32.xlu0 %v6225, 12
        %v6375 = vpop.permute.xlu0 %6374
        %6376 = vrot.lane.b32.xlu0 %v6230, 12
        %v6377 = vpop.permute.xlu0 %6376
        %6378 = vrot.lane.b32.xlu0 %v6233, 12
        %v6379 = vpop.permute.xlu0 %6378
        %6380 = vrot.lane.b32.xlu0 %v6238, 12
        %v6381 = vpop.permute.xlu0 %6380
        %6382 = vrot.lane.b32.xlu0 %v6241, 12
        %v6383 = vpop.permute.xlu0 %6382
        %6384 = vrot.lane.b32.xlu0 %v6246, 12
        %v6385 = vpop.permute.xlu0 %6384
        %6386 = vrot.lane.b32.xlu0 %v6249, 12
        %v6387 = vpop.permute.xlu0 %6386
        %6388 = vrot.lane.b32.xlu0 %v6254, 12
        %v6389 = vpop.permute.xlu0 %6388
        %6390 = vrot.lane.b32.xlu0 %v6257, 12
        %v6391 = vpop.permute.xlu0 %6390
        %6392 = vrot.lane.b32.xlu0 %v6262, 12
        %v6393 = vpop.permute.xlu0 %6392
        %6394 = vrot.lane.b32.xlu0 %v6265, 12
        %v6395 = vpop.permute.xlu0 %6394
        %6396 = vrot.lane.b32.xlu0 %v6270, 12
        %v6397 = vpop.permute.xlu0 %6396
        %6398 = vrot.lane.b32.xlu0 %v6273, 12
        %v6399 = vpop.permute.xlu0 %6398
        %6400 = vrot.lane.b32.xlu0 %v6278, 12
        %v6401 = vpop.permute.xlu0 %6400
        %6402 = vrot.lane.b32.xlu0 %v6281, 12
        %v6403 = vpop.permute.xlu0 %6402
        %6404 = vrot.lane.b32.xlu0 %v6286, 12
        %v6405 = vpop.permute.xlu0 %6404
        %6406 = vrot.lane.b32.xlu0 %v6289, 12
        %v6407 = vpop.permute.xlu0 %6406
        %6408 = vrot.lane.b32.xlu0 %v6294, 12
        %v6409 = vpop.permute.xlu0 %6408
        %6410 = vrot.lane.b32.xlu0 %v6297, 12
        %v6411 = vpop.permute.xlu0 %6410
        %6412 = vrot.lane.b32.xlu0 %v6302, 12
        %v6413 = vpop.permute.xlu0 %6412
        %6414 = vrot.lane.b32.xlu0 %v6305, 12
        %v6415 = vpop.permute.xlu0 %6414
        %6416 = vrot.lane.b32.xlu0 %v6310, 12
        %v6417 = vpop.permute.xlu0 %6416
        %6418 = vrot.lane.b32.xlu0 %v6313, 12
        %v6419 = vpop.permute.xlu0 %6418
        %6420 = vrot.lane.b32.xlu0 %v6318, 12
        %v6421 = vpop.permute.xlu0 %6420
        %6422 = vrot.lane.b32.xlu0 %v6321, 12
        %v6423 = vpop.permute.xlu0 %6422
        %6424 = vrot.lane.b32.xlu0 %v6326, 12
        %v6425 = vpop.permute.xlu0 %6424
        %6426 = vrot.lane.b32.xlu0 %v6329, 12
        %v6427 = vpop.permute.xlu0 %6426
        %vm6460 = vcmask 130144
        %6461 = vst.msk [vmem:[%s339] sm:$0xff] %vm6460, %v6365
        %6462 = vst.msk [vmem:[%s339 + $0x8] sm:$0xff] %vm6460, %v6367
        %6463 = vst.msk [vmem:[%s339 + $0x10] sm:$0xff] %vm6460, %v6369
        %6464 = vst.msk [vmem:[%s339 + $0x18] sm:$0xff] %vm6460, %v6371
        %6465 = vst.msk [vmem:[%s339 + $0x20] sm:$0xff] %vm6460, %v6373
        %6466 = vst.msk [vmem:[%s339 + $0x28] sm:$0xff] %vm6460, %v6375
        %6467 = vst.msk [vmem:[%s339 + $0x30] sm:$0xff] %vm6460, %v6377
        %6468 = vst.msk [vmem:[%s339 + $0x38] sm:$0xff] %vm6460, %v6379
        %6469 = vst.msk [vmem:[%s339 + $0x40] sm:$0xff] %vm6460, %v6381
        %6470 = vst.msk [vmem:[%s339 + $0x48] sm:$0xff] %vm6460, %v6383
        %6471 = vst.msk [vmem:[%s339 + $0x50] sm:$0xff] %vm6460, %v6385
        %6472 = vst.msk [vmem:[%s339 + $0x58] sm:$0xff] %vm6460, %v6387
        %6473 = vst.msk [vmem:[%s339 + $0x60] sm:$0xff] %vm6460, %v6389
        %6474 = vst.msk [vmem:[%s339 + $0x68] sm:$0xff] %vm6460, %v6391
        %6475 = vst.msk [vmem:[%s339 + $0x70] sm:$0xff] %vm6460, %v6393
        %6476 = vst.msk [vmem:[%s339 + $0x78] sm:$0xff] %vm6460, %v6395
        %6477 = vst.msk [vmem:[%s339 + $0x80] sm:$0xff] %vm6460, %v6397
        %6478 = vst.msk [vmem:[%s339 + $0x88] sm:$0xff] %vm6460, %v6399
        %6479 = vst.msk [vmem:[%s339 + $0x90] sm:$0xff] %vm6460, %v6401
        %6480 = vst.msk [vmem:[%s339 + $0x98] sm:$0xff] %vm6460, %v6403
        %6481 = vst.msk [vmem:[%s339 + $0xa0] sm:$0xff] %vm6460, %v6405
        %6482 = vst.msk [vmem:[%s339 + $0xa8] sm:$0xff] %vm6460, %v6407
        %6483 = vst.msk [vmem:[%s339 + $0xb0] sm:$0xff] %vm6460, %v6409
        %6484 = vst.msk [vmem:[%s339 + $0xb8] sm:$0xff] %vm6460, %v6411
        %6485 = vst.msk [vmem:[%s339 + $0xc0] sm:$0xff] %vm6460, %v6413
        %6486 = vst.msk [vmem:[%s339 + $0xc8] sm:$0xff] %vm6460, %v6415
        %6487 = vst.msk [vmem:[%s339 + $0xd0] sm:$0xff] %vm6460, %v6417
        %6488 = vst.msk [vmem:[%s339 + $0xd8] sm:$0xff] %vm6460, %v6419
        %6489 = vst.msk [vmem:[%s339 + $0xe0] sm:$0xff] %vm6460, %v6421
        %6490 = vst.msk [vmem:[%s339 + $0xe8] sm:$0xff] %vm6460, %v6423
        %6491 = vst.msk [vmem:[%s339 + $0xf0] sm:$0xff] %vm6460, %v6425
        %6492 = vst.msk [vmem:[%s339 + $0xf8] sm:$0xff] %vm6460, %v6427
        %s6493 = sand.u32 %s239, 1
        %s6494 = scalar_lea.sflag [#allocation3], %s6493
        %s6495 = sand.u32 %s239, 1
        %s6496 = smul.addr %s6495, 256
        %s6497 = scalar_lea.vmem [#allocation2], %s6496
        // Predicated region
        $region57: #{tpu_custom_call.1} parent=55 // pred_check
          %p6498 = pneg %p249
        $region58: #{tpu_custom_call.1} parent=55 // pred_check_branch
          %6500 = sbr.rel (%p6498) target = $region60
        $region59: #{tpu_custom_call.1} parent=55 // pred_region
          %s6501 = smul.u32 16, %s28
          %s6503 = ssub.s32 4096, 4096
          %6504 = vsyncadd %s6494, %s6503
          %s6505 = smul.addr %s6501, 2
          %s6506 = smul.addr %s27, 32
          %s6507 = sadd.s32 %s6505, %s6506
          %s6508 = smul.addr %s6507, 128
          %s6509 = scalar_lea.hbm %s9, %s6508
          %s6510 = sshll.u32 %s6497, 4
          %s6511 = int_to_ptr.vmem [resolvable:$true] %s6510
          %6516 = dma.vmem_to_hbm [thread:$0]  %s6511, 4096, %s6509, %s6494, 128, 128, 8
        $region60: #{tpu_custom_call.1} parent=55 // pred_fallthru
          _
      $region56: #{tpu_custom_call.1} parent=5 // pred_fallthru
        _
      %p6517 = scmp.le.s32.totalorder 2, %s18
      // Predicated region
      $region61: #{tpu_custom_call.1} parent=5 // pred_check
        %p6518 = pneg %p6517
      $region62: #{tpu_custom_call.1} parent=5 // pred_check_branch
        %6520 = sbr.rel (%p6518) target = $region64
      $region63: #{tpu_custom_call.1} parent=5 // pred_region
        %s6521 = ssub.s32 %s18, 2
        // Predicated region
        $region65: #{tpu_custom_call.1} parent=63 // pred_check
          %p6522 = pneg %p255
        $region66: #{tpu_custom_call.1} parent=63 // pred_check_branch
          %6524 = sbr.rel (%p6522) target = $region68
        $region67: #{tpu_custom_call.1} parent=63 // pred_region
          %s6525 = sand.u32 %s240, 1
          %s6526 = scalar_lea.sflag [#allocation3], %s6525
          %s6527 = sand.u32 %s240, 1
          %s6528 = smul.addr %s6527, 256
          %s6529 = scalar_lea.vmem [#allocation2], %s6528
          %6530 = dma.done %s6526, 4096
        $region68: #{tpu_custom_call.1} parent=63 // pred_fallthru
          _
      $region64: #{tpu_custom_call.1} parent=5 // pred_fallthru
        _
    $region6: #{tpu_custom_call.1} parent=1 // loop_footer
      %s22 = sadd.s32 1, %s18
    $region7: #{tpu_custom_call.1} parent=1 // loop_footer_branch
      %17 = sbr.rel target = $region3
    $region8: #{tpu_custom_call.1} parent=1 // loop_exit
      _
    %6531 = vsyncpa [#allocation3], 1
    %s6532 = scalar_lea.sflag [#allocation3], 1
    %6533 = vsyncpa %s6532, 1

</llo_original>
